<compile_context>
chip_gen: v6e
topology: v6e:2x2x1
jax: 0.10.0
libtpu: 0.0.40
codegen_flags: <defaults>
</compile_context>

<pallas_src>
import functools
import math

import numpy as np
import jax
import jax.numpy as jnp
from jax.experimental import pallas as pl
from jax.experimental.pallas import tpu as pltpu


# ----------------------------- kernel -------------------------------------- #
# Bias/LayerNorm slab row layout (width = max(3D, F), zero padded):
#   0: sa_bqkv(3D)  1: sa_bo(D)  2: ca_bq(D)  3: ca_bkv(2D)  4: ca_bo(D)
#   5: b1(F)        6: b2(D)
#   8..10: LN gamma (norm1..3, D)     11..13: LN beta (norm1..3, D)

def decoder_stack_kernel(x_ref, enc_ref, mask_ref,
                         sa_wqkv_ref, sa_wo_ref,
                         ca_wq_ref, ca_wkv_ref, ca_wo_ref,
                         w1_ref, w2_ref, slab_ref,
                         o_ref, act_ref, *, n_heads):
    layer = pl.program_id(0)
    n_layers = pl.num_programs(0)

    B, T, D = x_ref.shape
    S = enc_ref.shape[1]
    H = n_heads
    dh = D // H
    F_ = w1_ref.shape[2]
    inv_scale = 1.0 / math.sqrt(dh)

    # Resident activation: HBM -> VMEM once at layer 0, stays in scratch
    # across the layer grid axis, written back to HBM once at the last layer.
    @pl.when(layer == 0)
    def _():
        act_ref[...] = x_ref[...].reshape(B * T, D)

    x2 = act_ref[...]                       # (B*T, D) f32
    enc2 = enc_ref[...].reshape(B * S, D)   # (B*S, D) f32
    slab = slab_ref[0]                      # (16, Wslab) f32

    def dot_bf16(a, w):
        # bf16 x bf16 on the MXU, f32 accumulation.
        return jnp.dot(a.astype(jnp.bfloat16), w,
                       preferred_element_type=jnp.float32)

    def split_heads(t2, L):
        # (B*L, D) -> (B*H, L, dh)
        t4 = jnp.transpose(t2.reshape(B, L, H, dh), (0, 2, 1, 3))
        return t4.reshape(B * H, L, dh)

    def merge_heads(t3, L):
        # (B*H, L, dh) -> (B*L, D)
        t4 = jnp.transpose(t3.reshape(B, H, L, dh), (0, 2, 1, 3))
        return t4.reshape(B * L, D)

    def attention(q2, k2, v2, Lq, Lk, keep):
        # q2: (B*Lq, D), k2/v2: (B*Lk, D); keep broadcastable to (B*H, Lq, Lk)
        q3 = split_heads(q2 * inv_scale, Lq).astype(jnp.bfloat16)
        k3 = split_heads(k2, Lk).astype(jnp.bfloat16)
        v3 = split_heads(v2, Lk).astype(jnp.bfloat16)
        s = jnp.einsum('bqd,bkd->bqk', q3, k3,
                       preferred_element_type=jnp.float32)     # (B*H, Lq, Lk)
        s = jnp.where(keep, s, -1e30)                          # masked_fill
        m = jnp.max(s, axis=-1, keepdims=True)
        e = jnp.exp(s - m)
        p = e * pl.reciprocal(jnp.sum(e, axis=-1, keepdims=True), approx=True)
        ctx = jnp.einsum('bqk,bkd->bqd', p.astype(jnp.bfloat16), v3,
                         preferred_element_type=jnp.float32)   # (B*H, Lq, dh)
        return merge_heads(ctx, Lq)

    def layer_norm(y2, idx):
        mu = jnp.mean(y2, axis=-1, keepdims=True)
        var = jnp.mean(jnp.square(y2 - mu), axis=-1, keepdims=True)
        yn = (y2 - mu) * jax.lax.rsqrt(var + 1e-5)
        return yn * slab[8 + idx:9 + idx, :D] + slab[11 + idx:12 + idx, :D]

    # ------------- self-attention (causal) + residual + LayerNorm -------- #
    qkv = dot_bf16(x2, sa_wqkv_ref[0]) + slab[0:1, :3 * D]      # (B*T, 3D)
    rows = jax.lax.broadcasted_iota(jnp.int32, (T, T), 0)
    cols = jax.lax.broadcasted_iota(jnp.int32, (T, T), 1)
    causal_keep = (rows >= cols)[None]                          # (1, T, T)
    sa = attention(qkv[:, :D], qkv[:, D:2 * D], qkv[:, 2 * D:],
                   T, T, causal_keep)
    sa = dot_bf16(sa, sa_wo_ref[0]) + slab[1:2, :D]
    x2 = layer_norm(x2 + sa, 0)

    # ------------- encoder attention (padding mask) + res + LayerNorm ---- #
    q = dot_bf16(x2, ca_wq_ref[0]) + slab[2:3, :D]              # (B*T, D)
    kv = dot_bf16(enc2, ca_wkv_ref[0]) + slab[3:4, :2 * D]      # (B*S, 2D)
    enc_keep = (mask_ref[...] != 0.0).reshape(B, 1, 1, S)
    enc_keep = jnp.broadcast_to(enc_keep, (B, H, 1, S)).reshape(B * H, 1, S)
    ca = attention(q, kv[:, :D], kv[:, D:], T, S, enc_keep)
    ca = dot_bf16(ca, ca_wo_ref[0]) + slab[4:5, :D]
    x2 = layer_norm(x2 + ca, 1)

    # ------------- FFN + residual + LayerNorm ----------------------------- #
    h = jnp.maximum(dot_bf16(x2, w1_ref[0]) + slab[5:6, :F_], 0.0)
    y = dot_bf16(h, w2_ref[0]) + slab[6:7, :D]
    x2 = layer_norm(x2 + y, 2)

    act_ref[...] = x2

    @pl.when(layer == n_layers - 1)
    def _():
        o_ref[...] = x2.reshape(B, T, D)


# ----------------------------- wrapper -------------------------------------- #

def decoder_stack(x, enc_out, enc_mask3, lp, n_heads):
    B, T, D = x.shape
    S = enc_out.shape[1]
    L = lp["sa_wqkv"].shape[0]
    F_ = lp["w1"].shape[2]
    Wslab = lp["slab"].shape[2]

    def full(shape):
        n = len(shape)
        return pl.BlockSpec(shape, lambda k, n=n: (0,) * n)

    def per_layer(shape):
        n = len(shape)
        return pl.BlockSpec((1,) + shape, lambda k, n=n: (k,) + (0,) * n)

    return pl.pallas_call(
        functools.partial(decoder_stack_kernel, n_heads=n_heads),
        out_shape=jax.ShapeDtypeStruct((B, T, D), jnp.float32),
        grid_spec=pltpu.PrefetchScalarGridSpec(
            num_scalar_prefetch=0,
            grid=(L,),
            in_specs=[full((B, T, D)),               # x (embedded input)
                      full((B, S, D)),               # encoder output
                      full((B, 1, S)),               # encoder padding mask
                      per_layer((D, 3 * D)),         # self-attn packed QKV
                      per_layer((D, D)),             # self-attn out proj
                      per_layer((D, D)),             # cross-attn Q
                      per_layer((D, 2 * D)),         # cross-attn packed KV
                      per_layer((D, D)),             # cross-attn out proj
                      per_layer((D, F_)),            # FFN lin1
                      per_layer((F_, D)),            # FFN lin2
                      per_layer((16, Wslab))],       # packed biases + LN
            out_specs=full((B, T, D)),
            scratch_shapes=[pltpu.VMEM((B * T, D), jnp.float32)]),
        compiler_params=pltpu.CompilerParams(
            dimension_semantics=("arbitrary",),        # layer axis is sequential
            vmem_limit_bytes=32 * 1024 * 1024),        # explicit (v5e default is 16 MiB)
    )(x, enc_out, enc_mask3,
      lp["sa_wqkv"], lp["sa_wo"], lp["ca_wq"], lp["ca_wkv"], lp["ca_wo"],
      lp["w1"], lp["w2"], lp["slab"])


# ----------------------------- parameters ----------------------------------- #

def create_position_codes(n_pos, dim):
    pe = np.array([[pos / np.power(10000, 2 * j / dim) for j in range(dim // 2)]
                   for pos in range(n_pos)], dtype=np.float64)
    out = np.zeros((n_pos, dim), dtype=np.float32)
    out[:, 0::2] = np.sin(pe)
    out[:, 1::2] = np.cos(pe)
    return jnp.asarray(out)


def init_params(key, *, n_heads, n_layers, embedding_size, ffn_size,
                vocabulary_size, n_positions, embeddings_scale=True):
    D, F_ = embedding_size, ffn_size
    Wslab = max(3 * D, F_)
    keys = jax.random.split(key, 1 + n_layers)

    def xavier(k, shape):
        fan_in, fan_out = shape
        std = math.sqrt(2.0 / (fan_in + fan_out))
        return std * jax.random.normal(k, shape, dtype=jnp.float32)

    def bias(k, n):
        return 0.01 * jax.random.normal(k, (n,), dtype=jnp.float32)

    layers = []
    for li in range(n_layers):
        k = keys[1 + li]
        ks = jax.random.split(k, 20)
        slab = jnp.zeros((16, Wslab), jnp.float32)
        slab = slab.at[0, :3 * D].set(jnp.concatenate(
            [bias(ks[10], D), bias(ks[11], D), bias(ks[12], D)]))
        slab = slab.at[1, :D].set(bias(ks[13], D))
        slab = slab.at[2, :D].set(bias(ks[14], D))
        slab = slab.at[3, :2 * D].set(jnp.concatenate(
            [bias(ks[15], D), bias(ks[16], D)]))
        slab = slab.at[4, :D].set(bias(ks[17], D))
        slab = slab.at[5, :F_].set(bias(ks[18], F_))
        slab = slab.at[6, :D].set(bias(ks[19], D))
        slab = slab.at[8:11, :D].set(jnp.ones((3, D), jnp.float32))  # LN gammas
        # rows 11..13 stay zero = LN betas
        layers.append({
            # packed QKV / KV projections, bf16 weight storage (f32 accum in-kernel)
            "sa_wqkv": jnp.concatenate([xavier(ks[0], (D, D)),
                                        xavier(ks[1], (D, D)),
                                        xavier(ks[2], (D, D))],
                                       axis=1).astype(jnp.bfloat16),
            "sa_wo": xavier(ks[3], (D, D)).astype(jnp.bfloat16),
            "ca_wq": xavier(ks[4], (D, D)).astype(jnp.bfloat16),
            "ca_wkv": jnp.concatenate([xavier(ks[5], (D, D)),
                                       xavier(ks[6], (D, D))],
                                      axis=1).astype(jnp.bfloat16),
            "ca_wo": xavier(ks[7], (D, D)).astype(jnp.bfloat16),
            "w1": xavier(ks[8], (D, F_)).astype(jnp.bfloat16),
            "w2": xavier(ks[9], (F_, D)).astype(jnp.bfloat16),
            "slab": slab,
        })

    # stack per-layer weights along a leading layer axis (layer grid axis)
    stacked = jax.tree_util.tree_map(lambda *a: jnp.stack(a, axis=0), *layers)

    emb_scale = math.sqrt(D) if embeddings_scale else 1.0
    return {
        # sqrt(D) embedding scale folded into the table (no standalone kernel)
        "embeddings": (0.02 * jax.random.normal(
            keys[0], (vocabulary_size, D), dtype=jnp.float32)) * emb_scale,
        "position_embeddings": create_position_codes(n_positions, D),
        "layers": stacked,
    }


# ----------------------------- forward pass --------------------------------- #

def transformer_decoder(input_ids, encoder_output, encoder_mask, params,
                        *, n_heads):
    B, T = input_ids.shape
    S = encoder_output.shape[1]

    # TODO(synk): vocab/position embedding gathers have no clean Pallas
    # equivalent; XLA fuses the gather with the position add here.
    x = params["embeddings"][input_ids] \
        + params["position_embeddings"][:T][None, :, :]          # (B, T, D)

    # encoder padding mask, 1 = keep (inverted vs torch key_padding_mask).
    enc_mask3 = encoder_mask.astype(jnp.float32).reshape(B, 1, S)

    x = decoder_stack(x, encoder_output, enc_mask3, params["layers"], n_heads)
    return x, None


# ----------------------------- main ------------------------------------------ #

if __name__ == "__main__":
    B, T, S = 2, 8, 10
    D, F_, H = 32, 64, 2
    VOCAB, NPOS, NLAYERS = 50, 64, 2

    key = jax.random.PRNGKey(0)
    k_params, k_ids, k_enc = jax.random.split(key, 3)

    params = init_params(k_params, n_heads=H, n_layers=NLAYERS,
                         embedding_size=D, ffn_size=F_,
                         vocabulary_size=VOCAB, n_positions=NPOS,
                         embeddings_scale=True)

    input_ids = jax.random.randint(k_ids, (B, T), 0, VOCAB, dtype=jnp.int32)
    encoder_output = jax.random.normal(k_enc, (B, S, D), dtype=jnp.float32)
    # batch 0: full length; batch 1: last 3 encoder positions padded out
    encoder_mask = jnp.array(
        [[1] * S, [1] * (S - 3) + [0] * 3], dtype=jnp.float32)

    fwd = jax.jit(functools.partial(transformer_decoder, n_heads=H))
    out, _ = fwd(input_ids, encoder_output, encoder_mask, params)
    out = jax.block_until_ready(out)

    assert out.shape == (B, T, D)
    assert bool(jnp.all(jnp.isfinite(out)))
    print("KERNEL_OK")
</pallas_src>

<mosaic_0001>
module attributes {stable_mosaic.version = 11 : i64} {
  func.func @decoder_stack_kernel(%arg0: i32, %arg1: memref<2x8x32xf32, #tpu.memory_space<vmem>>, %arg2: memref<2x10x32xf32, #tpu.memory_space<vmem>>, %arg3: memref<2x1x10xf32, #tpu.memory_space<vmem>>, %arg4: memref<1x32x96xbf16, #tpu.memory_space<vmem>>, %arg5: memref<1x32x32xbf16, #tpu.memory_space<vmem>>, %arg6: memref<1x32x32xbf16, #tpu.memory_space<vmem>>, %arg7: memref<1x32x64xbf16, #tpu.memory_space<vmem>>, %arg8: memref<1x32x32xbf16, #tpu.memory_space<vmem>>, %arg9: memref<1x32x64xbf16, #tpu.memory_space<vmem>>, %arg10: memref<1x64x32xbf16, #tpu.memory_space<vmem>>, %arg11: memref<1x16x96xf32, #tpu.memory_space<vmem>>, %arg12: memref<2x8x32xf32, #tpu.memory_space<vmem>>, %arg13: memref<16x32xf32, #tpu.memory_space<vmem>>) attributes {dimension_semantics = [#tpu.dimension_semantics<arbitrary>], iteration_bounds = array<i64: 2>, scalar_prefetch = 0 : i64, scratch_operands = 1 : i64, tpu.core_type = #tpu.core_type<tc>, window_params = [{pipeline_mode = #tpu.pipeline_mode<synchronous>, transform_indices = @transform_0, window_bounds = array<i64: 2, 8, 32>}, {pipeline_mode = #tpu.pipeline_mode<synchronous>, transform_indices = @transform_1, window_bounds = array<i64: 2, 10, 32>}, {pipeline_mode = #tpu.pipeline_mode<synchronous>, transform_indices = @transform_2, window_bounds = array<i64: 2, 1, 10>}, {transform_indices = @transform_3, window_bounds = array<i64: 1, 32, 96>}, {transform_indices = @transform_4, window_bounds = array<i64: 1, 32, 32>}, {transform_indices = @transform_5, window_bounds = array<i64: 1, 32, 32>}, {transform_indices = @transform_6, window_bounds = array<i64: 1, 32, 64>}, {transform_indices = @transform_7, window_bounds = array<i64: 1, 32, 32>}, {transform_indices = @transform_8, window_bounds = array<i64: 1, 32, 64>}, {transform_indices = @transform_9, window_bounds = array<i64: 1, 64, 32>}, {transform_indices = @transform_10, window_bounds = array<i64: 1, 16, 96>}, {pipeline_mode = #tpu.pipeline_mode<synchronous>, transform_indices = @transform_11, window_bounds = array<i64: 2, 8, 32>}]} {
    %c0_i32 = arith.constant 0 : i32
    %0 = arith.cmpi eq, %arg0, %c0_i32 : i32
    %1 = arith.extui %0 : i1 to i32
    %c0_i32_0 = arith.constant 0 : i32
    %2 = arith.cmpi ne, %1, %c0_i32_0 : i32
    scf.if %2 {
      %c0_70 = arith.constant 0 : index
      %c0_71 = arith.constant 0 : index
      %c0_72 = arith.constant 0 : index
      %222 = vector.load %arg1[%c0_70, %c0_71, %c0_72] : memref<2x8x32xf32, #tpu.memory_space<vmem>>, vector<2x8x32xf32>
      %223 = vector.shape_cast %222 : vector<2x8x32xf32> to vector<16x32xf32>
      %c0_73 = arith.constant 0 : index
      %c0_74 = arith.constant 0 : index
      %224 = vector.load %arg13[%c0_73, %c0_74] : memref<16x32xf32, #tpu.memory_space<vmem>>, vector<16x32xf32>
      tpu.vector_store %arg13[%c0_73, %c0_74], %223 {strides = array<i32>} : memref<16x32xf32, #tpu.memory_space<vmem>>, vector<16x32xf32>,
    } else {
    }
    %c0 = arith.constant 0 : index
    %c0_1 = arith.constant 0 : index
    %3 = vector.load %arg13[%c0, %c0_1] : memref<16x32xf32, #tpu.memory_space<vmem>>, vector<16x32xf32>
    %c0_2 = arith.constant 0 : index
    %c0_3 = arith.constant 0 : index
    %c0_4 = arith.constant 0 : index
    %4 = vector.load %arg2[%c0_2, %c0_3, %c0_4] : memref<2x10x32xf32, #tpu.memory_space<vmem>>, vector<2x10x32xf32>
    %5 = vector.shape_cast %4 : vector<2x10x32xf32> to vector<20x32xf32>
    %c0_5 = arith.constant 0 : index
    %c0_6 = arith.constant 0 : index
    %c0_7 = arith.constant 0 : index
    %6 = vector.load %arg11[%c0_5, %c0_6, %c0_7] : memref<1x16x96xf32, #tpu.memory_space<vmem>>, vector<1x16x96xf32>
    %7 = vector.shape_cast %6 : vector<1x16x96xf32> to vector<16x96xf32>
    %c0_8 = arith.constant 0 : index
    %c0_9 = arith.constant 0 : index
    %c0_10 = arith.constant 0 : index
    %8 = vector.load %arg4[%c0_8, %c0_9, %c0_10] : memref<1x32x96xbf16, #tpu.memory_space<vmem>>, vector<1x32x96xbf16>
    %9 = vector.shape_cast %8 : vector<1x32x96xbf16> to vector<32x96xbf16>
    %10 = arith.truncf %3 : vector<16x32xf32> to vector<16x32xbf16>
    %cst = arith.constant dense<0.000000e+00> : vector<16x96xf32>
    %11 = tpu.matmul %10, %9, %cst {dimension_numbers = #tpu.dot_dimension_numbers<[1], [0], [0], [1], [0, 0, 1, 1], [], []>} : vector<16x32xbf16>, vector<32x96xbf16>, vector<16x96xf32> -> vector<16x96xf32>
    %12 = vector.extract_strided_slice %7 {offsets = [0, 0], sizes = [1, 96], strides = [1, 1]} : vector<16x96xf32> to vector<1x96xf32>
    %13 = vector.broadcast %12 : vector<1x96xf32> to vector<16x96xf32>
    %14 = arith.addf %11, %13 : vector<16x96xf32>
    %15 = tpu.iota {dimensions = array<i32: 0>} : vector<8x8xi32>
    %16 = tpu.iota {dimensions = array<i32: 1>} : vector<8x8xi32>
    %17 = arith.cmpi sge, %15, %16 : vector<8x8xi32>
    %18 = vector.shape_cast %17 : vector<8x8xi1> to vector<1x8x8xi1>
    %19 = vector.extract_strided_slice %14 {offsets = [0, 0], sizes = [16, 32], strides = [1, 1]} : vector<16x96xf32> to vector<16x32xf32>
    %20 = vector.extract_strided_slice %14 {offsets = [0, 32], sizes = [16, 32], strides = [1, 1]} : vector<16x96xf32> to vector<16x32xf32>
    %21 = vector.extract_strided_slice %14 {offsets = [0, 64], sizes = [16, 32], strides = [1, 1]} : vector<16x96xf32> to vector<16x32xf32>
    %cst_11 = arith.constant 2.500000e-01 : f32
    %22 = vector.broadcast %cst_11 : f32 to vector<16x32xf32>
    %23 = arith.mulf %19, %22 : vector<16x32xf32>
    %24 = vector.shape_cast %23 : vector<16x32xf32> to vector<2x8x2x16xf32>
    %25 = tpu.transpose %24, [0, 2, 1, 3] : vector<2x8x2x16xf32> -> vector<2x2x8x16xf32>
    %26 = vector.shape_cast %25 : vector<2x2x8x16xf32> to vector<4x8x16xf32>
    %27 = arith.truncf %26 : vector<4x8x16xf32> to vector<4x8x16xbf16>
    %28 = vector.shape_cast %20 : vector<16x32xf32> to vector<2x8x2x16xf32>
    %29 = tpu.transpose %28, [0, 2, 1, 3] : vector<2x8x2x16xf32> -> vector<2x2x8x16xf32>
    %30 = vector.shape_cast %29 : vector<2x2x8x16xf32> to vector<4x8x16xf32>
    %31 = arith.truncf %30 : vector<4x8x16xf32> to vector<4x8x16xbf16>
    %32 = vector.shape_cast %21 : vector<16x32xf32> to vector<2x8x2x16xf32>
    %33 = tpu.transpose %32, [0, 2, 1, 3] : vector<2x8x2x16xf32> -> vector<2x2x8x16xf32>
    %34 = vector.shape_cast %33 : vector<2x2x8x16xf32> to vector<4x8x16xf32>
    %35 = arith.truncf %34 : vector<4x8x16xf32> to vector<4x8x16xbf16>
    "tpu.trace_start"() <{level = 10 : i32, message = "bqd,bkd->bqk"}> : () -> ()
    %cst_12 = arith.constant dense<0.000000e+00> : vector<4x8x8xf32>
    %36 = tpu.matmul %27, %31, %cst_12 {dimension_numbers = #tpu.dot_dimension_numbers<[2], [2], [1], [1], [0, 0, 0, 1, 1, 1], [0], [0]>} : vector<4x8x16xbf16>, vector<4x8x16xbf16>, vector<4x8x8xf32> -> vector<4x8x8xf32>
    %cst_13 = arith.constant -1.000000e+30 : f32
    "tpu.trace_stop"() : () -> ()
    %37 = vector.shape_cast %18 : vector<1x8x8xi1> to vector<1x8x8xi1>
    %38 = vector.broadcast %37 : vector<1x8x8xi1> to vector<4x8x8xi1>
    %39 = vector.broadcast %cst_13 : f32 to vector<4x8x8xf32>
    %40 = arith.select %38, %36, %39 : vector<4x8x8xi1>, vector<4x8x8xf32>
    %cst_14 = arith.constant dense<0xFF800000> : vector<4x8xf32>
    %41 = vector.multi_reduction <maximumf>, %40, %cst_14 [2] : vector<4x8x8xf32> to vector<4x8xf32>
    %42 = vector.shape_cast %41 : vector<4x8xf32> to vector<4x8x1xf32>
    %43 = vector.broadcast %42 : vector<4x8x1xf32> to vector<4x8x8xf32>
    %44 = arith.subf %40, %43 : vector<4x8x8xf32>
    %45 = math.exp %44 : vector<4x8x8xf32>
    %cst_15 = arith.constant dense<0.000000e+00> : vector<4x8xf32>
    %46 = vector.multi_reduction <add>, %45, %cst_15 [2] : vector<4x8x8xf32> to vector<4x8xf32>
    %47 = vector.shape_cast %46 : vector<4x8xf32> to vector<4x8x1xf32>
    %48 = tpu.reciprocal %47 {approx = true} : vector<4x8x1xf32> -> vector<4x8x1xf32>
    %49 = vector.broadcast %48 : vector<4x8x1xf32> to vector<4x8x8xf32>
    %50 = arith.mulf %45, %49 : vector<4x8x8xf32>
    %51 = arith.truncf %50 : vector<4x8x8xf32> to vector<4x8x8xbf16>
    "tpu.trace_start"() <{level = 10 : i32, message = "bqk,bkd->bqd"}> : () -> ()
    %cst_16 = arith.constant dense<0.000000e+00> : vector<4x8x16xf32>
    %52 = tpu.matmul %51, %35, %cst_16 {dimension_numbers = #tpu.dot_dimension_numbers<[2], [1], [1], [2], [0, 0, 0, 1, 1, 2], [0], [0]>} : vector<4x8x8xbf16>, vector<4x8x16xbf16>, vector<4x8x16xf32> -> vector<4x8x16xf32>
    "tpu.trace_stop"() : () -> ()
    %53 = vector.shape_cast %52 : vector<4x8x16xf32> to vector<2x2x8x16xf32>
    %54 = tpu.transpose %53, [0, 2, 1, 3] : vector<2x2x8x16xf32> -> vector<2x8x2x16xf32>
    %55 = vector.shape_cast %54 : vector<2x8x2x16xf32> to vector<16x32xf32>
    %c0_17 = arith.constant 0 : index
    %c0_18 = arith.constant 0 : index
    %c0_19 = arith.constant 0 : index
    %56 = vector.load %arg5[%c0_17, %c0_18, %c0_19] : memref<1x32x32xbf16, #tpu.memory_space<vmem>>, vector<1x32x32xbf16>
    %57 = vector.shape_cast %56 : vector<1x32x32xbf16> to vector<32x32xbf16>
    %58 = arith.truncf %55 : vector<16x32xf32> to vector<16x32xbf16>
    %cst_20 = arith.constant dense<0.000000e+00> : vector<16x32xf32>
    %59 = tpu.matmul %58, %57, %cst_20 {dimension_numbers = #tpu.dot_dimension_numbers<[1], [0], [0], [1], [0, 0, 1, 1], [], []>} : vector<16x32xbf16>, vector<32x32xbf16>, vector<16x32xf32> -> vector<16x32xf32>
    %60 = vector.extract_strided_slice %7 {offsets = [1, 0], sizes = [1, 32], strides = [1, 1]} : vector<16x96xf32> to vector<1x32xf32>
    %61 = vector.broadcast %60 : vector<1x32xf32> to vector<16x32xf32>
    %62 = arith.addf %59, %61 : vector<16x32xf32>
    %63 = arith.addf %3, %62 : vector<16x32xf32>
    %cst_21 = arith.constant dense<0.000000e+00> : vector<16xf32>
    %64 = vector.multi_reduction <add>, %63, %cst_21 [1] : vector<16x32xf32> to vector<16xf32>
    %65 = vector.shape_cast %64 : vector<16xf32> to vector<16x1xf32>
    %cst_22 = arith.constant 3.200000e+01 : f32
    %66 = vector.broadcast %cst_22 : f32 to vector<16x1xf32>
    %67 = arith.divf %65, %66 : vector<16x1xf32>
    %68 = vector.broadcast %67 : vector<16x1xf32> to vector<16x32xf32>
    %69 = arith.subf %63, %68 : vector<16x32xf32>
    %70 = arith.mulf %69, %69 : vector<16x32xf32>
    %cst_23 = arith.constant dense<0.000000e+00> : vector<16xf32>
    %71 = vector.multi_reduction <add>, %70, %cst_23 [1] : vector<16x32xf32> to vector<16xf32>
    %72 = vector.shape_cast %71 : vector<16xf32> to vector<16x1xf32>
    %cst_24 = arith.constant 3.200000e+01 : f32
    %73 = vector.broadcast %cst_24 : f32 to vector<16x1xf32>
    %74 = arith.divf %72, %73 : vector<16x1xf32>
    %75 = vector.broadcast %67 : vector<16x1xf32> to vector<16x32xf32>
    %76 = arith.subf %63, %75 : vector<16x32xf32>
    %cst_25 = arith.constant 9.99999974E-6 : f32
    %77 = vector.broadcast %cst_25 : f32 to vector<16x1xf32>
    %78 = arith.addf %74, %77 : vector<16x1xf32>
    %79 = math.rsqrt %78 : vector<16x1xf32>
    %80 = vector.broadcast %79 : vector<16x1xf32> to vector<16x32xf32>
    %81 = arith.mulf %76, %80 : vector<16x32xf32>
    %82 = vector.extract_strided_slice %7 {offsets = [8, 0], sizes = [1, 32], strides = [1, 1]} : vector<16x96xf32> to vector<1x32xf32>
    %83 = vector.broadcast %82 : vector<1x32xf32> to vector<16x32xf32>
    %84 = arith.mulf %81, %83 : vector<16x32xf32>
    %85 = vector.extract_strided_slice %7 {offsets = [11, 0], sizes = [1, 32], strides = [1, 1]} : vector<16x96xf32> to vector<1x32xf32>
    %86 = vector.broadcast %85 : vector<1x32xf32> to vector<16x32xf32>
    %87 = arith.addf %84, %86 : vector<16x32xf32>
    %c0_26 = arith.constant 0 : index
    %c0_27 = arith.constant 0 : index
    %c0_28 = arith.constant 0 : index
    %88 = vector.load %arg6[%c0_26, %c0_27, %c0_28] : memref<1x32x32xbf16, #tpu.memory_space<vmem>>, vector<1x32x32xbf16>
    %89 = vector.shape_cast %88 : vector<1x32x32xbf16> to vector<32x32xbf16>
    %90 = arith.truncf %87 : vector<16x32xf32> to vector<16x32xbf16>
    %cst_29 = arith.constant dense<0.000000e+00> : vector<16x32xf32>
    %91 = tpu.matmul %90, %89, %cst_29 {dimension_numbers = #tpu.dot_dimension_numbers<[1], [0], [0], [1], [0, 0, 1, 1], [], []>} : vector<16x32xbf16>, vector<32x32xbf16>, vector<16x32xf32> -> vector<16x32xf32>
    %92 = vector.extract_strided_slice %7 {offsets = [2, 0], sizes = [1, 32], strides = [1, 1]} : vector<16x96xf32> to vector<1x32xf32>
    %93 = vector.broadcast %92 : vector<1x32xf32> to vector<16x32xf32>
    %94 = arith.addf %91, %93 : vector<16x32xf32>
    %c0_30 = arith.constant 0 : index
    %c0_31 = arith.constant 0 : index
    %c0_32 = arith.constant 0 : index
    %95 = vector.load %arg7[%c0_30, %c0_31, %c0_32] : memref<1x32x64xbf16, #tpu.memory_space<vmem>>, vector<1x32x64xbf16>
    %96 = vector.shape_cast %95 : vector<1x32x64xbf16> to vector<32x64xbf16>
    %97 = arith.truncf %5 : vector<20x32xf32> to vector<20x32xbf16>
    %cst_33 = arith.constant dense<0.000000e+00> : vector<20x64xf32>
    %98 = tpu.matmul %97, %96, %cst_33 {dimension_numbers = #tpu.dot_dimension_numbers<[1], [0], [0], [1], [0, 0, 1, 1], [], []>} : vector<20x32xbf16>, vector<32x64xbf16>, vector<20x64xf32> -> vector<20x64xf32>
    %99 = vector.extract_strided_slice %7 {offsets = [3, 0], sizes = [1, 64], strides = [1, 1]} : vector<16x96xf32> to vector<1x64xf32>
    %100 = vector.broadcast %99 : vector<1x64xf32> to vector<20x64xf32>
    %101 = arith.addf %98, %100 : vector<20x64xf32>
    %c0_34 = arith.constant 0 : index
    %c0_35 = arith.constant 0 : index
    %c0_36 = arith.constant 0 : index
    %102 = vector.load %arg3[%c0_34, %c0_35, %c0_36] : memref<2x1x10xf32, #tpu.memory_space<vmem>>, vector<2x1x10xf32>
    %cst_37 = arith.constant 0.000000e+00 : f32
    %103 = vector.broadcast %cst_37 : f32 to vector<2x1x10xf32>
    %104 = arith.cmpf one, %102, %103 : vector<2x1x10xf32>
    %105 = vector.shape_cast %104 : vector<2x1x10xi1> to vector<2x1x1x10xi1>
    %106 = vector.shape_cast %105 : vector<2x1x1x10xi1> to vector<2x1x1x10xi1>
    %107 = vector.broadcast %106 : vector<2x1x1x10xi1> to vector<2x2x1x10xi1>
    %108 = vector.shape_cast %107 : vector<2x2x1x10xi1> to vector<4x1x10xi1>
    %109 = vector.extract_strided_slice %101 {offsets = [0, 0], sizes = [20, 32], strides = [1, 1]} : vector<20x64xf32> to vector<20x32xf32>
    %110 = vector.extract_strided_slice %101 {offsets = [0, 32], sizes = [20, 32], strides = [1, 1]} : vector<20x64xf32> to vector<20x32xf32>
    %cst_38 = arith.constant 2.500000e-01 : f32
    %111 = vector.broadcast %cst_38 : f32 to vector<16x32xf32>
    %112 = arith.mulf %94, %111 : vector<16x32xf32>
    %113 = vector.shape_cast %112 : vector<16x32xf32> to vector<2x8x2x16xf32>
    %114 = tpu.transpose %113, [0, 2, 1, 3] : vector<2x8x2x16xf32> -> vector<2x2x8x16xf32>
    %115 = vector.shape_cast %114 : vector<2x2x8x16xf32> to vector<4x8x16xf32>
    %116 = arith.truncf %115 : vector<4x8x16xf32> to vector<4x8x16xbf16>
    %117 = vector.shape_cast %109 : vector<20x32xf32> to vector<2x10x2x16xf32>
    %118 = tpu.transpose %117, [0, 2, 1, 3] : vector<2x10x2x16xf32> -> vector<2x2x10x16xf32>
    %119 = vector.shape_cast %118 : vector<2x2x10x16xf32> to vector<4x10x16xf32>
    %120 = arith.truncf %119 : vector<4x10x16xf32> to vector<4x10x16xbf16>
    %121 = vector.shape_cast %110 : vector<20x32xf32> to vector<2x10x2x16xf32>
    %122 = tpu.transpose %121, [0, 2, 1, 3] : vector<2x10x2x16xf32> -> vector<2x2x10x16xf32>
    %123 = vector.shape_cast %122 : vector<2x2x10x16xf32> to vector<4x10x16xf32>
    %124 = arith.truncf %123 : vector<4x10x16xf32> to vector<4x10x16xbf16>
    "tpu.trace_start"() <{level = 10 : i32, message = "bqd,bkd->bqk"}> : () -> ()
    %cst_39 = arith.constant dense<0.000000e+00> : vector<4x8x10xf32>
    %125 = tpu.matmul %116, %120, %cst_39 {dimension_numbers = #tpu.dot_dimension_numbers<[2], [2], [1], [1], [0, 0, 0, 1, 1, 1], [0], [0]>} : vector<4x8x16xbf16>, vector<4x10x16xbf16>, vector<4x8x10xf32> -> vector<4x8x10xf32>
    %cst_40 = arith.constant -1.000000e+30 : f32
    "tpu.trace_stop"() : () -> ()
    %126 = vector.shape_cast %108 : vector<4x1x10xi1> to vector<4x1x10xi1>
    %127 = vector.broadcast %126 : vector<4x1x10xi1> to vector<4x8x10xi1>
    %128 = vector.broadcast %cst_40 : f32 to vector<4x8x10xf32>
    %129 = arith.select %127, %125, %128 : vector<4x8x10xi1>, vector<4x8x10xf32>
    %cst_41 = arith.constant dense<0xFF800000> : vector<4x8xf32>
    %130 = vector.multi_reduction <maximumf>, %129, %cst_41 [2] : vector<4x8x10xf32> to vector<4x8xf32>
    %131 = vector.shape_cast %130 : vector<4x8xf32> to vector<4x8x1xf32>
    %132 = vector.broadcast %131 : vector<4x8x1xf32> to vector<4x8x10xf32>
    %133 = arith.subf %129, %132 : vector<4x8x10xf32>
    %134 = math.exp %133 : vector<4x8x10xf32>
    %cst_42 = arith.constant dense<0.000000e+00> : vector<4x8xf32>
    %135 = vector.multi_reduction <add>, %134, %cst_42 [2] : vector<4x8x10xf32> to vector<4x8xf32>
    %136 = vector.shape_cast %135 : vector<4x8xf32> to vector<4x8x1xf32>
    %137 = tpu.reciprocal %136 {approx = true} : vector<4x8x1xf32> -> vector<4x8x1xf32>
    %138 = vector.broadcast %137 : vector<4x8x1xf32> to vector<4x8x10xf32>
    %139 = arith.mulf %134, %138 : vector<4x8x10xf32>
    %140 = arith.truncf %139 : vector<4x8x10xf32> to vector<4x8x10xbf16>
    "tpu.trace_start"() <{level = 10 : i32, message = "bqk,bkd->bqd"}> : () -> ()
    %cst_43 = arith.constant dense<0.000000e+00> : vector<4x8x16xf32>
    %141 = tpu.matmul %140, %124, %cst_43 {dimension_numbers = #tpu.dot_dimension_numbers<[2], [1], [1], [2], [0, 0, 0, 1, 1, 2], [0], [0]>} : vector<4x8x10xbf16>, vector<4x10x16xbf16>, vector<4x8x16xf32> -> vector<4x8x16xf32>
    "tpu.trace_stop"() : () -> ()
    %142 = vector.shape_cast %141 : vector<4x8x16xf32> to vector<2x2x8x16xf32>
    %143 = tpu.transpose %142, [0, 2, 1, 3] : vector<2x2x8x16xf32> -> vector<2x8x2x16xf32>
    %144 = vector.shape_cast %143 : vector<2x8x2x16xf32> to vector<16x32xf32>
    %c0_44 = arith.constant 0 : index
    %c0_45 = arith.constant 0 : index
    %c0_46 = arith.constant 0 : index
    %145 = vector.load %arg8[%c0_44, %c0_45, %c0_46] : memref<1x32x32xbf16, #tpu.memory_space<vmem>>, vector<1x32x32xbf16>
    %146 = vector.shape_cast %145 : vector<1x32x32xbf16> to vector<32x32xbf16>
    %147 = arith.truncf %144 : vector<16x32xf32> to vector<16x32xbf16>
    %cst_47 = arith.constant dense<0.000000e+00> : vector<16x32xf32>
    %148 = tpu.matmul %147, %146, %cst_47 {dimension_numbers = #tpu.dot_dimension_numbers<[1], [0], [0], [1], [0, 0, 1, 1], [], []>} : vector<16x32xbf16>, vector<32x32xbf16>, vector<16x32xf32> -> vector<16x32xf32>
    %149 = vector.extract_strided_slice %7 {offsets = [4, 0], sizes = [1, 32], strides = [1, 1]} : vector<16x96xf32> to vector<1x32xf32>
    %150 = vector.broadcast %149 : vector<1x32xf32> to vector<16x32xf32>
    %151 = arith.addf %148, %150 : vector<16x32xf32>
    %152 = arith.addf %87, %151 : vector<16x32xf32>
    %cst_48 = arith.constant dense<0.000000e+00> : vector<16xf32>
    %153 = vector.multi_reduction <add>, %152, %cst_48 [1] : vector<16x32xf32> to vector<16xf32>
    %154 = vector.shape_cast %153 : vector<16xf32> to vector<16x1xf32>
    %cst_49 = arith.constant 3.200000e+01 : f32
    %155 = vector.broadcast %cst_49 : f32 to vector<16x1xf32>
    %156 = arith.divf %154, %155 : vector<16x1xf32>
    %157 = vector.broadcast %156 : vector<16x1xf32> to vector<16x32xf32>
    %158 = arith.subf %152, %157 : vector<16x32xf32>
    %159 = arith.mulf %158, %158 : vector<16x32xf32>
    %cst_50 = arith.constant dense<0.000000e+00> : vector<16xf32>
    %160 = vector.multi_reduction <add>, %159, %cst_50 [1] : vector<16x32xf32> to vector<16xf32>
    %161 = vector.shape_cast %160 : vector<16xf32> to vector<16x1xf32>
    %cst_51 = arith.constant 3.200000e+01 : f32
    %162 = vector.broadcast %cst_51 : f32 to vector<16x1xf32>
    %163 = arith.divf %161, %162 : vector<16x1xf32>
    %164 = vector.broadcast %156 : vector<16x1xf32> to vector<16x32xf32>
    %165 = arith.subf %152, %164 : vector<16x32xf32>
    %cst_52 = arith.constant 9.99999974E-6 : f32
    %166 = vector.broadcast %cst_52 : f32 to vector<16x1xf32>
    %167 = arith.addf %163, %166 : vector<16x1xf32>
    %168 = math.rsqrt %167 : vector<16x1xf32>
    %169 = vector.broadcast %168 : vector<16x1xf32> to vector<16x32xf32>
    %170 = arith.mulf %165, %169 : vector<16x32xf32>
    %171 = vector.extract_strided_slice %7 {offsets = [9, 0], sizes = [1, 32], strides = [1, 1]} : vector<16x96xf32> to vector<1x32xf32>
    %172 = vector.broadcast %171 : vector<1x32xf32> to vector<16x32xf32>
    %173 = arith.mulf %170, %172 : vector<16x32xf32>
    %174 = vector.extract_strided_slice %7 {offsets = [12, 0], sizes = [1, 32], strides = [1, 1]} : vector<16x96xf32> to vector<1x32xf32>
    %175 = vector.broadcast %174 : vector<1x32xf32> to vector<16x32xf32>
    %176 = arith.addf %173, %175 : vector<16x32xf32>
    %c0_53 = arith.constant 0 : index
    %c0_54 = arith.constant 0 : index
    %c0_55 = arith.constant 0 : index
    %177 = vector.load %arg9[%c0_53, %c0_54, %c0_55] : memref<1x32x64xbf16, #tpu.memory_space<vmem>>, vector<1x32x64xbf16>
    %178 = vector.shape_cast %177 : vector<1x32x64xbf16> to vector<32x64xbf16>
    %179 = arith.truncf %176 : vector<16x32xf32> to vector<16x32xbf16>
    %cst_56 = arith.constant dense<0.000000e+00> : vector<16x64xf32>
    %180 = tpu.matmul %179, %178, %cst_56 {dimension_numbers = #tpu.dot_dimension_numbers<[1], [0], [0], [1], [0, 0, 1, 1], [], []>} : vector<16x32xbf16>, vector<32x64xbf16>, vector<16x64xf32> -> vector<16x64xf32>
    %181 = vector.extract_strided_slice %7 {offsets = [5, 0], sizes = [1, 64], strides = [1, 1]} : vector<16x96xf32> to vector<1x64xf32>
    %182 = vector.broadcast %181 : vector<1x64xf32> to vector<16x64xf32>
    %183 = arith.addf %180, %182 : vector<16x64xf32>
    %cst_57 = arith.constant 0.000000e+00 : f32
    %184 = vector.broadcast %cst_57 : f32 to vector<16x64xf32>
    %185 = arith.maximumf %183, %184 : vector<16x64xf32>
    %c0_58 = arith.constant 0 : index
    %c0_59 = arith.constant 0 : index
    %c0_60 = arith.constant 0 : index
    %186 = vector.load %arg10[%c0_58, %c0_59, %c0_60] : memref<1x64x32xbf16, #tpu.memory_space<vmem>>, vector<1x64x32xbf16>
    %187 = vector.shape_cast %186 : vector<1x64x32xbf16> to vector<64x32xbf16>
    %188 = arith.truncf %185 : vector<16x64xf32> to vector<16x64xbf16>
    %cst_61 = arith.constant dense<0.000000e+00> : vector<16x32xf32>
    %189 = tpu.matmul %188, %187, %cst_61 {dimension_numbers = #tpu.dot_dimension_numbers<[1], [0], [0], [1], [0, 0, 1, 1], [], []>} : vector<16x64xbf16>, vector<64x32xbf16>, vector<16x32xf32> -> vector<16x32xf32>
    %190 = vector.extract_strided_slice %7 {offsets = [6, 0], sizes = [1, 32], strides = [1, 1]} : vector<16x96xf32> to vector<1x32xf32>
    %191 = vector.broadcast %190 : vector<1x32xf32> to vector<16x32xf32>
    %192 = arith.addf %189, %191 : vector<16x32xf32>
    %193 = arith.addf %176, %192 : vector<16x32xf32>
    %cst_62 = arith.constant dense<0.000000e+00> : vector<16xf32>
    %194 = vector.multi_reduction <add>, %193, %cst_62 [1] : vector<16x32xf32> to vector<16xf32>
    %195 = vector.shape_cast %194 : vector<16xf32> to vector<16x1xf32>
    %cst_63 = arith.constant 3.200000e+01 : f32
    %196 = vector.broadcast %cst_63 : f32 to vector<16x1xf32>
    %197 = arith.divf %195, %196 : vector<16x1xf32>
    %198 = vector.broadcast %197 : vector<16x1xf32> to vector<16x32xf32>
    %199 = arith.subf %193, %198 : vector<16x32xf32>
    %200 = arith.mulf %199, %199 : vector<16x32xf32>
    %cst_64 = arith.constant dense<0.000000e+00> : vector<16xf32>
    %201 = vector.multi_reduction <add>, %200, %cst_64 [1] : vector<16x32xf32> to vector<16xf32>
    %202 = vector.shape_cast %201 : vector<16xf32> to vector<16x1xf32>
    %cst_65 = arith.constant 3.200000e+01 : f32
    %203 = vector.broadcast %cst_65 : f32 to vector<16x1xf32>
    %204 = arith.divf %202, %203 : vector<16x1xf32>
    %205 = vector.broadcast %197 : vector<16x1xf32> to vector<16x32xf32>
    %206 = arith.subf %193, %205 : vector<16x32xf32>
    %cst_66 = arith.constant 9.99999974E-6 : f32
    %207 = vector.broadcast %cst_66 : f32 to vector<16x1xf32>
    %208 = arith.addf %204, %207 : vector<16x1xf32>
    %209 = math.rsqrt %208 : vector<16x1xf32>
    %210 = vector.broadcast %209 : vector<16x1xf32> to vector<16x32xf32>
    %211 = arith.mulf %206, %210 : vector<16x32xf32>
    %212 = vector.extract_strided_slice %7 {offsets = [10, 0], sizes = [1, 32], strides = [1, 1]} : vector<16x96xf32> to vector<1x32xf32>
    %213 = vector.broadcast %212 : vector<1x32xf32> to vector<16x32xf32>
    %214 = arith.mulf %211, %213 : vector<16x32xf32>
    %215 = vector.extract_strided_slice %7 {offsets = [13, 0], sizes = [1, 32], strides = [1, 1]} : vector<16x96xf32> to vector<1x32xf32>
    %216 = vector.broadcast %215 : vector<1x32xf32> to vector<16x32xf32>
    %217 = arith.addf %214, %216 : vector<16x32xf32>
    %c0_67 = arith.constant 0 : index
    %c0_68 = arith.constant 0 : index
    %218 = vector.load %arg13[%c0_67, %c0_68] : memref<16x32xf32, #tpu.memory_space<vmem>>, vector<16x32xf32>
    tpu.vector_store %arg13[%c0_67, %c0_68], %217 {strides = array<i32>} : memref<16x32xf32, #tpu.memory_space<vmem>>, vector<16x32xf32>,
    %c1_i32 = arith.constant 1 : i32
    %219 = arith.cmpi eq, %arg0, %c1_i32 : i32
    %220 = arith.extui %219 : i1 to i32
    %c0_i32_69 = arith.constant 0 : i32
    %221 = arith.cmpi ne, %220, %c0_i32_69 : i32
    scf.if %221 {
      %222 = vector.shape_cast %217 : vector<16x32xf32> to vector<2x8x32xf32>
      %c0_70 = arith.constant 0 : index
      %c0_71 = arith.constant 0 : index
      %c0_72 = arith.constant 0 : index
      %223 = vector.load %arg12[%c0_70, %c0_71, %c0_72] : memref<2x8x32xf32, #tpu.memory_space<vmem>>, vector<2x8x32xf32>
      tpu.vector_store %arg12[%c0_70, %c0_71, %c0_72], %222 {strides = array<i32>} : memref<2x8x32xf32, #tpu.memory_space<vmem>>, vector<2x8x32xf32>,
    } else {
    }
    return
  }
  func.func @transform_0(%arg0: i32) -> (i32, i32, i32) {
    %c0_i32 = arith.constant 0 : i32
    %c0_i32_0 = arith.constant 0 : i32
    %c0_i32_1 = arith.constant 0 : i32
    %c0_i32_2 = arith.constant 0 : i32
    return %c0_i32, %c0_i32_0, %c0_i32_1 : i32, i32, i32
  }
  func.func @transform_1(%arg0: i32) -> (i32, i32, i32) {
    %c0_i32 = arith.constant 0 : i32
    %c0_i32_0 = arith.constant 0 : i32
    %c0_i32_1 = arith.constant 0 : i32
    %c0_i32_2 = arith.constant 0 : i32
    return %c0_i32, %c0_i32_0, %c0_i32_1 : i32, i32, i32
  }
  func.func @transform_2(%arg0: i32) -> (i32, i32, i32) {
    %c0_i32 = arith.constant 0 : i32
    %c0_i32_0 = arith.constant 0 : i32
    %c0_i32_1 = arith.constant 0 : i32
    %c0_i32_2 = arith.constant 0 : i32
    return %c0_i32, %c0_i32_0, %c0_i32_1 : i32, i32, i32
  }
  func.func @transform_3(%arg0: i32) -> (i32, i32, i32) {
    %c0_i32 = arith.constant 0 : i32
    %c0_i32_0 = arith.constant 0 : i32
    %c0_i32_1 = arith.constant 0 : i32
    return %arg0, %c0_i32, %c0_i32_0 : i32, i32, i32
  }
  func.func @transform_4(%arg0: i32) -> (i32, i32, i32) {
    %c0_i32 = arith.constant 0 : i32
    %c0_i32_0 = arith.constant 0 : i32
    %c0_i32_1 = arith.constant 0 : i32
    return %arg0, %c0_i32, %c0_i32_0 : i32, i32, i32
  }
  func.func @transform_5(%arg0: i32) -> (i32, i32, i32) {
    %c0_i32 = arith.constant 0 : i32
    %c0_i32_0 = arith.constant 0 : i32
    %c0_i32_1 = arith.constant 0 : i32
    return %arg0, %c0_i32, %c0_i32_0 : i32, i32, i32
  }
  func.func @transform_6(%arg0: i32) -> (i32, i32, i32) {
    %c0_i32 = arith.constant 0 : i32
    %c0_i32_0 = arith.constant 0 : i32
    %c0_i32_1 = arith.constant 0 : i32
    return %arg0, %c0_i32, %c0_i32_0 : i32, i32, i32
  }
  func.func @transform_7(%arg0: i32) -> (i32, i32, i32) {
    %c0_i32 = arith.constant 0 : i32
    %c0_i32_0 = arith.constant 0 : i32
    %c0_i32_1 = arith.constant 0 : i32
    return %arg0, %c0_i32, %c0_i32_0 : i32, i32, i32
  }
  func.func @transform_8(%arg0: i32) -> (i32, i32, i32) {
    %c0_i32 = arith.constant 0 : i32
    %c0_i32_0 = arith.constant 0 : i32
    %c0_i32_1 = arith.constant 0 : i32
    return %arg0, %c0_i32, %c0_i32_0 : i32, i32, i32
  }
  func.func @transform_9(%arg0: i32) -> (i32, i32, i32) {
    %c0_i32 = arith.constant 0 : i32
    %c0_i32_0 = arith.constant 0 : i32
    %c0_i32_1 = arith.constant 0 : i32
    return %arg0, %c0_i32, %c0_i32_0 : i32, i32, i32
  }
  func.func @transform_10(%arg0: i32) -> (i32, i32, i32) {
    %c0_i32 = arith.constant 0 : i32
    %c0_i32_0 = arith.constant 0 : i32
    %c0_i32_1 = arith.constant 0 : i32
    return %arg0, %c0_i32, %c0_i32_0 : i32, i32, i32
  }
  func.func @transform_11(%arg0: i32) -> (i32, i32, i32) {
    %c0_i32 = arith.constant 0 : i32
    %c0_i32_0 = arith.constant 0 : i32
    %c0_i32_1 = arith.constant 0 : i32
    %c0_i32_2 = arith.constant 0 : i32
    return %c0_i32, %c0_i32_0, %c0_i32_1 : i32, i32, i32
  }
}

</mosaic_0001>

<llo_original>
// kernel: transformer_decoder.1
$region0: #{transformer_decoder.1}
  #allocation0 [shape = 'u32[]', space=smem, size = 0x4, offset = 0x4, fixed_abs, tag = 'smem constant byte address 0x4 - core index']
  #allocation1 [shape = 'u32[144,128]{1,0:T(1,128)}', space=vmem, size = 0x12000, scoped, tag = 'internal scratch']
  #allocation2 [shape = 'f32[16,32]{1,0:T(8,128)}', space=vmem, size = 0x2000, scoped, tag = 'scratch operand']
  %s0 = inlined_call_operand.vmem [shape: f32[2,8,32], index: 0, kind: input, shape index: {}]
  %s1 = inlined_call_operand.vmem [shape: f32[2,10,32], index: 1, kind: input, shape index: {}]
  %s2 = inlined_call_operand.vmem [shape: f32[2,1,10], index: 2, kind: input, shape index: {}]
  %s3 = inlined_call_operand.vmem [shape: bf16[2,32,96], index: 3, kind: input, shape index: {}]
  %s4 = inlined_call_operand.vmem [shape: bf16[2,32,32], index: 4, kind: input, shape index: {}]
  %s5 = inlined_call_operand.vmem [shape: bf16[2,32,32], index: 5, kind: input, shape index: {}]
  %s6 = inlined_call_operand.vmem [shape: bf16[2,32,64], index: 6, kind: input, shape index: {}]
  %s7 = inlined_call_operand.vmem [shape: bf16[2,32,32], index: 7, kind: input, shape index: {}]
  %s8 = inlined_call_operand.vmem [shape: bf16[2,32,64], index: 8, kind: input, shape index: {}]
  %s9 = inlined_call_operand.vmem [shape: bf16[2,64,32], index: 9, kind: input, shape index: {}]
  %s10 = inlined_call_operand.vmem [shape: f32[2,16,96], index: 10, kind: input, shape index: {}]
  %s11 = inlined_call_operand.hbm [shape: f32[2,8,32], index: 11, kind: output, shape index: {}]
  %s12 = sld [smem:[#allocation0]]
  $region85: #{transformer_decoder.1} parent=0
    _
  %s14 = ssub.s32 1, %s12
  %s15 = scalar_select 0, %s14, %s12
  $region1: #{transformer_decoder.1} parent=0
    #allocation3 [shape = 'u8[8192]{0}', space=vmem, size = 0x2000, scoped, tag = 'output window, operand 0, single buffered']
    #allocation4 [shape = 's32[2]{0}', space=sflag, size = 0x8, scoped, tag = 'scoped memory for transformer_decoder.1']
    %16 = vsyncpa [#allocation4], 0
    loop: start=0, step=1, limit=4
    $region2: #{transformer_decoder.1} parent=1 // loop_pre_header
      _
    $region3: #{transformer_decoder.1} parent=1 // loop_header
      %s18 = sphi 0, %s22
      %p19 = scmp.ge.s32.totalorder %s18, 4
      %s26 = sphi 0, %s26
      %s28 = sphi 0, %s26
      %s29 = sphi 0, %s28
      %s43 = sphi 0, %s29
      %s47 = sphi 0, %s47
      %s49 = sphi 0, %s47
      %s50 = sphi 0, %s49
      %s64 = sphi 0, %s50
      %s68 = sphi 0, %s68
      %s70 = sphi 0, %s68
      %s71 = sphi 0, %s70
      %s85 = sphi 0, %s71
      %s91 = sphi 0, %s93
      %s94 = sphi 0, %s91
      %s95 = sphi 0, %s94
      %s111 = sphi 0, %s95
      %s117 = sphi 0, %s119
      %s120 = sphi 0, %s117
      %s121 = sphi 0, %s120
      %s137 = sphi 0, %s121
      %s143 = sphi 0, %s145
      %s146 = sphi 0, %s143
      %s147 = sphi 0, %s146
      %s163 = sphi 0, %s147
      %s169 = sphi 0, %s171
      %s172 = sphi 0, %s169
      %s173 = sphi 0, %s172
      %s189 = sphi 0, %s173
      %s195 = sphi 0, %s197
      %s198 = sphi 0, %s195
      %s199 = sphi 0, %s198
      %s215 = sphi 0, %s199
      %s221 = sphi 0, %s223
      %s224 = sphi 0, %s221
      %s225 = sphi 0, %s224
      %s241 = sphi 0, %s225
      %s247 = sphi 0, %s249
      %s250 = sphi 0, %s247
      %s251 = sphi 0, %s250
      %s267 = sphi 0, %s251
      %s273 = sphi 0, %s275
      %s276 = sphi 0, %s273
      %s277 = sphi 0, %s276
      %s293 = sphi 0, %s277
      %s297 = sphi 0, %s297
      %s299 = sphi 0, %s297
      %s300 = sphi 0, %s299
      %s314 = sphi 0, %s300
    $region4: #{transformer_decoder.1} parent=1 // loop_header_branch
      %21 = sbr.rel (%p19) target = $region8
    $region5: #{transformer_decoder.1} parent=1 // loop_body
      %s23 = ssub.s32 %s18, 1
      %s24 = ssub.s32 %s18, 2
      %s25 = sadd.s32 %s18, 1
      %s27 = sadd.s32 %s26, 1
      %p30 = scmp.eq.s32.totalorder %s18, 1
      %p31 = scmp.ne.s32.totalorder %s26, %s28
      %p32 = scmp.eq.s32.totalorder %s18, 0
      %p33 = por %p31, %p32
      %p34 = scmp.ne.s32.totalorder %s26, %s28
      %p35 = scmp.eq.s32.totalorder %s23, 1
      %p36 = por %p34, %p35
      %p37 = scmp.ne.s32.totalorder %s28, %s29
      %p38 = scmp.eq.s32.totalorder %s23, 0
      %p39 = por %p37, %p38
      %p40 = scmp.ne.s32.totalorder %s28, %s29
      %p41 = scmp.eq.s32.totalorder %s24, 1
      %p42 = por %p40, %p41
      %p44 = scmp.ne.s32.totalorder %s29, %s43
      %p45 = scmp.eq.s32.totalorder %s24, 0
      %p46 = por %p44, %p45
      %s48 = sadd.s32 %s47, 1
      %p51 = scmp.eq.s32.totalorder %s18, 1
      %p52 = scmp.ne.s32.totalorder %s47, %s49
      %p53 = scmp.eq.s32.totalorder %s18, 0
      %p54 = por %p52, %p53
      %p55 = scmp.ne.s32.totalorder %s47, %s49
      %p56 = scmp.eq.s32.totalorder %s23, 1
      %p57 = por %p55, %p56
      %p58 = scmp.ne.s32.totalorder %s49, %s50
      %p59 = scmp.eq.s32.totalorder %s23, 0
      %p60 = por %p58, %p59
      %p61 = scmp.ne.s32.totalorder %s49, %s50
      %p62 = scmp.eq.s32.totalorder %s24, 1
      %p63 = por %p61, %p62
      %p65 = scmp.ne.s32.totalorder %s50, %s64
      %p66 = scmp.eq.s32.totalorder %s24, 0
      %p67 = por %p65, %p66
      %s69 = sadd.s32 %s68, 1
      %p72 = scmp.eq.s32.totalorder %s18, 1
      %p73 = scmp.ne.s32.totalorder %s68, %s70
      %p74 = scmp.eq.s32.totalorder %s18, 0
      %p75 = por %p73, %p74
      %p76 = scmp.ne.s32.totalorder %s68, %s70
      %p77 = scmp.eq.s32.totalorder %s23, 1
      %p78 = por %p76, %p77
      %p79 = scmp.ne.s32.totalorder %s70, %s71
      %p80 = scmp.eq.s32.totalorder %s23, 0
      %p81 = por %p79, %p80
      %p82 = scmp.ne.s32.totalorder %s70, %s71
      %p83 = scmp.eq.s32.totalorder %s24, 1
      %p84 = por %p82, %p83
      %p86 = scmp.ne.s32.totalorder %s71, %s85
      %p87 = scmp.eq.s32.totalorder %s24, 0
      %p88 = por %p86, %p87
      %s89 = ssub.s32 %s18, %s25
      %p90 = scmp.eq.s32.totalorder %s89, 0
      %s92 = sadd.s32 %s91, 1
      %s93 = scalar_select %p90, %s91, %s92
      %p96 = pneg %p90
      %p97 = scmp.eq.s32.totalorder %s18, 1
      %p98 = por %p96, %p97
      %p99 = scmp.ne.s32.totalorder %s91, %s94
      %p100 = scmp.eq.s32.totalorder %s18, 0
      %p101 = por %p99, %p100
      %p102 = scmp.ne.s32.totalorder %s91, %s94
      %p103 = scmp.eq.s32.totalorder %s23, 1
      %p104 = por %p102, %p103
      %p105 = scmp.ne.s32.totalorder %s94, %s95
      %p106 = scmp.eq.s32.totalorder %s23, 0
      %p107 = por %p105, %p106
      %p108 = scmp.ne.s32.totalorder %s94, %s95
      %p109 = scmp.eq.s32.totalorder %s24, 1
      %p110 = por %p108, %p109
      %p112 = scmp.ne.s32.totalorder %s95, %s111
      %p113 = scmp.eq.s32.totalorder %s24, 0
      %p114 = por %p112, %p113
      %s115 = ssub.s32 %s18, %s25
      %p116 = scmp.eq.s32.totalorder %s115, 0
      %s118 = sadd.s32 %s117, 1
      %s119 = scalar_select %p116, %s117, %s118
      %p122 = pneg %p116
      %p123 = scmp.eq.s32.totalorder %s18, 1
      %p124 = por %p122, %p123
      %p125 = scmp.ne.s32.totalorder %s117, %s120
      %p126 = scmp.eq.s32.totalorder %s18, 0
      %p127 = por %p125, %p126
      %p128 = scmp.ne.s32.totalorder %s117, %s120
      %p129 = scmp.eq.s32.totalorder %s23, 1
      %p130 = por %p128, %p129
      %p131 = scmp.ne.s32.totalorder %s120, %s121
      %p132 = scmp.eq.s32.totalorder %s23, 0
      %p133 = por %p131, %p132
      %p134 = scmp.ne.s32.totalorder %s120, %s121
      %p135 = scmp.eq.s32.totalorder %s24, 1
      %p136 = por %p134, %p135
      %p138 = scmp.ne.s32.totalorder %s121, %s137
      %p139 = scmp.eq.s32.totalorder %s24, 0
      %p140 = por %p138, %p139
      %s141 = ssub.s32 %s18, %s25
      %p142 = scmp.eq.s32.totalorder %s141, 0
      %s144 = sadd.s32 %s143, 1
      %s145 = scalar_select %p142, %s143, %s144
      %p148 = pneg %p142
      %p149 = scmp.eq.s32.totalorder %s18, 1
      %p150 = por %p148, %p149
      %p151 = scmp.ne.s32.totalorder %s143, %s146
      %p152 = scmp.eq.s32.totalorder %s18, 0
      %p153 = por %p151, %p152
      %p154 = scmp.ne.s32.totalorder %s143, %s146
      %p155 = scmp.eq.s32.totalorder %s23, 1
      %p156 = por %p154, %p155
      %p157 = scmp.ne.s32.totalorder %s146, %s147
      %p158 = scmp.eq.s32.totalorder %s23, 0
      %p159 = por %p157, %p158
      %p160 = scmp.ne.s32.totalorder %s146, %s147
      %p161 = scmp.eq.s32.totalorder %s24, 1
      %p162 = por %p160, %p161
      %p164 = scmp.ne.s32.totalorder %s147, %s163
      %p165 = scmp.eq.s32.totalorder %s24, 0
      %p166 = por %p164, %p165
      %s167 = ssub.s32 %s18, %s25
      %p168 = scmp.eq.s32.totalorder %s167, 0
      %s170 = sadd.s32 %s169, 1
      %s171 = scalar_select %p168, %s169, %s170
      %p174 = pneg %p168
      %p175 = scmp.eq.s32.totalorder %s18, 1
      %p176 = por %p174, %p175
      %p177 = scmp.ne.s32.totalorder %s169, %s172
      %p178 = scmp.eq.s32.totalorder %s18, 0
      %p179 = por %p177, %p178
      %p180 = scmp.ne.s32.totalorder %s169, %s172
      %p181 = scmp.eq.s32.totalorder %s23, 1
      %p182 = por %p180, %p181
      %p183 = scmp.ne.s32.totalorder %s172, %s173
      %p184 = scmp.eq.s32.totalorder %s23, 0
      %p185 = por %p183, %p184
      %p186 = scmp.ne.s32.totalorder %s172, %s173
      %p187 = scmp.eq.s32.totalorder %s24, 1
      %p188 = por %p186, %p187
      %p190 = scmp.ne.s32.totalorder %s173, %s189
      %p191 = scmp.eq.s32.totalorder %s24, 0
      %p192 = por %p190, %p191
      %s193 = ssub.s32 %s18, %s25
      %p194 = scmp.eq.s32.totalorder %s193, 0
      %s196 = sadd.s32 %s195, 1
      %s197 = scalar_select %p194, %s195, %s196
      %p200 = pneg %p194
      %p201 = scmp.eq.s32.totalorder %s18, 1
      %p202 = por %p200, %p201
      %p203 = scmp.ne.s32.totalorder %s195, %s198
      %p204 = scmp.eq.s32.totalorder %s18, 0
      %p205 = por %p203, %p204
      %p206 = scmp.ne.s32.totalorder %s195, %s198
      %p207 = scmp.eq.s32.totalorder %s23, 1
      %p208 = por %p206, %p207
      %p209 = scmp.ne.s32.totalorder %s198, %s199
      %p210 = scmp.eq.s32.totalorder %s23, 0
      %p211 = por %p209, %p210
      %p212 = scmp.ne.s32.totalorder %s198, %s199
      %p213 = scmp.eq.s32.totalorder %s24, 1
      %p214 = por %p212, %p213
      %p216 = scmp.ne.s32.totalorder %s199, %s215
      %p217 = scmp.eq.s32.totalorder %s24, 0
      %p218 = por %p216, %p217
      %s219 = ssub.s32 %s18, %s25
      %p220 = scmp.eq.s32.totalorder %s219, 0
      %s222 = sadd.s32 %s221, 1
      %s223 = scalar_select %p220, %s221, %s222
      %p226 = pneg %p220
      %p227 = scmp.eq.s32.totalorder %s18, 1
      %p228 = por %p226, %p227
      %p229 = scmp.ne.s32.totalorder %s221, %s224
      %p230 = scmp.eq.s32.totalorder %s18, 0
      %p231 = por %p229, %p230
      %p232 = scmp.ne.s32.totalorder %s221, %s224
      %p233 = scmp.eq.s32.totalorder %s23, 1
      %p234 = por %p232, %p233
      %p235 = scmp.ne.s32.totalorder %s224, %s225
      %p236 = scmp.eq.s32.totalorder %s23, 0
      %p237 = por %p235, %p236
      %p238 = scmp.ne.s32.totalorder %s224, %s225
      %p239 = scmp.eq.s32.totalorder %s24, 1
      %p240 = por %p238, %p239
      %p242 = scmp.ne.s32.totalorder %s225, %s241
      %p243 = scmp.eq.s32.totalorder %s24, 0
      %p244 = por %p242, %p243
      %s245 = ssub.s32 %s18, %s25
      %p246 = scmp.eq.s32.totalorder %s245, 0
      %s248 = sadd.s32 %s247, 1
      %s249 = scalar_select %p246, %s247, %s248
      %p252 = pneg %p246
      %p253 = scmp.eq.s32.totalorder %s18, 1
      %p254 = por %p252, %p253
      %p255 = scmp.ne.s32.totalorder %s247, %s250
      %p256 = scmp.eq.s32.totalorder %s18, 0
      %p257 = por %p255, %p256
      %p258 = scmp.ne.s32.totalorder %s247, %s250
      %p259 = scmp.eq.s32.totalorder %s23, 1
      %p260 = por %p258, %p259
      %p261 = scmp.ne.s32.totalorder %s250, %s251
      %p262 = scmp.eq.s32.totalorder %s23, 0
      %p263 = por %p261, %p262
      %p264 = scmp.ne.s32.totalorder %s250, %s251
      %p265 = scmp.eq.s32.totalorder %s24, 1
      %p266 = por %p264, %p265
      %p268 = scmp.ne.s32.totalorder %s251, %s267
      %p269 = scmp.eq.s32.totalorder %s24, 0
      %p270 = por %p268, %p269
      %s271 = ssub.s32 %s18, %s25
      %p272 = scmp.eq.s32.totalorder %s271, 0
      %s274 = sadd.s32 %s273, 1
      %s275 = scalar_select %p272, %s273, %s274
      %p278 = pneg %p272
      %p279 = scmp.eq.s32.totalorder %s18, 1
      %p280 = por %p278, %p279
      %p281 = scmp.ne.s32.totalorder %s273, %s276
      %p282 = scmp.eq.s32.totalorder %s18, 0
      %p283 = por %p281, %p282
      %p284 = scmp.ne.s32.totalorder %s273, %s276
      %p285 = scmp.eq.s32.totalorder %s23, 1
      %p286 = por %p284, %p285
      %p287 = scmp.ne.s32.totalorder %s276, %s277
      %p288 = scmp.eq.s32.totalorder %s23, 0
      %p289 = por %p287, %p288
      %p290 = scmp.ne.s32.totalorder %s276, %s277
      %p291 = scmp.eq.s32.totalorder %s24, 1
      %p292 = por %p290, %p291
      %p294 = scmp.ne.s32.totalorder %s277, %s293
      %p295 = scmp.eq.s32.totalorder %s24, 0
      %p296 = por %p294, %p295
      %s298 = sadd.s32 %s297, 1
      %p301 = scmp.eq.s32.totalorder %s18, 1
      %p302 = scmp.ne.s32.totalorder %s297, %s299
      %p303 = scmp.eq.s32.totalorder %s18, 0
      %p304 = por %p302, %p303
      %p305 = scmp.ne.s32.totalorder %s297, %s299
      %p306 = scmp.eq.s32.totalorder %s23, 1
      %p307 = por %p305, %p306
      %p308 = scmp.ne.s32.totalorder %s299, %s300
      %p309 = scmp.eq.s32.totalorder %s23, 0
      %p310 = por %p308, %p309
      %p311 = scmp.ne.s32.totalorder %s299, %s300
      %p312 = scmp.eq.s32.totalorder %s24, 1
      %p313 = por %p311, %p312
      %p315 = scmp.ne.s32.totalorder %s300, %s314
      %p316 = scmp.eq.s32.totalorder %s24, 0
      %p317 = por %p315, %p316
      %p318 = scmp.le.s32.totalorder 1, %s18
      %p319 = scmp.lt.s32.totalorder %s18, 3
      %p320 = pnand %p318, %p319
      %p321 = pneg %p320
      // Predicated region
      $region9: #{transformer_decoder.1} parent=5 // pred_check
        _
      $region10: #{transformer_decoder.1} parent=5 // pred_check_branch
        %323 = sbr.rel (%p320) target = $region12
      $region11: #{transformer_decoder.1} parent=5 // pred_region
        %s324 = ssub.s32 %s18, 1
        // Predicated region
        $region13: #{transformer_decoder.1} parent=11 // pred_check
          %p325 = pneg %p39
        $region14: #{transformer_decoder.1} parent=11 // pred_check_branch
          %327 = sbr.rel (%p325) target = $region16
        $region15: #{transformer_decoder.1} parent=11 // pred_region
          _
        $region16: #{transformer_decoder.1} parent=11 // pred_fallthru
          _
        // Predicated region
        $region17: #{transformer_decoder.1} parent=11 // pred_check
          %p328 = pneg %p60
        $region18: #{transformer_decoder.1} parent=11 // pred_check_branch
          %330 = sbr.rel (%p328) target = $region20
        $region19: #{transformer_decoder.1} parent=11 // pred_region
          _
        $region20: #{transformer_decoder.1} parent=11 // pred_fallthru
          _
        // Predicated region
        $region21: #{transformer_decoder.1} parent=11 // pred_check
          %p331 = pneg %p81
        $region22: #{transformer_decoder.1} parent=11 // pred_check_branch
          %333 = sbr.rel (%p331) target = $region24
        $region23: #{transformer_decoder.1} parent=11 // pred_region
          _
        $region24: #{transformer_decoder.1} parent=11 // pred_fallthru
          _
      $region12: #{transformer_decoder.1} parent=5 // pred_fallthru
        _
      %p334 = scmp.lt.s32.totalorder %s18, 2
      // Predicated region
      $region25: #{transformer_decoder.1} parent=5 // pred_check
        %p335 = pneg %p334
      $region26: #{transformer_decoder.1} parent=5 // pred_check_branch
        %337 = sbr.rel (%p335) target = $region28
      $region27: #{transformer_decoder.1} parent=5 // pred_region
        // Predicated region
        $region29: #{transformer_decoder.1} parent=27 // pred_check
          %p338 = pneg %p101
        $region30: #{transformer_decoder.1} parent=27 // pred_check_branch
          %340 = sbr.rel (%p338) target = $region32
        $region31: #{transformer_decoder.1} parent=27 // pred_region
          %p341 = scmp.lt.s32.totalorder %s18, 1
          %s342 = scalar_select %p341, %s18, 1
          %s343 = smul.addr %s342, 4
          %s344 = smul.addr %s343, 4
          %s345 = scalar_lea.vmem %s3, %s344
        $region32: #{transformer_decoder.1} parent=27 // pred_fallthru
          _
        // Predicated region
        $region33: #{transformer_decoder.1} parent=27 // pred_check
          %p346 = pneg %p127
        $region34: #{transformer_decoder.1} parent=27 // pred_check_branch
          %348 = sbr.rel (%p346) target = $region36
        $region35: #{transformer_decoder.1} parent=27 // pred_region
          %p349 = scmp.lt.s32.totalorder %s18, 1
          %s350 = scalar_select %p349, %s18, 1
          %s351 = smul.addr %s350, 4
          %s352 = smul.addr %s351, 4
          %s353 = scalar_lea.vmem %s4, %s352
        $region36: #{transformer_decoder.1} parent=27 // pred_fallthru
          _
        // Predicated region
        $region37: #{transformer_decoder.1} parent=27 // pred_check
          %p354 = pneg %p153
        $region38: #{transformer_decoder.1} parent=27 // pred_check_branch
          %356 = sbr.rel (%p354) target = $region40
        $region39: #{transformer_decoder.1} parent=27 // pred_region
          %p357 = scmp.lt.s32.totalorder %s18, 1
          %s358 = scalar_select %p357, %s18, 1
          %s359 = smul.addr %s358, 4
          %s360 = smul.addr %s359, 4
          %s361 = scalar_lea.vmem %s5, %s360
        $region40: #{transformer_decoder.1} parent=27 // pred_fallthru
          _
        // Predicated region
        $region41: #{transformer_decoder.1} parent=27 // pred_check
          %p362 = pneg %p179
        $region42: #{transformer_decoder.1} parent=27 // pred_check_branch
          %364 = sbr.rel (%p362) target = $region44
        $region43: #{transformer_decoder.1} parent=27 // pred_region
          %p365 = scmp.lt.s32.totalorder %s18, 1
          %s366 = scalar_select %p365, %s18, 1
          %s367 = smul.addr %s366, 4
          %s368 = smul.addr %s367, 4
          %s369 = scalar_lea.vmem %s6, %s368
        $region44: #{transformer_decoder.1} parent=27 // pred_fallthru
          _
        // Predicated region
        $region45: #{transformer_decoder.1} parent=27 // pred_check
          %p370 = pneg %p205
        $region46: #{transformer_decoder.1} parent=27 // pred_check_branch
          %372 = sbr.rel (%p370) target = $region48
        $region47: #{transformer_decoder.1} parent=27 // pred_region
          %p373 = scmp.lt.s32.totalorder %s18, 1
          %s374 = scalar_select %p373, %s18, 1
          %s375 = smul.addr %s374, 4
          %s376 = smul.addr %s375, 4
          %s377 = scalar_lea.vmem %s7, %s376
        $region48: #{transformer_decoder.1} parent=27 // pred_fallthru
          _
        // Predicated region
        $region49: #{transformer_decoder.1} parent=27 // pred_check
          %p378 = pneg %p231
        $region50: #{transformer_decoder.1} parent=27 // pred_check_branch
          %380 = sbr.rel (%p378) target = $region52
        $region51: #{transformer_decoder.1} parent=27 // pred_region
          %p381 = scmp.lt.s32.totalorder %s18, 1
          %s382 = scalar_select %p381, %s18, 1
          %s383 = smul.addr %s382, 4
          %s384 = smul.addr %s383, 4
          %s385 = scalar_lea.vmem %s8, %s384
        $region52: #{transformer_decoder.1} parent=27 // pred_fallthru
          _
        // Predicated region
        $region53: #{transformer_decoder.1} parent=27 // pred_check
          %p386 = pneg %p257
        $region54: #{transformer_decoder.1} parent=27 // pred_check_branch
          %388 = sbr.rel (%p386) target = $region56
        $region55: #{transformer_decoder.1} parent=27 // pred_region
          %p389 = scmp.lt.s32.totalorder %s18, 1
          %s390 = scalar_select %p389, %s18, 1
          %s391 = smul.addr %s390, 8
          %s392 = smul.addr %s391, 4
          %s393 = scalar_lea.vmem %s9, %s392
        $region56: #{transformer_decoder.1} parent=27 // pred_fallthru
          _
        // Predicated region
        $region57: #{transformer_decoder.1} parent=27 // pred_check
          %p394 = pneg %p283
        $region58: #{transformer_decoder.1} parent=27 // pred_check_branch
          %396 = sbr.rel (%p394) target = $region60
        $region59: #{transformer_decoder.1} parent=27 // pred_region
          %p397 = scmp.lt.s32.totalorder %s18, 1
          %s398 = scalar_select %p397, %s18, 1
          %s399 = smul.addr %s398, 2
          %s400 = smul.addr %s399, 8
          %s401 = scalar_lea.vmem %s10, %s400
        $region60: #{transformer_decoder.1} parent=27 // pred_fallthru
          _
      $region28: #{transformer_decoder.1} parent=5 // pred_fallthru
        _
      %p402 = scmp.le.s32.totalorder 1, %s18
      %p403 = scmp.lt.s32.totalorder %s18, 3
      %p404 = pnand %p402, %p403
      %p405 = pneg %p404
      // Predicated region
      $region61: #{transformer_decoder.1} parent=5 // pred_check
        _
      $region62: #{transformer_decoder.1} parent=5 // pred_check_branch
        %407 = sbr.rel (%p404) target = $region64
      $region63: #{transformer_decoder.1} parent=5 // pred_region
        %s408 = ssub.s32 %s18, 1
        %p409 = pneg %p39
        %p410 = pneg %p36
        %p411 = pneg %p60
        %p412 = pneg %p57
        %p413 = pneg %p81
        %p414 = pneg %p78
        %p415 = scmp.lt.s32.totalorder %s23, 1
        %s416 = scalar_select %p415, %s23, 1
        %s417 = smul.addr %s416, 4
        %s418 = smul.addr %s417, 4
        %s419 = scalar_lea.vmem %s3, %s418
        %p420 = pneg %p107
        %p421 = pneg %p104
        %p422 = scmp.lt.s32.totalorder %s23, 1
        %s423 = scalar_select %p422, %s23, 1
        %s424 = smul.addr %s423, 4
        %s425 = smul.addr %s424, 4
        %s426 = scalar_lea.vmem %s4, %s425
        %p427 = pneg %p133
        %p428 = pneg %p130
        %p429 = scmp.lt.s32.totalorder %s23, 1
        %s430 = scalar_select %p429, %s23, 1
        %s431 = smul.addr %s430, 4
        %s432 = smul.addr %s431, 4
        %s433 = scalar_lea.vmem %s5, %s432
        %p434 = pneg %p159
        %p435 = pneg %p156
        %p436 = scmp.lt.s32.totalorder %s23, 1
        %s437 = scalar_select %p436, %s23, 1
        %s438 = smul.addr %s437, 4
        %s439 = smul.addr %s438, 4
        %s440 = scalar_lea.vmem %s6, %s439
        %p441 = pneg %p185
        %p442 = pneg %p182
        %p443 = scmp.lt.s32.totalorder %s23, 1
        %s444 = scalar_select %p443, %s23, 1
        %s445 = smul.addr %s444, 4
        %s446 = smul.addr %s445, 4
        %s447 = scalar_lea.vmem %s7, %s446
        %p448 = pneg %p211
        %p449 = pneg %p208
        %p450 = scmp.lt.s32.totalorder %s23, 1
        %s451 = scalar_select %p450, %s23, 1
        %s452 = smul.addr %s451, 4
        %s453 = smul.addr %s452, 4
        %s454 = scalar_lea.vmem %s8, %s453
        %p455 = pneg %p237
        %p456 = pneg %p234
        %p457 = scmp.lt.s32.totalorder %s23, 1
        %s458 = scalar_select %p457, %s23, 1
        %s459 = smul.addr %s458, 8
        %s460 = smul.addr %s459, 4
        %s461 = scalar_lea.vmem %s9, %s460
        %p462 = pneg %p263
        %p463 = pneg %p260
        %p464 = scmp.lt.s32.totalorder %s23, 1
        %s465 = scalar_select %p464, %s23, 1
        %s466 = smul.addr %s465, 2
        %s467 = smul.addr %s466, 8
        %s468 = scalar_lea.vmem %s10, %s467
        %p469 = pneg %p289
        %p470 = pneg %p286
        %p471 = pneg %p310
        %p472 = pneg %p307
        %p473 = scmp.lt.s32.totalorder %s23, 1
        %s474 = scalar_select %p473, %s23, 1
        %s475 = smul.addr %s474, 4
        %s476 = smul.addr %s475, 4
        %s477 = scalar_lea.vmem %s3, %s476
        %p478 = scmp.lt.s32.totalorder %s23, 1
        %s479 = scalar_select %p478, %s23, 1
        %s480 = smul.addr %s479, 4
        %s481 = smul.addr %s480, 4
        %s482 = scalar_lea.vmem %s4, %s481
        %p483 = scmp.lt.s32.totalorder %s23, 1
        %s484 = scalar_select %p483, %s23, 1
        %s485 = smul.addr %s484, 4
        %s486 = smul.addr %s485, 4
        %s487 = scalar_lea.vmem %s5, %s486
        %p488 = scmp.lt.s32.totalorder %s23, 1
        %s489 = scalar_select %p488, %s23, 1
        %s490 = smul.addr %s489, 4
        %s491 = smul.addr %s490, 4
        %s492 = scalar_lea.vmem %s6, %s491
        %p493 = scmp.lt.s32.totalorder %s23, 1
        %s494 = scalar_select %p493, %s23, 1
        %s495 = smul.addr %s494, 4
        %s496 = smul.addr %s495, 4
        %s497 = scalar_lea.vmem %s7, %s496
        %p498 = scmp.lt.s32.totalorder %s23, 1
        %s499 = scalar_select %p498, %s23, 1
        %s500 = smul.addr %s499, 4
        %s501 = smul.addr %s500, 4
        %s502 = scalar_lea.vmem %s8, %s501
        %p503 = scmp.lt.s32.totalorder %s23, 1
        %s504 = scalar_select %p503, %s23, 1
        %s505 = smul.addr %s504, 8
        %s506 = smul.addr %s505, 4
        %s507 = scalar_lea.vmem %s9, %s506
        %p508 = scmp.lt.s32.totalorder %s23, 1
        %s509 = scalar_select %p508, %s23, 1
        %s510 = smul.addr %s509, 2
        %s511 = smul.addr %s510, 8
        %s512 = scalar_lea.vmem %s10, %s511
        %p514 = scmp.eq.s32.totalorder %s23, 0
        // Predicated region
        $region65: #{transformer_decoder.1} parent=63 // pred_check
          %p515 = pneg %p514
        $region66: #{transformer_decoder.1} parent=63 // pred_check_branch
          %517 = sbr.rel (%p515) target = $region68
        $region67: #{transformer_decoder.1} parent=63 // pred_region
          %v518 = vld [vmem:[%s0] sm:$0xff]
          %v519 = vld [vmem:[%s0 + $0x8] sm:$0xff]
          %vm520 = vcmask 261120
          %521 = vst.msk [vmem:[#allocation2] sm:$0xff] %vm520, %v518
          %522 = vst.msk [vmem:[#allocation2 + $0x8] sm:$0xff] %vm520, %v519
        $region68: #{transformer_decoder.1} parent=63 // pred_fallthru
          _
        %v523 = vld [vmem:[#allocation2] sm:$0xff]
        %v524 = vld [vmem:[#allocation2 + $0x8] sm:$0xff]
        %v525 = vld [vmem:[%s1] sm:$0xff]
        %v526 = vld [vmem:[%s1 + $0x8] sm:$0x3]
        %v527 = vld [vmem:[%s1 + $0x10] sm:$0xff]
        %v528 = vld [vmem:[%s1 + $0x18] sm:$0x3]
        %v533 = vcombine.high %v525, %v525
        %v535 = vunpack.c.l.s4 1983009808
        %v536 = vunpack.c.0.s8 %v535
        %v537 = vlaneseq
        %v538 = vshrl.u32 %v537, 7
        %v539 = vsub.s32 %v536, %v538
        %v540 = vrot.slane %v525, %v539
        %v542 = vunpack.c.l.s4 1983009808
        %v543 = vunpack.c.0.s8 %v542
        %v544 = vlaneseq
        %v545 = vshrl.u32 %v544, 7
        %v546 = vsub.s32 %v543, %v545
        %v547 = vrot.slane %v533, %v546
        %v548 = vcombine.high %v540, %v540
        %v549 = vcombine.high %v547, %v547
        %v551 = vunpack.c.l.s4 1983009808
        %v552 = vunpack.c.0.s8 %v551
        %v553 = vlaneseq
        %v554 = vshrl.u32 %v553, 7
        %v555 = vsub.s32 %v552, %v554
        %v556 = vrot.slane %v526, %v555
        %v557 = vcombine.high %v527, %v527
        %v559 = vunpack.c.l.s4 1983009808
        %v560 = vunpack.c.0.s8 %v559
        %v561 = vlaneseq
        %v562 = vshrl.u32 %v561, 7
        %v563 = vsub.s32 %v560, %v562
        %v564 = vrot.slane %v527, %v563
        %v566 = vunpack.c.l.s4 1983009808
        %v567 = vunpack.c.0.s8 %v566
        %v568 = vlaneseq
        %v569 = vshrl.u32 %v568, 7
        %v570 = vsub.s32 %v567, %v569
        %v571 = vrot.slane %v557, %v570
        %v572 = vcombine.high %v564, %v564
        %v573 = vcombine.high %v571, %v571
        %v575 = vunpack.c.l.s4 1983009808
        %v576 = vunpack.c.0.s8 %v575
        %v577 = vlaneseq
        %v578 = vshrl.u32 %v577, 7
        %v579 = vsub.s32 %v576, %v578
        %v580 = vrot.slane %v528, %v579
        %v581 = vld [vmem:[%s512] sm:$0xff]
        %v582 = vld [vmem:[%s512 + $0x8] sm:$0xff]
        %v583 = vld [vmem:[%s477] sm:$0xf]
        %v584 = vld [vmem:[%s477 + $0x4] sm:$0xf]
        %v585 = vld [vmem:[%s477 + $0x8] sm:$0xf]
        %v586 = vld [vmem:[%s477 + $0xc] sm:$0xf]
        %v587 = vpack.c.bf16 %v524, %v523
        %v588 = vlaneseq
        %v589 = vshrl.u32 %v588, 7
        %v590 = vsub.s32 0, %v589
        %v591 = vrot.slane %v581, %v590
        %v596 = vunpack.c.l.b16 %v583
        %v597 = vunpack.c.l.b16 %v584
        %v598 = vunpack.c.l.b16 %v585
        %v599 = vunpack.c.l.b16 %v586
        %v600 = vpack.c.b16 %v597, %v596
        %v601 = vpack.c.b16 %v599, %v598
        %vm604 = vcmask 261120
        %v606 = vsel %vm604, %v587, 0
        %608 = vmatprep.subr.bf16.mxu0 0
        %609 = vmatpush1.bf16.msra.mxu0 0
        %610 = vmatprep.subr.bf16.mxu0 0
        %611 = vmatpush1.bf16.msra.mxu0 0
        %612 = vmatprep.subr.bf16.mxu0 0
        %613 = vmatpush1.bf16.msra.mxu0 0
        %614 = vmatprep.subr.bf16.mxu0 0
        %615 = vmatpush1.bf16.msra.mxu0 0
        %616 = vmatprep.subr.bf16.mxu0 0
        %617 = vmatpush1.bf16.msra.mxu0 0
        %618 = vmatprep.subr.bf16.mxu0 0
        %619 = vmatpush1.bf16.msra.mxu0 0
        %620 = vmatprep.subr.bf16.mxu0 0
        %621 = vmatpush1.bf16.msra.mxu0 %v601
        %622 = vmatprep.subr.bf16.mxu0 0
        %623 = vmatpush1.bf16.msra.mxu0 %v600
        %624 = vmatprep.subr.bf16.mxu0 0
        %625 = vmatpush2.bf16.msra.mxu0 0
        %626 = vmatprep.subr.bf16.mxu0 0
        %627 = vmatpush2.bf16.msra.mxu0 0
        %628 = vmatprep.subr.bf16.mxu0 0
        %629 = vmatpush2.bf16.msra.mxu0 0
        %630 = vmatprep.subr.bf16.mxu0 0
        %631 = vmatpush2.bf16.msra.mxu0 0
        %632 = vmatprep.subr.bf16.mxu0 0
        %633 = vmatpush2.bf16.msra.mxu0 0
        %634 = vmatprep.subr.bf16.mxu0 0
        %635 = vmatpush2.bf16.msra.mxu0 0
        %636 = vmatprep.subr.bf16.mxu0 0
        %637 = vmatpush2.bf16.msra.mxu0 0
        %638 = vmatprep.subr.bf16.mxu0 0
        %639 = vmatpush2.bf16.msra.mxu0 0
        %640 = vmatprep.mubr.bf16.mxu0 0
        %641 = vmatmul.mubr.bf16.gmra.mxu0 %v606
        %v642 = vpop.f32.mrf.mxu0
        %v643 = vadd.f32 %v591, %v642
        %v644 = vpop.f32.mrf.mxu0
        %v645 = vpop.f32.mrf.mxu0
        %v646 = vadd.f32 %v591, %v645
        %v647 = vpop.f32.mrf.mxu0
        %648 = vdwg.mxu0
        %v649 = vlaneseq
        %v650 = vshrl.u32 %v649, 7
        %v651 = vlaneseq
        %v652 = vand.u32 %v651, 127
        %vm653 = vcmp.ge.s32.totalorder %v650, %v652
        %v654 = vmul.f32 %v643, 0.25
        %v655 = vmul.f32 %v646, 0.25
        %658 = vrot.lane.b32.xlu0 %v654, 112
        %v659 = vpop.permute.xlu0 %658
        %660 = vrot.lane.b32.xlu0 %v655, 112
        %v661 = vpop.permute.xlu0 %660
        %v664 = vcombine.high %v654, 0.0
        %v666 = vunpack.c.l.s4 1983009808
        %v667 = vunpack.c.0.s8 %v666
        %v668 = vlaneseq
        %v669 = vshrl.u32 %v668, 7
        %v670 = vsub.s32 %v667, %v669
        %v671 = vrot.slane %v654, %v670
        %v673 = vunpack.c.l.s4 1983009808
        %v674 = vunpack.c.0.s8 %v673
        %v675 = vlaneseq
        %v676 = vshrl.u32 %v675, 7
        %v677 = vsub.s32 %v674, %v676
        %v678 = vrot.slane %v664, %v677
        %v679 = vcombine.high %v659, 0.0
        %v681 = vunpack.c.l.s4 1983009808
        %v682 = vunpack.c.0.s8 %v681
        %v683 = vlaneseq
        %v684 = vshrl.u32 %v683, 7
        %v685 = vsub.s32 %v682, %v684
        %v686 = vrot.slane %v659, %v685
        %v688 = vunpack.c.l.s4 1983009808
        %v689 = vunpack.c.0.s8 %v688
        %v690 = vlaneseq
        %v691 = vshrl.u32 %v690, 7
        %v692 = vsub.s32 %v689, %v691
        %v693 = vrot.slane %v679, %v692
        %v694 = vcombine.low %v671, %v686
        %v695 = vcombine.high %v671, %v686
        %v697 = vunpack.c.l.s4 1934713408
        %v698 = vunpack.c.0.s8 %v697
        %v699 = vlaneseq
        %v700 = vshrl.u32 %v699, 7
        %v701 = vsub.s32 %v698, %v700
        %v702 = vrot.slane %v694, %v701
        %v704 = vunpack.c.l.s4 1934713408
        %v705 = vunpack.c.0.s8 %v704
        %v706 = vlaneseq
        %v707 = vshrl.u32 %v706, 7
        %v708 = vsub.s32 %v705, %v707
        %v709 = vrot.slane %v695, %v708
        %v710 = vcombine.low %v678, %v693
        %v711 = vcombine.high %v678, %v693
        %v713 = vunpack.c.l.s4 1934713408
        %v714 = vunpack.c.0.s8 %v713
        %v715 = vlaneseq
        %v716 = vshrl.u32 %v715, 7
        %v717 = vsub.s32 %v714, %v716
        %v718 = vrot.slane %v710, %v717
        %v720 = vunpack.c.l.s4 1934713408
        %v721 = vunpack.c.0.s8 %v720
        %v722 = vlaneseq
        %v723 = vshrl.u32 %v722, 7
        %v724 = vsub.s32 %v721, %v723
        %v725 = vrot.slane %v711, %v724
        %v726 = vcombine.high %v702, 0.0
        %v727 = vcombine.high %v709, 0.0
        %v728 = vcombine.high %v718, 0.0
        %v729 = vcombine.high %v725, 0.0
        %v730 = vcombine.high %v655, 0.0
        %v732 = vunpack.c.l.s4 1983009808
        %v733 = vunpack.c.0.s8 %v732
        %v734 = vlaneseq
        %v735 = vshrl.u32 %v734, 7
        %v736 = vsub.s32 %v733, %v735
        %v737 = vrot.slane %v655, %v736
        %v739 = vunpack.c.l.s4 1983009808
        %v740 = vunpack.c.0.s8 %v739
        %v741 = vlaneseq
        %v742 = vshrl.u32 %v741, 7
        %v743 = vsub.s32 %v740, %v742
        %v744 = vrot.slane %v730, %v743
        %v745 = vcombine.high %v661, 0.0
        %v747 = vunpack.c.l.s4 1983009808
        %v748 = vunpack.c.0.s8 %v747
        %v749 = vlaneseq
        %v750 = vshrl.u32 %v749, 7
        %v751 = vsub.s32 %v748, %v750
        %v752 = vrot.slane %v661, %v751
        %v754 = vunpack.c.l.s4 1983009808
        %v755 = vunpack.c.0.s8 %v754
        %v756 = vlaneseq
        %v757 = vshrl.u32 %v756, 7
        %v758 = vsub.s32 %v755, %v757
        %v759 = vrot.slane %v745, %v758
        %v760 = vcombine.low %v737, %v752
        %v761 = vcombine.high %v737, %v752
        %v763 = vunpack.c.l.s4 1934713408
        %v764 = vunpack.c.0.s8 %v763
        %v765 = vlaneseq
        %v766 = vshrl.u32 %v765, 7
        %v767 = vsub.s32 %v764, %v766
        %v768 = vrot.slane %v760, %v767
        %v770 = vunpack.c.l.s4 1934713408
        %v771 = vunpack.c.0.s8 %v770
        %v772 = vlaneseq
        %v773 = vshrl.u32 %v772, 7
        %v774 = vsub.s32 %v771, %v773
        %v775 = vrot.slane %v761, %v774
        %v776 = vcombine.low %v744, %v759
        %v777 = vcombine.high %v744, %v759
        %v779 = vunpack.c.l.s4 1934713408
        %v780 = vunpack.c.0.s8 %v779
        %v781 = vlaneseq
        %v782 = vshrl.u32 %v781, 7
        %v783 = vsub.s32 %v780, %v782
        %v784 = vrot.slane %v776, %v783
        %v786 = vunpack.c.l.s4 1934713408
        %v787 = vunpack.c.0.s8 %v786
        %v788 = vlaneseq
        %v789 = vshrl.u32 %v788, 7
        %v790 = vsub.s32 %v787, %v789
        %v791 = vrot.slane %v777, %v790
        %v792 = vcombine.high %v768, 0.0
        %v793 = vcombine.high %v775, 0.0
        %v794 = vcombine.high %v784, 0.0
        %v795 = vcombine.high %v791, 0.0
        %v796 = vcombine.low %v702, %v709
        %v798 = vunpack.c.l.s4 1983009808
        %v799 = vunpack.c.0.s8 %v798
        %v800 = vlaneseq
        %v801 = vshrl.u32 %v800, 7
        %v802 = vsub.s32 %v799, %v801
        %v803 = vrot.slane %v796, %v802
        %v804 = vcombine.low %v726, %v727
        %v806 = vunpack.c.l.s4 1983009808
        %v807 = vunpack.c.0.s8 %v806
        %v808 = vlaneseq
        %v809 = vshrl.u32 %v808, 7
        %v810 = vsub.s32 %v807, %v809
        %v811 = vrot.slane %v804, %v810
        %v812 = vcombine.low %v718, %v725
        %v814 = vunpack.c.l.s4 1983009808
        %v815 = vunpack.c.0.s8 %v814
        %v816 = vlaneseq
        %v817 = vshrl.u32 %v816, 7
        %v818 = vsub.s32 %v815, %v817
        %v819 = vrot.slane %v812, %v818
        %v820 = vcombine.low %v728, %v729
        %v822 = vunpack.c.l.s4 1983009808
        %v823 = vunpack.c.0.s8 %v822
        %v824 = vlaneseq
        %v825 = vshrl.u32 %v824, 7
        %v826 = vsub.s32 %v823, %v825
        %v827 = vrot.slane %v820, %v826
        %v828 = vcombine.low %v803, %v811
        %v830 = vunpack.c.l.s4 1934713408
        %v831 = vunpack.c.0.s8 %v830
        %v832 = vlaneseq
        %v833 = vshrl.u32 %v832, 7
        %v834 = vsub.s32 %v831, %v833
        %v835 = vrot.slane %v828, %v834
        %v836 = vcombine.low %v819, %v827
        %v838 = vunpack.c.l.s4 1934713408
        %v839 = vunpack.c.0.s8 %v838
        %v840 = vlaneseq
        %v841 = vshrl.u32 %v840, 7
        %v842 = vsub.s32 %v839, %v841
        %v843 = vrot.slane %v836, %v842
        %v844 = vcombine.low %v835, %v843
        %v845 = vcombine.high %v835, %v843
        %v846 = vcombine.low %v768, %v775
        %v848 = vunpack.c.l.s4 1983009808
        %v849 = vunpack.c.0.s8 %v848
        %v850 = vlaneseq
        %v851 = vshrl.u32 %v850, 7
        %v852 = vsub.s32 %v849, %v851
        %v853 = vrot.slane %v846, %v852
        %v854 = vcombine.low %v792, %v793
        %v856 = vunpack.c.l.s4 1983009808
        %v857 = vunpack.c.0.s8 %v856
        %v858 = vlaneseq
        %v859 = vshrl.u32 %v858, 7
        %v860 = vsub.s32 %v857, %v859
        %v861 = vrot.slane %v854, %v860
        %v862 = vcombine.low %v784, %v791
        %v864 = vunpack.c.l.s4 1983009808
        %v865 = vunpack.c.0.s8 %v864
        %v866 = vlaneseq
        %v867 = vshrl.u32 %v866, 7
        %v868 = vsub.s32 %v865, %v867
        %v869 = vrot.slane %v862, %v868
        %v870 = vcombine.low %v794, %v795
        %v872 = vunpack.c.l.s4 1983009808
        %v873 = vunpack.c.0.s8 %v872
        %v874 = vlaneseq
        %v875 = vshrl.u32 %v874, 7
        %v876 = vsub.s32 %v873, %v875
        %v877 = vrot.slane %v870, %v876
        %v878 = vcombine.low %v853, %v861
        %v880 = vunpack.c.l.s4 1934713408
        %v881 = vunpack.c.0.s8 %v880
        %v882 = vlaneseq
        %v883 = vshrl.u32 %v882, 7
        %v884 = vsub.s32 %v881, %v883
        %v885 = vrot.slane %v878, %v884
        %v886 = vcombine.low %v869, %v877
        %v888 = vunpack.c.l.s4 1934713408
        %v889 = vunpack.c.0.s8 %v888
        %v890 = vlaneseq
        %v891 = vshrl.u32 %v890, 7
        %v892 = vsub.s32 %v889, %v891
        %v893 = vrot.slane %v886, %v892
        %v894 = vcombine.low %v885, %v893
        %v895 = vcombine.high %v885, %v893
        %v896 = vpack.c.bf16 %v844, %v844
        %v897 = vpack.c.bf16 %v845, %v845
        %v898 = vpack.c.bf16 %v894, %v894
        %v899 = vpack.c.bf16 %v895, %v895
        %902 = vrot.lane.b32.xlu0 %v643, 112
        %v903 = vpop.permute.xlu0 %902
        %904 = vrot.lane.b32.xlu0 %v646, 112
        %v905 = vpop.permute.xlu0 %904
        %906 = vrot.lane.b32.xlu0 %v643, 96
        %v907 = vpop.permute.xlu0 %906
        %908 = vrot.lane.b32.xlu0 %v646, 96
        %v909 = vpop.permute.xlu0 %908
        %910 = vrot.lane.b32.xlu0 %v903, 96
        %v911 = vpop.permute.xlu0 %910
        %912 = vrot.lane.b32.xlu0 %v905, 96
        %v913 = vpop.permute.xlu0 %912
        %v918 = vcombine.high %v907, 0.0
        %v920 = vunpack.c.l.s4 1983009808
        %v921 = vunpack.c.0.s8 %v920
        %v922 = vlaneseq
        %v923 = vshrl.u32 %v922, 7
        %v924 = vsub.s32 %v921, %v923
        %v925 = vrot.slane %v907, %v924
        %v927 = vunpack.c.l.s4 1983009808
        %v928 = vunpack.c.0.s8 %v927
        %v929 = vlaneseq
        %v930 = vshrl.u32 %v929, 7
        %v931 = vsub.s32 %v928, %v930
        %v932 = vrot.slane %v918, %v931
        %v933 = vcombine.high %v911, 0.0
        %v935 = vunpack.c.l.s4 1983009808
        %v936 = vunpack.c.0.s8 %v935
        %v937 = vlaneseq
        %v938 = vshrl.u32 %v937, 7
        %v939 = vsub.s32 %v936, %v938
        %v940 = vrot.slane %v911, %v939
        %v942 = vunpack.c.l.s4 1983009808
        %v943 = vunpack.c.0.s8 %v942
        %v944 = vlaneseq
        %v945 = vshrl.u32 %v944, 7
        %v946 = vsub.s32 %v943, %v945
        %v947 = vrot.slane %v933, %v946
        %v948 = vcombine.low %v925, %v940
        %v949 = vcombine.high %v925, %v940
        %v951 = vunpack.c.l.s4 1934713408
        %v952 = vunpack.c.0.s8 %v951
        %v953 = vlaneseq
        %v954 = vshrl.u32 %v953, 7
        %v955 = vsub.s32 %v952, %v954
        %v956 = vrot.slane %v948, %v955
        %v958 = vunpack.c.l.s4 1934713408
        %v959 = vunpack.c.0.s8 %v958
        %v960 = vlaneseq
        %v961 = vshrl.u32 %v960, 7
        %v962 = vsub.s32 %v959, %v961
        %v963 = vrot.slane %v949, %v962
        %v964 = vcombine.low %v932, %v947
        %v965 = vcombine.high %v932, %v947
        %v967 = vunpack.c.l.s4 1934713408
        %v968 = vunpack.c.0.s8 %v967
        %v969 = vlaneseq
        %v970 = vshrl.u32 %v969, 7
        %v971 = vsub.s32 %v968, %v970
        %v972 = vrot.slane %v964, %v971
        %v974 = vunpack.c.l.s4 1934713408
        %v975 = vunpack.c.0.s8 %v974
        %v976 = vlaneseq
        %v977 = vshrl.u32 %v976, 7
        %v978 = vsub.s32 %v975, %v977
        %v979 = vrot.slane %v965, %v978
        %v980 = vcombine.high %v956, 0.0
        %v981 = vcombine.high %v963, 0.0
        %v982 = vcombine.high %v972, 0.0
        %v983 = vcombine.high %v979, 0.0
        %v984 = vcombine.high %v909, 0.0
        %v986 = vunpack.c.l.s4 1983009808
        %v987 = vunpack.c.0.s8 %v986
        %v988 = vlaneseq
        %v989 = vshrl.u32 %v988, 7
        %v990 = vsub.s32 %v987, %v989
        %v991 = vrot.slane %v909, %v990
        %v993 = vunpack.c.l.s4 1983009808
        %v994 = vunpack.c.0.s8 %v993
        %v995 = vlaneseq
        %v996 = vshrl.u32 %v995, 7
        %v997 = vsub.s32 %v994, %v996
        %v998 = vrot.slane %v984, %v997
        %v999 = vcombine.high %v913, 0.0
        %v1001 = vunpack.c.l.s4 1983009808
        %v1002 = vunpack.c.0.s8 %v1001
        %v1003 = vlaneseq
        %v1004 = vshrl.u32 %v1003, 7
        %v1005 = vsub.s32 %v1002, %v1004
        %v1006 = vrot.slane %v913, %v1005
        %v1008 = vunpack.c.l.s4 1983009808
        %v1009 = vunpack.c.0.s8 %v1008
        %v1010 = vlaneseq
        %v1011 = vshrl.u32 %v1010, 7
        %v1012 = vsub.s32 %v1009, %v1011
        %v1013 = vrot.slane %v999, %v1012
        %v1014 = vcombine.low %v991, %v1006
        %v1015 = vcombine.high %v991, %v1006
        %v1017 = vunpack.c.l.s4 1934713408
        %v1018 = vunpack.c.0.s8 %v1017
        %v1019 = vlaneseq
        %v1020 = vshrl.u32 %v1019, 7
        %v1021 = vsub.s32 %v1018, %v1020
        %v1022 = vrot.slane %v1014, %v1021
        %v1024 = vunpack.c.l.s4 1934713408
        %v1025 = vunpack.c.0.s8 %v1024
        %v1026 = vlaneseq
        %v1027 = vshrl.u32 %v1026, 7
        %v1028 = vsub.s32 %v1025, %v1027
        %v1029 = vrot.slane %v1015, %v1028
        %v1030 = vcombine.low %v998, %v1013
        %v1031 = vcombine.high %v998, %v1013
        %v1033 = vunpack.c.l.s4 1934713408
        %v1034 = vunpack.c.0.s8 %v1033
        %v1035 = vlaneseq
        %v1036 = vshrl.u32 %v1035, 7
        %v1037 = vsub.s32 %v1034, %v1036
        %v1038 = vrot.slane %v1030, %v1037
        %v1040 = vunpack.c.l.s4 1934713408
        %v1041 = vunpack.c.0.s8 %v1040
        %v1042 = vlaneseq
        %v1043 = vshrl.u32 %v1042, 7
        %v1044 = vsub.s32 %v1041, %v1043
        %v1045 = vrot.slane %v1031, %v1044
        %v1046 = vcombine.high %v1022, 0.0
        %v1047 = vcombine.high %v1029, 0.0
        %v1048 = vcombine.high %v1038, 0.0
        %v1049 = vcombine.high %v1045, 0.0
        %v1050 = vcombine.low %v956, %v963
        %v1052 = vunpack.c.l.s4 1983009808
        %v1053 = vunpack.c.0.s8 %v1052
        %v1054 = vlaneseq
        %v1055 = vshrl.u32 %v1054, 7
        %v1056 = vsub.s32 %v1053, %v1055
        %v1057 = vrot.slane %v1050, %v1056
        %v1058 = vcombine.low %v980, %v981
        %v1060 = vunpack.c.l.s4 1983009808
        %v1061 = vunpack.c.0.s8 %v1060
        %v1062 = vlaneseq
        %v1063 = vshrl.u32 %v1062, 7
        %v1064 = vsub.s32 %v1061, %v1063
        %v1065 = vrot.slane %v1058, %v1064
        %v1066 = vcombine.low %v972, %v979
        %v1068 = vunpack.c.l.s4 1983009808
        %v1069 = vunpack.c.0.s8 %v1068
        %v1070 = vlaneseq
        %v1071 = vshrl.u32 %v1070, 7
        %v1072 = vsub.s32 %v1069, %v1071
        %v1073 = vrot.slane %v1066, %v1072
        %v1074 = vcombine.low %v982, %v983
        %v1076 = vunpack.c.l.s4 1983009808
        %v1077 = vunpack.c.0.s8 %v1076
        %v1078 = vlaneseq
        %v1079 = vshrl.u32 %v1078, 7
        %v1080 = vsub.s32 %v1077, %v1079
        %v1081 = vrot.slane %v1074, %v1080
        %v1082 = vcombine.low %v1057, %v1065
        %v1084 = vunpack.c.l.s4 1934713408
        %v1085 = vunpack.c.0.s8 %v1084
        %v1086 = vlaneseq
        %v1087 = vshrl.u32 %v1086, 7
        %v1088 = vsub.s32 %v1085, %v1087
        %v1089 = vrot.slane %v1082, %v1088
        %v1090 = vcombine.low %v1073, %v1081
        %v1092 = vunpack.c.l.s4 1934713408
        %v1093 = vunpack.c.0.s8 %v1092
        %v1094 = vlaneseq
        %v1095 = vshrl.u32 %v1094, 7
        %v1096 = vsub.s32 %v1093, %v1095
        %v1097 = vrot.slane %v1090, %v1096
        %v1098 = vcombine.low %v1089, %v1097
        %v1099 = vcombine.high %v1089, %v1097
        %v1100 = vcombine.low %v1022, %v1029
        %v1102 = vunpack.c.l.s4 1983009808
        %v1103 = vunpack.c.0.s8 %v1102
        %v1104 = vlaneseq
        %v1105 = vshrl.u32 %v1104, 7
        %v1106 = vsub.s32 %v1103, %v1105
        %v1107 = vrot.slane %v1100, %v1106
        %v1108 = vcombine.low %v1046, %v1047
        %v1110 = vunpack.c.l.s4 1983009808
        %v1111 = vunpack.c.0.s8 %v1110
        %v1112 = vlaneseq
        %v1113 = vshrl.u32 %v1112, 7
        %v1114 = vsub.s32 %v1111, %v1113
        %v1115 = vrot.slane %v1108, %v1114
        %v1116 = vcombine.low %v1038, %v1045
        %v1118 = vunpack.c.l.s4 1983009808
        %v1119 = vunpack.c.0.s8 %v1118
        %v1120 = vlaneseq
        %v1121 = vshrl.u32 %v1120, 7
        %v1122 = vsub.s32 %v1119, %v1121
        %v1123 = vrot.slane %v1116, %v1122
        %v1124 = vcombine.low %v1048, %v1049
        %v1126 = vunpack.c.l.s4 1983009808
        %v1127 = vunpack.c.0.s8 %v1126
        %v1128 = vlaneseq
        %v1129 = vshrl.u32 %v1128, 7
        %v1130 = vsub.s32 %v1127, %v1129
        %v1131 = vrot.slane %v1124, %v1130
        %v1132 = vcombine.low %v1107, %v1115
        %v1134 = vunpack.c.l.s4 1934713408
        %v1135 = vunpack.c.0.s8 %v1134
        %v1136 = vlaneseq
        %v1137 = vshrl.u32 %v1136, 7
        %v1138 = vsub.s32 %v1135, %v1137
        %v1139 = vrot.slane %v1132, %v1138
        %v1140 = vcombine.low %v1123, %v1131
        %v1142 = vunpack.c.l.s4 1934713408
        %v1143 = vunpack.c.0.s8 %v1142
        %v1144 = vlaneseq
        %v1145 = vshrl.u32 %v1144, 7
        %v1146 = vsub.s32 %v1143, %v1145
        %v1147 = vrot.slane %v1140, %v1146
        %v1148 = vcombine.low %v1139, %v1147
        %v1149 = vcombine.high %v1139, %v1147
        %v1150 = vpack.c.bf16 %v1098, %v1098
        %v1151 = vpack.c.bf16 %v1099, %v1099
        %v1152 = vpack.c.bf16 %v1148, %v1148
        %v1153 = vpack.c.bf16 %v1149, %v1149
        %1154 = vrot.lane.b32.xlu0 %v643, 64
        %v1155 = vpop.permute.xlu0 %1154
        %1156 = vrot.lane.b32.xlu0 %v646, 64
        %v1157 = vpop.permute.xlu0 %1156
        %1158 = vrot.lane.b32.xlu0 %v903, 64
        %v1159 = vpop.permute.xlu0 %1158
        %1160 = vrot.lane.b32.xlu0 %v905, 64
        %v1161 = vpop.permute.xlu0 %1160
        %v1166 = vcombine.high %v1155, 0.0
        %v1168 = vunpack.c.l.s4 1983009808
        %v1169 = vunpack.c.0.s8 %v1168
        %v1170 = vlaneseq
        %v1171 = vshrl.u32 %v1170, 7
        %v1172 = vsub.s32 %v1169, %v1171
        %v1173 = vrot.slane %v1155, %v1172
        %v1175 = vunpack.c.l.s4 1983009808
        %v1176 = vunpack.c.0.s8 %v1175
        %v1177 = vlaneseq
        %v1178 = vshrl.u32 %v1177, 7
        %v1179 = vsub.s32 %v1176, %v1178
        %v1180 = vrot.slane %v1166, %v1179
        %v1181 = vcombine.high %v1159, 0.0
        %v1183 = vunpack.c.l.s4 1983009808
        %v1184 = vunpack.c.0.s8 %v1183
        %v1185 = vlaneseq
        %v1186 = vshrl.u32 %v1185, 7
        %v1187 = vsub.s32 %v1184, %v1186
        %v1188 = vrot.slane %v1159, %v1187
        %v1190 = vunpack.c.l.s4 1983009808
        %v1191 = vunpack.c.0.s8 %v1190
        %v1192 = vlaneseq
        %v1193 = vshrl.u32 %v1192, 7
        %v1194 = vsub.s32 %v1191, %v1193
        %v1195 = vrot.slane %v1181, %v1194
        %v1196 = vcombine.low %v1173, %v1188
        %v1197 = vcombine.high %v1173, %v1188
        %v1199 = vunpack.c.l.s4 1934713408
        %v1200 = vunpack.c.0.s8 %v1199
        %v1201 = vlaneseq
        %v1202 = vshrl.u32 %v1201, 7
        %v1203 = vsub.s32 %v1200, %v1202
        %v1204 = vrot.slane %v1196, %v1203
        %v1206 = vunpack.c.l.s4 1934713408
        %v1207 = vunpack.c.0.s8 %v1206
        %v1208 = vlaneseq
        %v1209 = vshrl.u32 %v1208, 7
        %v1210 = vsub.s32 %v1207, %v1209
        %v1211 = vrot.slane %v1197, %v1210
        %v1212 = vcombine.low %v1180, %v1195
        %v1213 = vcombine.high %v1180, %v1195
        %v1215 = vunpack.c.l.s4 1934713408
        %v1216 = vunpack.c.0.s8 %v1215
        %v1217 = vlaneseq
        %v1218 = vshrl.u32 %v1217, 7
        %v1219 = vsub.s32 %v1216, %v1218
        %v1220 = vrot.slane %v1212, %v1219
        %v1222 = vunpack.c.l.s4 1934713408
        %v1223 = vunpack.c.0.s8 %v1222
        %v1224 = vlaneseq
        %v1225 = vshrl.u32 %v1224, 7
        %v1226 = vsub.s32 %v1223, %v1225
        %v1227 = vrot.slane %v1213, %v1226
        %v1228 = vcombine.high %v1204, 0.0
        %v1229 = vcombine.high %v1211, 0.0
        %v1230 = vcombine.high %v1220, 0.0
        %v1231 = vcombine.high %v1227, 0.0
        %v1232 = vcombine.high %v1157, 0.0
        %v1234 = vunpack.c.l.s4 1983009808
        %v1235 = vunpack.c.0.s8 %v1234
        %v1236 = vlaneseq
        %v1237 = vshrl.u32 %v1236, 7
        %v1238 = vsub.s32 %v1235, %v1237
        %v1239 = vrot.slane %v1157, %v1238
        %v1241 = vunpack.c.l.s4 1983009808
        %v1242 = vunpack.c.0.s8 %v1241
        %v1243 = vlaneseq
        %v1244 = vshrl.u32 %v1243, 7
        %v1245 = vsub.s32 %v1242, %v1244
        %v1246 = vrot.slane %v1232, %v1245
        %v1247 = vcombine.high %v1161, 0.0
        %v1249 = vunpack.c.l.s4 1983009808
        %v1250 = vunpack.c.0.s8 %v1249
        %v1251 = vlaneseq
        %v1252 = vshrl.u32 %v1251, 7
        %v1253 = vsub.s32 %v1250, %v1252
        %v1254 = vrot.slane %v1161, %v1253
        %v1256 = vunpack.c.l.s4 1983009808
        %v1257 = vunpack.c.0.s8 %v1256
        %v1258 = vlaneseq
        %v1259 = vshrl.u32 %v1258, 7
        %v1260 = vsub.s32 %v1257, %v1259
        %v1261 = vrot.slane %v1247, %v1260
        %v1262 = vcombine.low %v1239, %v1254
        %v1263 = vcombine.high %v1239, %v1254
        %v1265 = vunpack.c.l.s4 1934713408
        %v1266 = vunpack.c.0.s8 %v1265
        %v1267 = vlaneseq
        %v1268 = vshrl.u32 %v1267, 7
        %v1269 = vsub.s32 %v1266, %v1268
        %v1270 = vrot.slane %v1262, %v1269
        %v1272 = vunpack.c.l.s4 1934713408
        %v1273 = vunpack.c.0.s8 %v1272
        %v1274 = vlaneseq
        %v1275 = vshrl.u32 %v1274, 7
        %v1276 = vsub.s32 %v1273, %v1275
        %v1277 = vrot.slane %v1263, %v1276
        %v1278 = vcombine.low %v1246, %v1261
        %v1279 = vcombine.high %v1246, %v1261
        %v1281 = vunpack.c.l.s4 1934713408
        %v1282 = vunpack.c.0.s8 %v1281
        %v1283 = vlaneseq
        %v1284 = vshrl.u32 %v1283, 7
        %v1285 = vsub.s32 %v1282, %v1284
        %v1286 = vrot.slane %v1278, %v1285
        %v1288 = vunpack.c.l.s4 1934713408
        %v1289 = vunpack.c.0.s8 %v1288
        %v1290 = vlaneseq
        %v1291 = vshrl.u32 %v1290, 7
        %v1292 = vsub.s32 %v1289, %v1291
        %v1293 = vrot.slane %v1279, %v1292
        %v1294 = vcombine.high %v1270, 0.0
        %v1295 = vcombine.high %v1277, 0.0
        %v1296 = vcombine.high %v1286, 0.0
        %v1297 = vcombine.high %v1293, 0.0
        %v1298 = vcombine.low %v1204, %v1211
        %v1300 = vunpack.c.l.s4 1983009808
        %v1301 = vunpack.c.0.s8 %v1300
        %v1302 = vlaneseq
        %v1303 = vshrl.u32 %v1302, 7
        %v1304 = vsub.s32 %v1301, %v1303
        %v1305 = vrot.slane %v1298, %v1304
        %v1306 = vcombine.low %v1228, %v1229
        %v1308 = vunpack.c.l.s4 1983009808
        %v1309 = vunpack.c.0.s8 %v1308
        %v1310 = vlaneseq
        %v1311 = vshrl.u32 %v1310, 7
        %v1312 = vsub.s32 %v1309, %v1311
        %v1313 = vrot.slane %v1306, %v1312
        %v1314 = vcombine.low %v1220, %v1227
        %v1316 = vunpack.c.l.s4 1983009808
        %v1317 = vunpack.c.0.s8 %v1316
        %v1318 = vlaneseq
        %v1319 = vshrl.u32 %v1318, 7
        %v1320 = vsub.s32 %v1317, %v1319
        %v1321 = vrot.slane %v1314, %v1320
        %v1322 = vcombine.low %v1230, %v1231
        %v1324 = vunpack.c.l.s4 1983009808
        %v1325 = vunpack.c.0.s8 %v1324
        %v1326 = vlaneseq
        %v1327 = vshrl.u32 %v1326, 7
        %v1328 = vsub.s32 %v1325, %v1327
        %v1329 = vrot.slane %v1322, %v1328
        %v1330 = vcombine.low %v1305, %v1313
        %v1332 = vunpack.c.l.s4 1934713408
        %v1333 = vunpack.c.0.s8 %v1332
        %v1334 = vlaneseq
        %v1335 = vshrl.u32 %v1334, 7
        %v1336 = vsub.s32 %v1333, %v1335
        %v1337 = vrot.slane %v1330, %v1336
        %v1338 = vcombine.low %v1321, %v1329
        %v1340 = vunpack.c.l.s4 1934713408
        %v1341 = vunpack.c.0.s8 %v1340
        %v1342 = vlaneseq
        %v1343 = vshrl.u32 %v1342, 7
        %v1344 = vsub.s32 %v1341, %v1343
        %v1345 = vrot.slane %v1338, %v1344
        %v1346 = vcombine.low %v1337, %v1345
        %v1347 = vcombine.high %v1337, %v1345
        %v1348 = vcombine.low %v1270, %v1277
        %v1350 = vunpack.c.l.s4 1983009808
        %v1351 = vunpack.c.0.s8 %v1350
        %v1352 = vlaneseq
        %v1353 = vshrl.u32 %v1352, 7
        %v1354 = vsub.s32 %v1351, %v1353
        %v1355 = vrot.slane %v1348, %v1354
        %v1356 = vcombine.low %v1294, %v1295
        %v1358 = vunpack.c.l.s4 1983009808
        %v1359 = vunpack.c.0.s8 %v1358
        %v1360 = vlaneseq
        %v1361 = vshrl.u32 %v1360, 7
        %v1362 = vsub.s32 %v1359, %v1361
        %v1363 = vrot.slane %v1356, %v1362
        %v1364 = vcombine.low %v1286, %v1293
        %v1366 = vunpack.c.l.s4 1983009808
        %v1367 = vunpack.c.0.s8 %v1366
        %v1368 = vlaneseq
        %v1369 = vshrl.u32 %v1368, 7
        %v1370 = vsub.s32 %v1367, %v1369
        %v1371 = vrot.slane %v1364, %v1370
        %v1372 = vcombine.low %v1296, %v1297
        %v1374 = vunpack.c.l.s4 1983009808
        %v1375 = vunpack.c.0.s8 %v1374
        %v1376 = vlaneseq
        %v1377 = vshrl.u32 %v1376, 7
        %v1378 = vsub.s32 %v1375, %v1377
        %v1379 = vrot.slane %v1372, %v1378
        %v1380 = vcombine.low %v1355, %v1363
        %v1382 = vunpack.c.l.s4 1934713408
        %v1383 = vunpack.c.0.s8 %v1382
        %v1384 = vlaneseq
        %v1385 = vshrl.u32 %v1384, 7
        %v1386 = vsub.s32 %v1383, %v1385
        %v1387 = vrot.slane %v1380, %v1386
        %v1388 = vcombine.low %v1371, %v1379
        %v1390 = vunpack.c.l.s4 1934713408
        %v1391 = vunpack.c.0.s8 %v1390
        %v1392 = vlaneseq
        %v1393 = vshrl.u32 %v1392, 7
        %v1394 = vsub.s32 %v1391, %v1393
        %v1395 = vrot.slane %v1388, %v1394
        %v1396 = vcombine.low %v1387, %v1395
        %v1397 = vcombine.high %v1387, %v1395
        %v1398 = vpack.c.bf16 %v1346, %v1346
        %v1399 = vpack.c.bf16 %v1347, %v1347
        %v1400 = vpack.c.bf16 %v1396, %v1396
        %v1401 = vpack.c.bf16 %v1397, %v1397
        %vm1402 = vcmask 130048
        %v1404 = vsel %vm1402, %v896, 0
        %v1407 = vsel %vm1402, %v1150, 0
        %1409 = vmatprep.subr.bf16.mxu0 0
        %1410 = vmatpush1.bf16.xpose.msra.mxu0 0
        %1411 = vmatprep.subr.bf16.mxu0 0
        %1412 = vmatpush1.bf16.xpose.msra.mxu0 0
        %1413 = vmatprep.subr.bf16.mxu0 0
        %1414 = vmatpush1.bf16.xpose.msra.mxu0 0
        %1415 = vmatprep.subr.bf16.mxu0 0
        %1416 = vmatpush1.bf16.xpose.msra.mxu0 0
        %1417 = vmatprep.subr.bf16.mxu0 0
        %1418 = vmatpush1.bf16.xpose.msra.mxu0 0
        %1419 = vmatprep.subr.bf16.mxu0 0
        %1420 = vmatpush1.bf16.xpose.msra.mxu0 0
        %1421 = vmatprep.subr.bf16.mxu0 0
        %1422 = vmatpush1.bf16.xpose.msra.mxu0 0
        %1423 = vmatprep.subr.bf16.mxu0 0
        %1424 = vmatpush1.bf16.xpose.msra.mxu0 %v1407
        %1425 = vmatprep.subr.bf16.mxu0 0
        %1426 = vmatpush2.bf16.xpose.msra.mxu0 0
        %1427 = vmatprep.subr.bf16.mxu0 0
        %1428 = vmatpush2.bf16.xpose.msra.mxu0 0
        %1429 = vmatprep.subr.bf16.mxu0 0
        %1430 = vmatpush2.bf16.xpose.msra.mxu0 0
        %1431 = vmatprep.subr.bf16.mxu0 0
        %1432 = vmatpush2.bf16.xpose.msra.mxu0 0
        %1433 = vmatprep.subr.bf16.mxu0 0
        %1434 = vmatpush2.bf16.xpose.msra.mxu0 0
        %1435 = vmatprep.subr.bf16.mxu0 0
        %1436 = vmatpush2.bf16.xpose.msra.mxu0 0
        %1437 = vmatprep.subr.bf16.mxu0 0
        %1438 = vmatpush2.bf16.xpose.msra.mxu0 0
        %1439 = vmatprep.subr.bf16.mxu0 0
        %1440 = vmatpush2.bf16.xpose.msra.mxu0 0
        %1441 = vmatprep.mubr.bf16.mxu0 0
        %1442 = vmatmul.mubr.bf16.gmra.mxu0 %v1404
        %v1443 = vpop.f32.mrf.mxu0
        %v1444 = vadd.f32 0.0, %v1443
        %v1445 = vpop.f32.mrf.mxu0
        %v1446 = vpop.f32.mrf.mxu0
        %v1447 = vpop.f32.mrf.mxu0
        %1448 = vdwg.mxu0
        %v1450 = vsel %vm1402, %v897, 0
        %v1453 = vsel %vm1402, %v1151, 0
        %1455 = vmatprep.subr.bf16.mxu0 0
        %1456 = vmatpush1.bf16.xpose.msra.mxu0 0
        %1457 = vmatprep.subr.bf16.mxu0 0
        %1458 = vmatpush1.bf16.xpose.msra.mxu0 0
        %1459 = vmatprep.subr.bf16.mxu0 0
        %1460 = vmatpush1.bf16.xpose.msra.mxu0 0
        %1461 = vmatprep.subr.bf16.mxu0 0
        %1462 = vmatpush1.bf16.xpose.msra.mxu0 0
        %1463 = vmatprep.subr.bf16.mxu0 0
        %1464 = vmatpush1.bf16.xpose.msra.mxu0 0
        %1465 = vmatprep.subr.bf16.mxu0 0
        %1466 = vmatpush1.bf16.xpose.msra.mxu0 0
        %1467 = vmatprep.subr.bf16.mxu0 0
        %1468 = vmatpush1.bf16.xpose.msra.mxu0 0
        %1469 = vmatprep.subr.bf16.mxu0 0
        %1470 = vmatpush1.bf16.xpose.msra.mxu0 %v1453
        %1471 = vmatprep.subr.bf16.mxu0 0
        %1472 = vmatpush2.bf16.xpose.msra.mxu0 0
        %1473 = vmatprep.subr.bf16.mxu0 0
        %1474 = vmatpush2.bf16.xpose.msra.mxu0 0
        %1475 = vmatprep.subr.bf16.mxu0 0
        %1476 = vmatpush2.bf16.xpose.msra.mxu0 0
        %1477 = vmatprep.subr.bf16.mxu0 0
        %1478 = vmatpush2.bf16.xpose.msra.mxu0 0
        %1479 = vmatprep.subr.bf16.mxu0 0
        %1480 = vmatpush2.bf16.xpose.msra.mxu0 0
        %1481 = vmatprep.subr.bf16.mxu0 0
        %1482 = vmatpush2.bf16.xpose.msra.mxu0 0
        %1483 = vmatprep.subr.bf16.mxu0 0
        %1484 = vmatpush2.bf16.xpose.msra.mxu0 0
        %1485 = vmatprep.subr.bf16.mxu0 0
        %1486 = vmatpush2.bf16.xpose.msra.mxu0 0
        %1487 = vmatprep.mubr.bf16.mxu0 0
        %1488 = vmatmul.mubr.bf16.gmra.mxu0 %v1450
        %v1489 = vpop.f32.mrf.mxu0
        %v1490 = vadd.f32 0.0, %v1489
        %v1491 = vpop.f32.mrf.mxu0
        %v1492 = vpop.f32.mrf.mxu0
        %v1493 = vpop.f32.mrf.mxu0
        %1494 = vdwg.mxu0
        %v1496 = vsel %vm1402, %v898, 0
        %v1499 = vsel %vm1402, %v1152, 0
        %1501 = vmatprep.subr.bf16.mxu0 0
        %1502 = vmatpush1.bf16.xpose.msra.mxu0 0
        %1503 = vmatprep.subr.bf16.mxu0 0
        %1504 = vmatpush1.bf16.xpose.msra.mxu0 0
        %1505 = vmatprep.subr.bf16.mxu0 0
        %1506 = vmatpush1.bf16.xpose.msra.mxu0 0
        %1507 = vmatprep.subr.bf16.mxu0 0
        %1508 = vmatpush1.bf16.xpose.msra.mxu0 0
        %1509 = vmatprep.subr.bf16.mxu0 0
        %1510 = vmatpush1.bf16.xpose.msra.mxu0 0
        %1511 = vmatprep.subr.bf16.mxu0 0
        %1512 = vmatpush1.bf16.xpose.msra.mxu0 0
        %1513 = vmatprep.subr.bf16.mxu0 0
        %1514 = vmatpush1.bf16.xpose.msra.mxu0 0
        %1515 = vmatprep.subr.bf16.mxu0 0
        %1516 = vmatpush1.bf16.xpose.msra.mxu0 %v1499
        %1517 = vmatprep.subr.bf16.mxu0 0
        %1518 = vmatpush2.bf16.xpose.msra.mxu0 0
        %1519 = vmatprep.subr.bf16.mxu0 0
        %1520 = vmatpush2.bf16.xpose.msra.mxu0 0
        %1521 = vmatprep.subr.bf16.mxu0 0
        %1522 = vmatpush2.bf16.xpose.msra.mxu0 0
        %1523 = vmatprep.subr.bf16.mxu0 0
        %1524 = vmatpush2.bf16.xpose.msra.mxu0 0
        %1525 = vmatprep.subr.bf16.mxu0 0
        %1526 = vmatpush2.bf16.xpose.msra.mxu0 0
        %1527 = vmatprep.subr.bf16.mxu0 0
        %1528 = vmatpush2.bf16.xpose.msra.mxu0 0
        %1529 = vmatprep.subr.bf16.mxu0 0
        %1530 = vmatpush2.bf16.xpose.msra.mxu0 0
        %1531 = vmatprep.subr.bf16.mxu0 0
        %1532 = vmatpush2.bf16.xpose.msra.mxu0 0
        %1533 = vmatprep.mubr.bf16.mxu0 0
        %1534 = vmatmul.mubr.bf16.gmra.mxu0 %v1496
        %v1535 = vpop.f32.mrf.mxu0
        %v1536 = vadd.f32 0.0, %v1535
        %v1537 = vpop.f32.mrf.mxu0
        %v1538 = vpop.f32.mrf.mxu0
        %v1539 = vpop.f32.mrf.mxu0
        %1540 = vdwg.mxu0
        %v1542 = vsel %vm1402, %v899, 0
        %v1545 = vsel %vm1402, %v1153, 0
        %1547 = vmatprep.subr.bf16.mxu0 0
        %1548 = vmatpush1.bf16.xpose.msra.mxu0 0
        %1549 = vmatprep.subr.bf16.mxu0 0
        %1550 = vmatpush1.bf16.xpose.msra.mxu0 0
        %1551 = vmatprep.subr.bf16.mxu0 0
        %1552 = vmatpush1.bf16.xpose.msra.mxu0 0
        %1553 = vmatprep.subr.bf16.mxu0 0
        %1554 = vmatpush1.bf16.xpose.msra.mxu0 0
        %1555 = vmatprep.subr.bf16.mxu0 0
        %1556 = vmatpush1.bf16.xpose.msra.mxu0 0
        %1557 = vmatprep.subr.bf16.mxu0 0
        %1558 = vmatpush1.bf16.xpose.msra.mxu0 0
        %1559 = vmatprep.subr.bf16.mxu0 0
        %1560 = vmatpush1.bf16.xpose.msra.mxu0 0
        %1561 = vmatprep.subr.bf16.mxu0 0
        %1562 = vmatpush1.bf16.xpose.msra.mxu0 %v1545
        %1563 = vmatprep.subr.bf16.mxu0 0
        %1564 = vmatpush2.bf16.xpose.msra.mxu0 0
        %1565 = vmatprep.subr.bf16.mxu0 0
        %1566 = vmatpush2.bf16.xpose.msra.mxu0 0
        %1567 = vmatprep.subr.bf16.mxu0 0
        %1568 = vmatpush2.bf16.xpose.msra.mxu0 0
        %1569 = vmatprep.subr.bf16.mxu0 0
        %1570 = vmatpush2.bf16.xpose.msra.mxu0 0
        %1571 = vmatprep.subr.bf16.mxu0 0
        %1572 = vmatpush2.bf16.xpose.msra.mxu0 0
        %1573 = vmatprep.subr.bf16.mxu0 0
        %1574 = vmatpush2.bf16.xpose.msra.mxu0 0
        %1575 = vmatprep.subr.bf16.mxu0 0
        %1576 = vmatpush2.bf16.xpose.msra.mxu0 0
        %1577 = vmatprep.subr.bf16.mxu0 0
        %1578 = vmatpush2.bf16.xpose.msra.mxu0 0
        %1579 = vmatprep.mubr.bf16.mxu0 0
        %1580 = vmatmul.mubr.bf16.gmra.mxu0 %v1542
        %v1581 = vpop.f32.mrf.mxu0
        %v1582 = vadd.f32 0.0, %v1581
        %v1583 = vpop.f32.mrf.mxu0
        %v1584 = vpop.f32.mrf.mxu0
        %v1585 = vpop.f32.mrf.mxu0
        %1586 = vdwg.mxu0
        %v1587 = vsel %vm653, 1, 0
        %vm1588 = vcmp.eq.s32.totalorder %v1587, 1
        %v1589 = vsel %vm1588, %v1444, -1e+30
        %v1590 = vsel %vm1588, %v1490, -1e+30
        %v1591 = vsel %vm1588, %v1536, -1e+30
        %v1592 = vsel %vm1588, %v1582, -1e+30
        %vm1593 = vcmask 64512
        %v1594 = vsel %vm1593, %v1589, -inf
        %1595 = vmax.xlane.f32.xlu0 %v1594
        %v1596 = vpop.xlane.xlu0 %1595
        %v1597 = vsel %vm1593, %v1590, -inf
        %1598 = vmax.xlane.f32.xlu0 %v1597
        %v1599 = vpop.xlane.xlu0 %1598
        %v1600 = vsel %vm1593, %v1591, -inf
        %1601 = vmax.xlane.f32.xlu0 %v1600
        %v1602 = vpop.xlane.xlu0 %1601
        %v1603 = vsel %vm1593, %v1592, -inf
        %1604 = vmax.xlane.f32.xlu0 %v1603
        %v1605 = vpop.xlane.xlu0 %1604
        %v1606 = vsub.f32 %v1589, %v1596
        %v1607 = vsub.f32 %v1590, %v1599
        %v1608 = vsub.f32 %v1591, %v1602
        %v1609 = vsub.f32 %v1592, %v1605
        %v1610 = vmul.f32 %v1606, 1.442695
        %v1611 = vpow.pop %v1610
        %v1612 = vmul.f32 %v1607, 1.442695
        %v1613 = vpow.pop %v1612
        %v1614 = vmul.f32 %v1608, 1.442695
        %v1615 = vpow.pop %v1614
        %v1616 = vmul.f32 %v1609, 1.442695
        %v1617 = vpow.pop %v1616
        %v1618 = vsel %vm1593, %v1611, 0.0
        %1619 = vadd.xlane.f32.xlu0 %v1618
        %v1620 = vpop.xlane.xlu0 %1619
        %v1621 = vsel %vm1593, %v1613, 0.0
        %1622 = vadd.xlane.f32.xlu0 %v1621
        %v1623 = vpop.xlane.xlu0 %1622
        %v1624 = vsel %vm1593, %v1615, 0.0
        %1625 = vadd.xlane.f32.xlu0 %v1624
        %v1626 = vpop.xlane.xlu0 %1625
        %v1627 = vsel %vm1593, %v1617, 0.0
        %1628 = vadd.xlane.f32.xlu0 %v1627
        %v1629 = vpop.xlane.xlu0 %1628
        %v1630 = vrcp.pop %v1620
        %v1631 = vrcp.pop %v1623
        %v1632 = vrcp.pop %v1626
        %v1633 = vrcp.pop %v1629
        %v1634 = vmul.f32 %v1611, %v1630
        %v1635 = vmul.f32 %v1613, %v1631
        %v1636 = vmul.f32 %v1615, %v1632
        %v1637 = vmul.f32 %v1617, %v1633
        %v1638 = vpack.c.bf16 %v1634, %v1634
        %v1639 = vpack.c.bf16 %v1635, %v1635
        %v1640 = vpack.c.bf16 %v1636, %v1636
        %v1641 = vpack.c.bf16 %v1637, %v1637
        %v1643 = vsel %vm1593, %v1638, 0
        %vm1645 = vcmask 1043456
        %v1647 = vsel %vm1645, %v1398, 0
        %1649 = vmatprep.subr.bf16.mxu0 0
        %1650 = vmatpush1.bf16.msra.mxu0 0
        %1651 = vmatprep.subr.bf16.mxu0 0
        %1652 = vmatpush1.bf16.msra.mxu0 0
        %1653 = vmatprep.subr.bf16.mxu0 0
        %1654 = vmatpush1.bf16.msra.mxu0 0
        %1655 = vmatprep.subr.bf16.mxu0 0
        %1656 = vmatpush1.bf16.msra.mxu0 0
        %1657 = vmatprep.subr.bf16.mxu0 0
        %1658 = vmatpush1.bf16.msra.mxu0 0
        %1659 = vmatprep.subr.bf16.mxu0 0
        %1660 = vmatpush1.bf16.msra.mxu0 0
        %1661 = vmatprep.subr.bf16.mxu0 0
        %1662 = vmatpush1.bf16.msra.mxu0 0
        %1663 = vmatprep.subr.bf16.mxu0 0
        %1664 = vmatpush1.bf16.msra.mxu0 %v1647
        %1665 = vmatprep.subr.bf16.mxu0 0
        %1666 = vmatpush2.bf16.msra.mxu0 0
        %1667 = vmatprep.subr.bf16.mxu0 0
        %1668 = vmatpush2.bf16.msra.mxu0 0
        %1669 = vmatprep.subr.bf16.mxu0 0
        %1670 = vmatpush2.bf16.msra.mxu0 0
        %1671 = vmatprep.subr.bf16.mxu0 0
        %1672 = vmatpush2.bf16.msra.mxu0 0
        %1673 = vmatprep.subr.bf16.mxu0 0
        %1674 = vmatpush2.bf16.msra.mxu0 0
        %1675 = vmatprep.subr.bf16.mxu0 0
        %1676 = vmatpush2.bf16.msra.mxu0 0
        %1677 = vmatprep.subr.bf16.mxu0 0
        %1678 = vmatpush2.bf16.msra.mxu0 0
        %1679 = vmatprep.subr.bf16.mxu0 0
        %1680 = vmatpush2.bf16.msra.mxu0 0
        %1681 = vmatprep.mubr.bf16.mxu0 0
        %1682 = vmatmul.mubr.bf16.gmra.mxu0 %v1643
        %v1683 = vpop.f32.mrf.mxu0
        %v1684 = vadd.f32 0.0, %v1683
        %v1685 = vpop.f32.mrf.mxu0
        %v1686 = vpop.f32.mrf.mxu0
        %v1687 = vpop.f32.mrf.mxu0
        %1688 = vdwg.mxu0
        %v1690 = vsel %vm1593, %v1639, 0
        %v1693 = vsel %vm1645, %v1399, 0
        %1695 = vmatprep.subr.bf16.mxu0 0
        %1696 = vmatpush1.bf16.msra.mxu0 0
        %1697 = vmatprep.subr.bf16.mxu0 0
        %1698 = vmatpush1.bf16.msra.mxu0 0
        %1699 = vmatprep.subr.bf16.mxu0 0
        %1700 = vmatpush1.bf16.msra.mxu0 0
        %1701 = vmatprep.subr.bf16.mxu0 0
        %1702 = vmatpush1.bf16.msra.mxu0 0
        %1703 = vmatprep.subr.bf16.mxu0 0
        %1704 = vmatpush1.bf16.msra.mxu0 0
        %1705 = vmatprep.subr.bf16.mxu0 0
        %1706 = vmatpush1.bf16.msra.mxu0 0
        %1707 = vmatprep.subr.bf16.mxu0 0
        %1708 = vmatpush1.bf16.msra.mxu0 0
        %1709 = vmatprep.subr.bf16.mxu0 0
        %1710 = vmatpush1.bf16.msra.mxu0 %v1693
        %1711 = vmatprep.subr.bf16.mxu0 0
        %1712 = vmatpush2.bf16.msra.mxu0 0
        %1713 = vmatprep.subr.bf16.mxu0 0
        %1714 = vmatpush2.bf16.msra.mxu0 0
        %1715 = vmatprep.subr.bf16.mxu0 0
        %1716 = vmatpush2.bf16.msra.mxu0 0
        %1717 = vmatprep.subr.bf16.mxu0 0
        %1718 = vmatpush2.bf16.msra.mxu0 0
        %1719 = vmatprep.subr.bf16.mxu0 0
        %1720 = vmatpush2.bf16.msra.mxu0 0
        %1721 = vmatprep.subr.bf16.mxu0 0
        %1722 = vmatpush2.bf16.msra.mxu0 0
        %1723 = vmatprep.subr.bf16.mxu0 0
        %1724 = vmatpush2.bf16.msra.mxu0 0
        %1725 = vmatprep.subr.bf16.mxu0 0
        %1726 = vmatpush2.bf16.msra.mxu0 0
        %1727 = vmatprep.mubr.bf16.mxu0 0
        %1728 = vmatmul.mubr.bf16.gmra.mxu0 %v1690
        %v1729 = vpop.f32.mrf.mxu0
        %v1730 = vadd.f32 0.0, %v1729
        %v1731 = vpop.f32.mrf.mxu0
        %v1732 = vpop.f32.mrf.mxu0
        %v1733 = vpop.f32.mrf.mxu0
        %1734 = vdwg.mxu0
        %v1736 = vsel %vm1593, %v1640, 0
        %v1739 = vsel %vm1645, %v1400, 0
        %1741 = vmatprep.subr.bf16.mxu0 0
        %1742 = vmatpush1.bf16.msra.mxu0 0
        %1743 = vmatprep.subr.bf16.mxu0 0
        %1744 = vmatpush1.bf16.msra.mxu0 0
        %1745 = vmatprep.subr.bf16.mxu0 0
        %1746 = vmatpush1.bf16.msra.mxu0 0
        %1747 = vmatprep.subr.bf16.mxu0 0
        %1748 = vmatpush1.bf16.msra.mxu0 0
        %1749 = vmatprep.subr.bf16.mxu0 0
        %1750 = vmatpush1.bf16.msra.mxu0 0
        %1751 = vmatprep.subr.bf16.mxu0 0
        %1752 = vmatpush1.bf16.msra.mxu0 0
        %1753 = vmatprep.subr.bf16.mxu0 0
        %1754 = vmatpush1.bf16.msra.mxu0 0
        %1755 = vmatprep.subr.bf16.mxu0 0
        %1756 = vmatpush1.bf16.msra.mxu0 %v1739
        %1757 = vmatprep.subr.bf16.mxu0 0
        %1758 = vmatpush2.bf16.msra.mxu0 0
        %1759 = vmatprep.subr.bf16.mxu0 0
        %1760 = vmatpush2.bf16.msra.mxu0 0
        %1761 = vmatprep.subr.bf16.mxu0 0
        %1762 = vmatpush2.bf16.msra.mxu0 0
        %1763 = vmatprep.subr.bf16.mxu0 0
        %1764 = vmatpush2.bf16.msra.mxu0 0
        %1765 = vmatprep.subr.bf16.mxu0 0
        %1766 = vmatpush2.bf16.msra.mxu0 0
        %1767 = vmatprep.subr.bf16.mxu0 0
        %1768 = vmatpush2.bf16.msra.mxu0 0
        %1769 = vmatprep.subr.bf16.mxu0 0
        %1770 = vmatpush2.bf16.msra.mxu0 0
        %1771 = vmatprep.subr.bf16.mxu0 0
        %1772 = vmatpush2.bf16.msra.mxu0 0
        %1773 = vmatprep.mubr.bf16.mxu0 0
        %1774 = vmatmul.mubr.bf16.gmra.mxu0 %v1736
        %v1775 = vpop.f32.mrf.mxu0
        %v1776 = vadd.f32 0.0, %v1775
        %v1777 = vpop.f32.mrf.mxu0
        %v1778 = vpop.f32.mrf.mxu0
        %v1779 = vpop.f32.mrf.mxu0
        %1780 = vdwg.mxu0
        %v1782 = vsel %vm1593, %v1641, 0
        %v1785 = vsel %vm1645, %v1401, 0
        %1787 = vmatprep.subr.bf16.mxu0 0
        %1788 = vmatpush1.bf16.msra.mxu0 0
        %1789 = vmatprep.subr.bf16.mxu0 0
        %1790 = vmatpush1.bf16.msra.mxu0 0
        %1791 = vmatprep.subr.bf16.mxu0 0
        %1792 = vmatpush1.bf16.msra.mxu0 0
        %1793 = vmatprep.subr.bf16.mxu0 0
        %1794 = vmatpush1.bf16.msra.mxu0 0
        %1795 = vmatprep.subr.bf16.mxu0 0
        %1796 = vmatpush1.bf16.msra.mxu0 0
        %1797 = vmatprep.subr.bf16.mxu0 0
        %1798 = vmatpush1.bf16.msra.mxu0 0
        %1799 = vmatprep.subr.bf16.mxu0 0
        %1800 = vmatpush1.bf16.msra.mxu0 0
        %1801 = vmatprep.subr.bf16.mxu0 0
        %1802 = vmatpush1.bf16.msra.mxu0 %v1785
        %1803 = vmatprep.subr.bf16.mxu0 0
        %1804 = vmatpush2.bf16.msra.mxu0 0
        %1805 = vmatprep.subr.bf16.mxu0 0
        %1806 = vmatpush2.bf16.msra.mxu0 0
        %1807 = vmatprep.subr.bf16.mxu0 0
        %1808 = vmatpush2.bf16.msra.mxu0 0
        %1809 = vmatprep.subr.bf16.mxu0 0
        %1810 = vmatpush2.bf16.msra.mxu0 0
        %1811 = vmatprep.subr.bf16.mxu0 0
        %1812 = vmatpush2.bf16.msra.mxu0 0
        %1813 = vmatprep.subr.bf16.mxu0 0
        %1814 = vmatpush2.bf16.msra.mxu0 0
        %1815 = vmatprep.subr.bf16.mxu0 0
        %1816 = vmatpush2.bf16.msra.mxu0 0
        %1817 = vmatprep.subr.bf16.mxu0 0
        %1818 = vmatpush2.bf16.msra.mxu0 0
        %1819 = vmatprep.mubr.bf16.mxu0 0
        %1820 = vmatmul.mubr.bf16.gmra.mxu0 %v1782
        %v1821 = vpop.f32.mrf.mxu0
        %v1822 = vadd.f32 0.0, %v1821
        %v1823 = vpop.f32.mrf.mxu0
        %v1824 = vpop.f32.mrf.mxu0
        %v1825 = vpop.f32.mrf.mxu0
        %1826 = vdwg.mxu0
        %v1827 = vcombine.high %v1684, 0.0
        %v1829 = vunpack.c.l.s4 1983009808
        %v1830 = vunpack.c.0.s8 %v1829
        %v1831 = vlaneseq
        %v1832 = vshrl.u32 %v1831, 7
        %v1833 = vsub.s32 %v1830, %v1832
        %v1834 = vrot.slane %v1684, %v1833
        %v1836 = vunpack.c.l.s4 1983009808
        %v1837 = vunpack.c.0.s8 %v1836
        %v1838 = vlaneseq
        %v1839 = vshrl.u32 %v1838, 7
        %v1840 = vsub.s32 %v1837, %v1839
        %v1841 = vrot.slane %v1827, %v1840
        %v1842 = vcombine.high %v1730, 0.0
        %v1844 = vunpack.c.l.s4 1983009808
        %v1845 = vunpack.c.0.s8 %v1844
        %v1846 = vlaneseq
        %v1847 = vshrl.u32 %v1846, 7
        %v1848 = vsub.s32 %v1845, %v1847
        %v1849 = vrot.slane %v1730, %v1848
        %v1851 = vunpack.c.l.s4 1983009808
        %v1852 = vunpack.c.0.s8 %v1851
        %v1853 = vlaneseq
        %v1854 = vshrl.u32 %v1853, 7
        %v1855 = vsub.s32 %v1852, %v1854
        %v1856 = vrot.slane %v1842, %v1855
        %v1857 = vcombine.low %v1834, %v1849
        %v1858 = vcombine.high %v1834, %v1849
        %v1860 = vunpack.c.l.s4 1934713408
        %v1861 = vunpack.c.0.s8 %v1860
        %v1862 = vlaneseq
        %v1863 = vshrl.u32 %v1862, 7
        %v1864 = vsub.s32 %v1861, %v1863
        %v1865 = vrot.slane %v1857, %v1864
        %v1867 = vunpack.c.l.s4 1934713408
        %v1868 = vunpack.c.0.s8 %v1867
        %v1869 = vlaneseq
        %v1870 = vshrl.u32 %v1869, 7
        %v1871 = vsub.s32 %v1868, %v1870
        %v1872 = vrot.slane %v1858, %v1871
        %v1873 = vcombine.low %v1841, %v1856
        %v1874 = vcombine.high %v1841, %v1856
        %v1876 = vunpack.c.l.s4 1934713408
        %v1877 = vunpack.c.0.s8 %v1876
        %v1878 = vlaneseq
        %v1879 = vshrl.u32 %v1878, 7
        %v1880 = vsub.s32 %v1877, %v1879
        %v1881 = vrot.slane %v1873, %v1880
        %v1883 = vunpack.c.l.s4 1934713408
        %v1884 = vunpack.c.0.s8 %v1883
        %v1885 = vlaneseq
        %v1886 = vshrl.u32 %v1885, 7
        %v1887 = vsub.s32 %v1884, %v1886
        %v1888 = vrot.slane %v1874, %v1887
        %v1889 = vcombine.high %v1865, 0.0
        %v1890 = vcombine.high %v1872, 0.0
        %v1891 = vcombine.high %v1881, 0.0
        %v1892 = vcombine.high %v1888, 0.0
        %v1893 = vcombine.high %v1776, 0.0
        %v1895 = vunpack.c.l.s4 1983009808
        %v1896 = vunpack.c.0.s8 %v1895
        %v1897 = vlaneseq
        %v1898 = vshrl.u32 %v1897, 7
        %v1899 = vsub.s32 %v1896, %v1898
        %v1900 = vrot.slane %v1776, %v1899
        %v1902 = vunpack.c.l.s4 1983009808
        %v1903 = vunpack.c.0.s8 %v1902
        %v1904 = vlaneseq
        %v1905 = vshrl.u32 %v1904, 7
        %v1906 = vsub.s32 %v1903, %v1905
        %v1907 = vrot.slane %v1893, %v1906
        %v1908 = vcombine.high %v1822, 0.0
        %v1910 = vunpack.c.l.s4 1983009808
        %v1911 = vunpack.c.0.s8 %v1910
        %v1912 = vlaneseq
        %v1913 = vshrl.u32 %v1912, 7
        %v1914 = vsub.s32 %v1911, %v1913
        %v1915 = vrot.slane %v1822, %v1914
        %v1917 = vunpack.c.l.s4 1983009808
        %v1918 = vunpack.c.0.s8 %v1917
        %v1919 = vlaneseq
        %v1920 = vshrl.u32 %v1919, 7
        %v1921 = vsub.s32 %v1918, %v1920
        %v1922 = vrot.slane %v1908, %v1921
        %v1923 = vcombine.low %v1900, %v1915
        %v1924 = vcombine.high %v1900, %v1915
        %v1926 = vunpack.c.l.s4 1934713408
        %v1927 = vunpack.c.0.s8 %v1926
        %v1928 = vlaneseq
        %v1929 = vshrl.u32 %v1928, 7
        %v1930 = vsub.s32 %v1927, %v1929
        %v1931 = vrot.slane %v1923, %v1930
        %v1933 = vunpack.c.l.s4 1934713408
        %v1934 = vunpack.c.0.s8 %v1933
        %v1935 = vlaneseq
        %v1936 = vshrl.u32 %v1935, 7
        %v1937 = vsub.s32 %v1934, %v1936
        %v1938 = vrot.slane %v1924, %v1937
        %v1939 = vcombine.low %v1907, %v1922
        %v1940 = vcombine.high %v1907, %v1922
        %v1942 = vunpack.c.l.s4 1934713408
        %v1943 = vunpack.c.0.s8 %v1942
        %v1944 = vlaneseq
        %v1945 = vshrl.u32 %v1944, 7
        %v1946 = vsub.s32 %v1943, %v1945
        %v1947 = vrot.slane %v1939, %v1946
        %v1949 = vunpack.c.l.s4 1934713408
        %v1950 = vunpack.c.0.s8 %v1949
        %v1951 = vlaneseq
        %v1952 = vshrl.u32 %v1951, 7
        %v1953 = vsub.s32 %v1950, %v1952
        %v1954 = vrot.slane %v1940, %v1953
        %v1955 = vcombine.high %v1931, 0.0
        %v1956 = vcombine.high %v1938, 0.0
        %v1957 = vcombine.high %v1947, 0.0
        %v1958 = vcombine.high %v1954, 0.0
        %v1959 = vcombine.low %v1865, %v1872
        %v1961 = vunpack.c.l.s4 1983009808
        %v1962 = vunpack.c.0.s8 %v1961
        %v1963 = vlaneseq
        %v1964 = vshrl.u32 %v1963, 7
        %v1965 = vsub.s32 %v1962, %v1964
        %v1966 = vrot.slane %v1959, %v1965
        %v1967 = vcombine.low %v1889, %v1890
        %v1969 = vunpack.c.l.s4 1983009808
        %v1970 = vunpack.c.0.s8 %v1969
        %v1971 = vlaneseq
        %v1972 = vshrl.u32 %v1971, 7
        %v1973 = vsub.s32 %v1970, %v1972
        %v1974 = vrot.slane %v1967, %v1973
        %v1975 = vcombine.low %v1881, %v1888
        %v1977 = vunpack.c.l.s4 1983009808
        %v1978 = vunpack.c.0.s8 %v1977
        %v1979 = vlaneseq
        %v1980 = vshrl.u32 %v1979, 7
        %v1981 = vsub.s32 %v1978, %v1980
        %v1982 = vrot.slane %v1975, %v1981
        %v1983 = vcombine.low %v1891, %v1892
        %v1985 = vunpack.c.l.s4 1983009808
        %v1986 = vunpack.c.0.s8 %v1985
        %v1987 = vlaneseq
        %v1988 = vshrl.u32 %v1987, 7
        %v1989 = vsub.s32 %v1986, %v1988
        %v1990 = vrot.slane %v1983, %v1989
        %v1991 = vcombine.low %v1966, %v1974
        %v1993 = vunpack.c.l.s4 1934713408
        %v1994 = vunpack.c.0.s8 %v1993
        %v1995 = vlaneseq
        %v1996 = vshrl.u32 %v1995, 7
        %v1997 = vsub.s32 %v1994, %v1996
        %v1998 = vrot.slane %v1991, %v1997
        %v1999 = vcombine.low %v1982, %v1990
        %v2001 = vunpack.c.l.s4 1934713408
        %v2002 = vunpack.c.0.s8 %v2001
        %v2003 = vlaneseq
        %v2004 = vshrl.u32 %v2003, 7
        %v2005 = vsub.s32 %v2002, %v2004
        %v2006 = vrot.slane %v1999, %v2005
        %v2007 = vcombine.low %v1998, %v2006
        %v2008 = vcombine.high %v1998, %v2006
        %v2009 = vcombine.low %v1931, %v1938
        %v2011 = vunpack.c.l.s4 1983009808
        %v2012 = vunpack.c.0.s8 %v2011
        %v2013 = vlaneseq
        %v2014 = vshrl.u32 %v2013, 7
        %v2015 = vsub.s32 %v2012, %v2014
        %v2016 = vrot.slane %v2009, %v2015
        %v2017 = vcombine.low %v1955, %v1956
        %v2019 = vunpack.c.l.s4 1983009808
        %v2020 = vunpack.c.0.s8 %v2019
        %v2021 = vlaneseq
        %v2022 = vshrl.u32 %v2021, 7
        %v2023 = vsub.s32 %v2020, %v2022
        %v2024 = vrot.slane %v2017, %v2023
        %v2025 = vcombine.low %v1947, %v1954
        %v2027 = vunpack.c.l.s4 1983009808
        %v2028 = vunpack.c.0.s8 %v2027
        %v2029 = vlaneseq
        %v2030 = vshrl.u32 %v2029, 7
        %v2031 = vsub.s32 %v2028, %v2030
        %v2032 = vrot.slane %v2025, %v2031
        %v2033 = vcombine.low %v1957, %v1958
        %v2035 = vunpack.c.l.s4 1983009808
        %v2036 = vunpack.c.0.s8 %v2035
        %v2037 = vlaneseq
        %v2038 = vshrl.u32 %v2037, 7
        %v2039 = vsub.s32 %v2036, %v2038
        %v2040 = vrot.slane %v2033, %v2039
        %v2041 = vcombine.low %v2016, %v2024
        %v2043 = vunpack.c.l.s4 1934713408
        %v2044 = vunpack.c.0.s8 %v2043
        %v2045 = vlaneseq
        %v2046 = vshrl.u32 %v2045, 7
        %v2047 = vsub.s32 %v2044, %v2046
        %v2048 = vrot.slane %v2041, %v2047
        %v2049 = vcombine.low %v2032, %v2040
        %v2051 = vunpack.c.l.s4 1934713408
        %v2052 = vunpack.c.0.s8 %v2051
        %v2053 = vlaneseq
        %v2054 = vshrl.u32 %v2053, 7
        %v2055 = vsub.s32 %v2052, %v2054
        %v2056 = vrot.slane %v2049, %v2055
        %v2057 = vcombine.low %v2048, %v2056
        %v2058 = vcombine.high %v2048, %v2056
        %2061 = vrot.lane.b32.xlu0 %v2008, 16
        %v2062 = vpop.permute.xlu0 %2061
        %2063 = vrot.lane.b32.xlu0 %v2058, 16
        %v2064 = vpop.permute.xlu0 %2063
        %v2067 = vsel %vm1402, %v2007, %v2062
        %v2068 = vsel %vm1402, %v2057, %v2064
        %v2069 = vld [vmem:[%s482] sm:$0xf]
        %v2070 = vld [vmem:[%s482 + $0x4] sm:$0xf]
        %v2071 = vld [vmem:[%s482 + $0x8] sm:$0xf]
        %v2072 = vld [vmem:[%s482 + $0xc] sm:$0xf]
        %v2073 = vpack.c.bf16 %v2068, %v2067
        %v2074 = vlaneseq
        %v2075 = vshrl.u32 %v2074, 7
        %v2076 = vsub.s32 1, %v2075
        %v2077 = vrot.slane %v581, %v2076
        %v2082 = vunpack.c.l.b16 %v2069
        %v2083 = vunpack.c.l.b16 %v2070
        %v2084 = vunpack.c.l.b16 %v2071
        %v2085 = vunpack.c.l.b16 %v2072
        %v2086 = vpack.c.b16 %v2083, %v2082
        %v2087 = vpack.c.b16 %v2085, %v2084
        %v2091 = vsel %vm604, %v2073, 0
        %2093 = vmatprep.subr.bf16.mxu0 0
        %2094 = vmatpush1.bf16.msra.mxu0 0
        %2095 = vmatprep.subr.bf16.mxu0 0
        %2096 = vmatpush1.bf16.msra.mxu0 0
        %2097 = vmatprep.subr.bf16.mxu0 0
        %2098 = vmatpush1.bf16.msra.mxu0 0
        %2099 = vmatprep.subr.bf16.mxu0 0
        %2100 = vmatpush1.bf16.msra.mxu0 0
        %2101 = vmatprep.subr.bf16.mxu0 0
        %2102 = vmatpush1.bf16.msra.mxu0 0
        %2103 = vmatprep.subr.bf16.mxu0 0
        %2104 = vmatpush1.bf16.msra.mxu0 0
        %2105 = vmatprep.subr.bf16.mxu0 0
        %2106 = vmatpush1.bf16.msra.mxu0 %v2087
        %2107 = vmatprep.subr.bf16.mxu0 0
        %2108 = vmatpush1.bf16.msra.mxu0 %v2086
        %2109 = vmatprep.subr.bf16.mxu0 0
        %2110 = vmatpush2.bf16.msra.mxu0 0
        %2111 = vmatprep.subr.bf16.mxu0 0
        %2112 = vmatpush2.bf16.msra.mxu0 0
        %2113 = vmatprep.subr.bf16.mxu0 0
        %2114 = vmatpush2.bf16.msra.mxu0 0
        %2115 = vmatprep.subr.bf16.mxu0 0
        %2116 = vmatpush2.bf16.msra.mxu0 0
        %2117 = vmatprep.subr.bf16.mxu0 0
        %2118 = vmatpush2.bf16.msra.mxu0 0
        %2119 = vmatprep.subr.bf16.mxu0 0
        %2120 = vmatpush2.bf16.msra.mxu0 0
        %2121 = vmatprep.subr.bf16.mxu0 0
        %2122 = vmatpush2.bf16.msra.mxu0 0
        %2123 = vmatprep.subr.bf16.mxu0 0
        %2124 = vmatpush2.bf16.msra.mxu0 0
        %2125 = vmatprep.mubr.bf16.mxu0 0
        %2126 = vmatmul.mubr.bf16.gmra.mxu0 %v2091
        %v2127 = vpop.f32.mrf.mxu0
        %v2128 = vadd.f32 %v2077, %v2127
        %v2129 = vpop.f32.mrf.mxu0
        %v2130 = vpop.f32.mrf.mxu0
        %v2131 = vadd.f32 %v2077, %v2130
        %v2132 = vpop.f32.mrf.mxu0
        %2133 = vdwg.mxu0
        %v2134 = vadd.f32 %v523, %v2128
        %v2135 = vadd.f32 %v524, %v2131
        %v2136 = vsel %vm604, %v2134, 0.0
        %2137 = vadd.xlane.f32.xlu0 %v2136
        %v2138 = vpop.xlane.xlu0 %2137
        %v2139 = vsel %vm604, %v2135, 0.0
        %2140 = vadd.xlane.f32.xlu0 %v2139
        %v2141 = vpop.xlane.xlu0 %2140
        %v2142 = vrcp.pop 32.0
        %v2143 = vmul.f32 %v2138, %v2142
        %v2144 = vmul.f32 %v2141, %v2142
        %v2145 = vsub.f32 %v2134, %v2143
        %v2146 = vsub.f32 %v2135, %v2144
        %v2147 = vmul.f32 %v2145, %v2145
        %v2148 = vmul.f32 %v2146, %v2146
        %v2149 = vsel %vm604, %v2147, 0.0
        %2150 = vadd.xlane.f32.xlu0 %v2149
        %v2151 = vpop.xlane.xlu0 %2150
        %v2152 = vsel %vm604, %v2148, 0.0
        %2153 = vadd.xlane.f32.xlu0 %v2152
        %v2154 = vpop.xlane.xlu0 %2153
        %v2155 = vmul.f32 %v2151, %v2142
        %v2156 = vmul.f32 %v2154, %v2142
        %v2157 = vadd.f32 %v2155, 1e-05
        %v2158 = vadd.f32 %v2156, 1e-05
        %v2159 = vrsqrt.pop %v2157
        %v2160 = vrsqrt.pop %v2158
        %v2161 = vmul.f32 %v2145, %v2159
        %v2162 = vmul.f32 %v2146, %v2160
        %v2163 = vlaneseq
        %v2164 = vshrl.u32 %v2163, 7
        %v2165 = vsub.s32 0, %v2164
        %v2166 = vrot.slane %v582, %v2165
        %v2167 = vmul.f32 %v2161, %v2166
        %v2168 = vmul.f32 %v2162, %v2166
        %v2169 = vlaneseq
        %v2170 = vshrl.u32 %v2169, 7
        %v2171 = vsub.s32 3, %v2170
        %v2172 = vrot.slane %v582, %v2171
        %v2173 = vadd.f32 %v2167, %v2172
        %v2174 = vadd.f32 %v2168, %v2172
        %v2175 = vld [vmem:[%s487] sm:$0xf]
        %v2176 = vld [vmem:[%s487 + $0x4] sm:$0xf]
        %v2177 = vld [vmem:[%s487 + $0x8] sm:$0xf]
        %v2178 = vld [vmem:[%s487 + $0xc] sm:$0xf]
        %v2179 = vpack.c.bf16 %v2174, %v2173
        %v2180 = vlaneseq
        %v2181 = vshrl.u32 %v2180, 7
        %v2182 = vsub.s32 2, %v2181
        %v2183 = vrot.slane %v581, %v2182
        %v2188 = vunpack.c.l.b16 %v2175
        %v2189 = vunpack.c.l.b16 %v2176
        %v2190 = vunpack.c.l.b16 %v2177
        %v2191 = vunpack.c.l.b16 %v2178
        %v2192 = vpack.c.b16 %v2189, %v2188
        %v2193 = vpack.c.b16 %v2191, %v2190
        %v2197 = vsel %vm604, %v2179, 0
        %2199 = vmatprep.subr.bf16.mxu0 0
        %2200 = vmatpush1.bf16.msra.mxu0 0
        %2201 = vmatprep.subr.bf16.mxu0 0
        %2202 = vmatpush1.bf16.msra.mxu0 0
        %2203 = vmatprep.subr.bf16.mxu0 0
        %2204 = vmatpush1.bf16.msra.mxu0 0
        %2205 = vmatprep.subr.bf16.mxu0 0
        %2206 = vmatpush1.bf16.msra.mxu0 0
        %2207 = vmatprep.subr.bf16.mxu0 0
        %2208 = vmatpush1.bf16.msra.mxu0 0
        %2209 = vmatprep.subr.bf16.mxu0 0
        %2210 = vmatpush1.bf16.msra.mxu0 0
        %2211 = vmatprep.subr.bf16.mxu0 0
        %2212 = vmatpush1.bf16.msra.mxu0 %v2193
        %2213 = vmatprep.subr.bf16.mxu0 0
        %2214 = vmatpush1.bf16.msra.mxu0 %v2192
        %2215 = vmatprep.subr.bf16.mxu0 0
        %2216 = vmatpush2.bf16.msra.mxu0 0
        %2217 = vmatprep.subr.bf16.mxu0 0
        %2218 = vmatpush2.bf16.msra.mxu0 0
        %2219 = vmatprep.subr.bf16.mxu0 0
        %2220 = vmatpush2.bf16.msra.mxu0 0
        %2221 = vmatprep.subr.bf16.mxu0 0
        %2222 = vmatpush2.bf16.msra.mxu0 0
        %2223 = vmatprep.subr.bf16.mxu0 0
        %2224 = vmatpush2.bf16.msra.mxu0 0
        %2225 = vmatprep.subr.bf16.mxu0 0
        %2226 = vmatpush2.bf16.msra.mxu0 0
        %2227 = vmatprep.subr.bf16.mxu0 0
        %2228 = vmatpush2.bf16.msra.mxu0 0
        %2229 = vmatprep.subr.bf16.mxu0 0
        %2230 = vmatpush2.bf16.msra.mxu0 0
        %2231 = vmatprep.mubr.bf16.mxu0 0
        %2232 = vmatmul.mubr.bf16.gmra.mxu0 %v2197
        %v2233 = vpop.f32.mrf.mxu0
        %v2234 = vadd.f32 %v2183, %v2233
        %v2235 = vpop.f32.mrf.mxu0
        %v2236 = vpop.f32.mrf.mxu0
        %v2237 = vadd.f32 %v2183, %v2236
        %v2238 = vpop.f32.mrf.mxu0
        %2239 = vdwg.mxu0
        %v2240 = vld [vmem:[%s492] sm:$0xf]
        %v2241 = vld [vmem:[%s492 + $0x4] sm:$0xf]
        %v2242 = vld [vmem:[%s492 + $0x8] sm:$0xf]
        %v2243 = vld [vmem:[%s492 + $0xc] sm:$0xf]
        %v2244 = vcombine.low %v540, %v548
        %v2245 = vcombine.low %v547, %v549
        %v2247 = vunpack.c.l.s4 1983009808
        %v2248 = vunpack.c.0.s8 %v2247
        %v2249 = vlaneseq
        %v2250 = vshrl.u32 %v2249, 7
        %v2251 = vsub.s32 %v2248, %v2250
        %v2252 = vrot.slane %v2244, %v2251
        %v2254 = vunpack.c.l.s4 1983009808
        %v2255 = vunpack.c.0.s8 %v2254
        %v2256 = vlaneseq
        %v2257 = vshrl.u32 %v2256, 7
        %v2258 = vsub.s32 %v2255, %v2257
        %v2259 = vrot.slane %v2245, %v2258
        %v2260 = vcombine.low %v2252, %v2259
        %v2261 = vcombine.low %v556, %v564
        %v2262 = vcombine.low %v572, %v571
        %v2264 = vunpack.c.l.s4 1983009808
        %v2265 = vunpack.c.0.s8 %v2264
        %v2266 = vlaneseq
        %v2267 = vshrl.u32 %v2266, 7
        %v2268 = vsub.s32 %v2265, %v2267
        %v2269 = vrot.slane %v2261, %v2268
        %v2271 = vunpack.c.l.s4 1983009808
        %v2272 = vunpack.c.0.s8 %v2271
        %v2273 = vlaneseq
        %v2274 = vshrl.u32 %v2273, 7
        %v2275 = vsub.s32 %v2272, %v2274
        %v2276 = vrot.slane %v2262, %v2275
        %v2277 = vcombine.low %v2269, %v2276
        %v2278 = vcombine.low %v573, %v580
        %v2280 = vunpack.c.l.s4 1983009808
        %v2281 = vunpack.c.0.s8 %v2280
        %v2282 = vlaneseq
        %v2283 = vshrl.u32 %v2282, 7
        %v2284 = vsub.s32 %v2281, %v2283
        %v2285 = vrot.slane %v2278, %v2284
        %v2289 = vpack.c.bf16 %v2277, %v2260
        %v2290 = vpack.c.bf16 %v2285, %v2285
        %v2291 = vlaneseq
        %v2292 = vshrl.u32 %v2291, 7
        %v2293 = vsub.s32 3, %v2292
        %v2294 = vrot.slane %v581, %v2293
        %v2299 = vunpack.c.l.b16 %v2240
        %v2300 = vunpack.c.l.b16 %v2241
        %v2301 = vunpack.c.l.b16 %v2242
        %v2302 = vunpack.c.l.b16 %v2243
        %v2303 = vpack.c.b16 %v2300, %v2299
        %v2304 = vpack.c.b16 %v2302, %v2301
        %v2308 = vsel %vm604, %v2289, 0
        %v2311 = vsel %vm604, %v2290, 0
        %2313 = vmatprep.subr.bf16.mxu0 0
        %2314 = vmatpush1.bf16.msra.mxu0 0
        %2315 = vmatprep.subr.bf16.mxu0 0
        %2316 = vmatpush1.bf16.msra.mxu0 0
        %2317 = vmatprep.subr.bf16.mxu0 0
        %2318 = vmatpush1.bf16.msra.mxu0 0
        %2319 = vmatprep.subr.bf16.mxu0 0
        %2320 = vmatpush1.bf16.msra.mxu0 0
        %2321 = vmatprep.subr.bf16.mxu0 0
        %2322 = vmatpush1.bf16.msra.mxu0 0
        %2323 = vmatprep.subr.bf16.mxu0 0
        %2324 = vmatpush1.bf16.msra.mxu0 0
        %2325 = vmatprep.subr.bf16.mxu0 0
        %2326 = vmatpush1.bf16.msra.mxu0 %v2304
        %2327 = vmatprep.subr.bf16.mxu0 0
        %2328 = vmatpush1.bf16.msra.mxu0 %v2303
        %2329 = vmatprep.subr.bf16.mxu0 0
        %2330 = vmatpush2.bf16.msra.mxu0 0
        %2331 = vmatprep.subr.bf16.mxu0 0
        %2332 = vmatpush2.bf16.msra.mxu0 0
        %2333 = vmatprep.subr.bf16.mxu0 0
        %2334 = vmatpush2.bf16.msra.mxu0 0
        %2335 = vmatprep.subr.bf16.mxu0 0
        %2336 = vmatpush2.bf16.msra.mxu0 0
        %2337 = vmatprep.subr.bf16.mxu0 0
        %2338 = vmatpush2.bf16.msra.mxu0 0
        %2339 = vmatprep.subr.bf16.mxu0 0
        %2340 = vmatpush2.bf16.msra.mxu0 0
        %2341 = vmatprep.subr.bf16.mxu0 0
        %2342 = vmatpush2.bf16.msra.mxu0 0
        %2343 = vmatprep.subr.bf16.mxu0 0
        %2344 = vmatpush2.bf16.msra.mxu0 0
        %2345 = vmatprep.mubr.bf16.mxu0 0
        %2346 = vmatmul.mubr.bf16.gmra.mxu0 %v2308
        %v2347 = vpop.f32.mrf.mxu0
        %v2348 = vadd.f32 %v2294, %v2347
        %v2349 = vpop.f32.mrf.mxu0
        %v2350 = vpop.f32.mrf.mxu0
        %v2351 = vadd.f32 %v2294, %v2350
        %v2352 = vpop.f32.mrf.mxu0
        %2353 = vmatprep.mubr.bf16.mxu0 0
        %2354 = vmatmul.mubr.bf16.gmra.mxu0 %v2311
        %v2355 = vpop.f32.mrf.mxu0
        %v2356 = vadd.f32 %v2294, %v2355
        %v2357 = vpop.f32.mrf.mxu0
        %v2358 = vpop.f32.mrf.mxu0
        %v2359 = vpop.f32.mrf.mxu0
        %2360 = vdwg.mxu0
        %v2361 = vld [vmem:[%s2] sm:$0x1]
        %v2362 = vld [vmem:[%s2 + $0x1] sm:$0x1]
        %vm2363 = vcmp.ne.f32.partialorder %v2361, 0.0
        %vm2364 = vcmp.ne.f32.partialorder %v2362, 0.0
        %v2365 = vsel %vm2363, 1, 0
        %v2366 = vsel %vm2364, 1, 0
        %vm2367 = vcmp.eq.s32.totalorder %v2365, 1
        %vm2368 = vcmp.eq.s32.totalorder %v2366, 1
        %v2369 = vmul.f32 %v2234, 0.25
        %v2370 = vmul.f32 %v2237, 0.25
        %2373 = vrot.lane.b32.xlu0 %v2369, 112
        %v2374 = vpop.permute.xlu0 %2373
        %2375 = vrot.lane.b32.xlu0 %v2370, 112
        %v2376 = vpop.permute.xlu0 %2375
        %v2379 = vcombine.high %v2369, 0.0
        %v2381 = vunpack.c.l.s4 1983009808
        %v2382 = vunpack.c.0.s8 %v2381
        %v2383 = vlaneseq
        %v2384 = vshrl.u32 %v2383, 7
        %v2385 = vsub.s32 %v2382, %v2384
        %v2386 = vrot.slane %v2369, %v2385
        %v2388 = vunpack.c.l.s4 1983009808
        %v2389 = vunpack.c.0.s8 %v2388
        %v2390 = vlaneseq
        %v2391 = vshrl.u32 %v2390, 7
        %v2392 = vsub.s32 %v2389, %v2391
        %v2393 = vrot.slane %v2379, %v2392
        %v2394 = vcombine.high %v2374, 0.0
        %v2396 = vunpack.c.l.s4 1983009808
        %v2397 = vunpack.c.0.s8 %v2396
        %v2398 = vlaneseq
        %v2399 = vshrl.u32 %v2398, 7
        %v2400 = vsub.s32 %v2397, %v2399
        %v2401 = vrot.slane %v2374, %v2400
        %v2403 = vunpack.c.l.s4 1983009808
        %v2404 = vunpack.c.0.s8 %v2403
        %v2405 = vlaneseq
        %v2406 = vshrl.u32 %v2405, 7
        %v2407 = vsub.s32 %v2404, %v2406
        %v2408 = vrot.slane %v2394, %v2407
        %v2409 = vcombine.low %v2386, %v2401
        %v2410 = vcombine.high %v2386, %v2401
        %v2412 = vunpack.c.l.s4 1934713408
        %v2413 = vunpack.c.0.s8 %v2412
        %v2414 = vlaneseq
        %v2415 = vshrl.u32 %v2414, 7
        %v2416 = vsub.s32 %v2413, %v2415
        %v2417 = vrot.slane %v2409, %v2416
        %v2419 = vunpack.c.l.s4 1934713408
        %v2420 = vunpack.c.0.s8 %v2419
        %v2421 = vlaneseq
        %v2422 = vshrl.u32 %v2421, 7
        %v2423 = vsub.s32 %v2420, %v2422
        %v2424 = vrot.slane %v2410, %v2423
        %v2425 = vcombine.low %v2393, %v2408
        %v2426 = vcombine.high %v2393, %v2408
        %v2428 = vunpack.c.l.s4 1934713408
        %v2429 = vunpack.c.0.s8 %v2428
        %v2430 = vlaneseq
        %v2431 = vshrl.u32 %v2430, 7
        %v2432 = vsub.s32 %v2429, %v2431
        %v2433 = vrot.slane %v2425, %v2432
        %v2435 = vunpack.c.l.s4 1934713408
        %v2436 = vunpack.c.0.s8 %v2435
        %v2437 = vlaneseq
        %v2438 = vshrl.u32 %v2437, 7
        %v2439 = vsub.s32 %v2436, %v2438
        %v2440 = vrot.slane %v2426, %v2439
        %v2441 = vcombine.high %v2417, 0.0
        %v2442 = vcombine.high %v2424, 0.0
        %v2443 = vcombine.high %v2433, 0.0
        %v2444 = vcombine.high %v2440, 0.0
        %v2445 = vcombine.high %v2370, 0.0
        %v2447 = vunpack.c.l.s4 1983009808
        %v2448 = vunpack.c.0.s8 %v2447
        %v2449 = vlaneseq
        %v2450 = vshrl.u32 %v2449, 7
        %v2451 = vsub.s32 %v2448, %v2450
        %v2452 = vrot.slane %v2370, %v2451
        %v2454 = vunpack.c.l.s4 1983009808
        %v2455 = vunpack.c.0.s8 %v2454
        %v2456 = vlaneseq
        %v2457 = vshrl.u32 %v2456, 7
        %v2458 = vsub.s32 %v2455, %v2457
        %v2459 = vrot.slane %v2445, %v2458
        %v2460 = vcombine.high %v2376, 0.0
        %v2462 = vunpack.c.l.s4 1983009808
        %v2463 = vunpack.c.0.s8 %v2462
        %v2464 = vlaneseq
        %v2465 = vshrl.u32 %v2464, 7
        %v2466 = vsub.s32 %v2463, %v2465
        %v2467 = vrot.slane %v2376, %v2466
        %v2469 = vunpack.c.l.s4 1983009808
        %v2470 = vunpack.c.0.s8 %v2469
        %v2471 = vlaneseq
        %v2472 = vshrl.u32 %v2471, 7
        %v2473 = vsub.s32 %v2470, %v2472
        %v2474 = vrot.slane %v2460, %v2473
        %v2475 = vcombine.low %v2452, %v2467
        %v2476 = vcombine.high %v2452, %v2467
        %v2478 = vunpack.c.l.s4 1934713408
        %v2479 = vunpack.c.0.s8 %v2478
        %v2480 = vlaneseq
        %v2481 = vshrl.u32 %v2480, 7
        %v2482 = vsub.s32 %v2479, %v2481
        %v2483 = vrot.slane %v2475, %v2482
        %v2485 = vunpack.c.l.s4 1934713408
        %v2486 = vunpack.c.0.s8 %v2485
        %v2487 = vlaneseq
        %v2488 = vshrl.u32 %v2487, 7
        %v2489 = vsub.s32 %v2486, %v2488
        %v2490 = vrot.slane %v2476, %v2489
        %v2491 = vcombine.low %v2459, %v2474
        %v2492 = vcombine.high %v2459, %v2474
        %v2494 = vunpack.c.l.s4 1934713408
        %v2495 = vunpack.c.0.s8 %v2494
        %v2496 = vlaneseq
        %v2497 = vshrl.u32 %v2496, 7
        %v2498 = vsub.s32 %v2495, %v2497
        %v2499 = vrot.slane %v2491, %v2498
        %v2501 = vunpack.c.l.s4 1934713408
        %v2502 = vunpack.c.0.s8 %v2501
        %v2503 = vlaneseq
        %v2504 = vshrl.u32 %v2503, 7
        %v2505 = vsub.s32 %v2502, %v2504
        %v2506 = vrot.slane %v2492, %v2505
        %v2507 = vcombine.high %v2483, 0.0
        %v2508 = vcombine.high %v2490, 0.0
        %v2509 = vcombine.high %v2499, 0.0
        %v2510 = vcombine.high %v2506, 0.0
        %v2511 = vcombine.low %v2417, %v2424
        %v2513 = vunpack.c.l.s4 1983009808
        %v2514 = vunpack.c.0.s8 %v2513
        %v2515 = vlaneseq
        %v2516 = vshrl.u32 %v2515, 7
        %v2517 = vsub.s32 %v2514, %v2516
        %v2518 = vrot.slane %v2511, %v2517
        %v2519 = vcombine.low %v2441, %v2442
        %v2521 = vunpack.c.l.s4 1983009808
        %v2522 = vunpack.c.0.s8 %v2521
        %v2523 = vlaneseq
        %v2524 = vshrl.u32 %v2523, 7
        %v2525 = vsub.s32 %v2522, %v2524
        %v2526 = vrot.slane %v2519, %v2525
        %v2527 = vcombine.low %v2433, %v2440
        %v2529 = vunpack.c.l.s4 1983009808
        %v2530 = vunpack.c.0.s8 %v2529
        %v2531 = vlaneseq
        %v2532 = vshrl.u32 %v2531, 7
        %v2533 = vsub.s32 %v2530, %v2532
        %v2534 = vrot.slane %v2527, %v2533
        %v2535 = vcombine.low %v2443, %v2444
        %v2537 = vunpack.c.l.s4 1983009808
        %v2538 = vunpack.c.0.s8 %v2537
        %v2539 = vlaneseq
        %v2540 = vshrl.u32 %v2539, 7
        %v2541 = vsub.s32 %v2538, %v2540
        %v2542 = vrot.slane %v2535, %v2541
        %v2543 = vcombine.low %v2518, %v2526
        %v2545 = vunpack.c.l.s4 1934713408
        %v2546 = vunpack.c.0.s8 %v2545
        %v2547 = vlaneseq
        %v2548 = vshrl.u32 %v2547, 7
        %v2549 = vsub.s32 %v2546, %v2548
        %v2550 = vrot.slane %v2543, %v2549
        %v2551 = vcombine.low %v2534, %v2542
        %v2553 = vunpack.c.l.s4 1934713408
        %v2554 = vunpack.c.0.s8 %v2553
        %v2555 = vlaneseq
        %v2556 = vshrl.u32 %v2555, 7
        %v2557 = vsub.s32 %v2554, %v2556
        %v2558 = vrot.slane %v2551, %v2557
        %v2559 = vcombine.low %v2550, %v2558
        %v2560 = vcombine.high %v2550, %v2558
        %v2561 = vcombine.low %v2483, %v2490
        %v2563 = vunpack.c.l.s4 1983009808
        %v2564 = vunpack.c.0.s8 %v2563
        %v2565 = vlaneseq
        %v2566 = vshrl.u32 %v2565, 7
        %v2567 = vsub.s32 %v2564, %v2566
        %v2568 = vrot.slane %v2561, %v2567
        %v2569 = vcombine.low %v2507, %v2508
        %v2571 = vunpack.c.l.s4 1983009808
        %v2572 = vunpack.c.0.s8 %v2571
        %v2573 = vlaneseq
        %v2574 = vshrl.u32 %v2573, 7
        %v2575 = vsub.s32 %v2572, %v2574
        %v2576 = vrot.slane %v2569, %v2575
        %v2577 = vcombine.low %v2499, %v2506
        %v2579 = vunpack.c.l.s4 1983009808
        %v2580 = vunpack.c.0.s8 %v2579
        %v2581 = vlaneseq
        %v2582 = vshrl.u32 %v2581, 7
        %v2583 = vsub.s32 %v2580, %v2582
        %v2584 = vrot.slane %v2577, %v2583
        %v2585 = vcombine.low %v2509, %v2510
        %v2587 = vunpack.c.l.s4 1983009808
        %v2588 = vunpack.c.0.s8 %v2587
        %v2589 = vlaneseq
        %v2590 = vshrl.u32 %v2589, 7
        %v2591 = vsub.s32 %v2588, %v2590
        %v2592 = vrot.slane %v2585, %v2591
        %v2593 = vcombine.low %v2568, %v2576
        %v2595 = vunpack.c.l.s4 1934713408
        %v2596 = vunpack.c.0.s8 %v2595
        %v2597 = vlaneseq
        %v2598 = vshrl.u32 %v2597, 7
        %v2599 = vsub.s32 %v2596, %v2598
        %v2600 = vrot.slane %v2593, %v2599
        %v2601 = vcombine.low %v2584, %v2592
        %v2603 = vunpack.c.l.s4 1934713408
        %v2604 = vunpack.c.0.s8 %v2603
        %v2605 = vlaneseq
        %v2606 = vshrl.u32 %v2605, 7
        %v2607 = vsub.s32 %v2604, %v2606
        %v2608 = vrot.slane %v2601, %v2607
        %v2609 = vcombine.low %v2600, %v2608
        %v2610 = vcombine.high %v2600, %v2608
        %v2611 = vpack.c.bf16 %v2559, %v2559
        %v2612 = vpack.c.bf16 %v2560, %v2560
        %v2613 = vpack.c.bf16 %v2609, %v2609
        %v2614 = vpack.c.bf16 %v2610, %v2610
        %2618 = vrot.lane.b32.xlu0 %v2348, 112
        %v2619 = vpop.permute.xlu0 %2618
        %2620 = vrot.lane.b32.xlu0 %v2351, 112
        %v2621 = vpop.permute.xlu0 %2620
        %2622 = vrot.lane.b32.xlu0 %v2356, 112
        %v2623 = vpop.permute.xlu0 %2622
        %v2626 = vcombine.high %v2348, 0.0
        %v2628 = vunpack.c.l.s4 1983009808
        %v2629 = vunpack.c.0.s8 %v2628
        %v2630 = vlaneseq
        %v2631 = vshrl.u32 %v2630, 7
        %v2632 = vsub.s32 %v2629, %v2631
        %v2633 = vrot.slane %v2348, %v2632
        %v2635 = vunpack.c.l.s4 1983009808
        %v2636 = vunpack.c.0.s8 %v2635
        %v2637 = vlaneseq
        %v2638 = vshrl.u32 %v2637, 7
        %v2639 = vsub.s32 %v2636, %v2638
        %v2640 = vrot.slane %v2626, %v2639
        %v2641 = vcombine.high %v2619, 0.0
        %v2643 = vunpack.c.l.s4 1983009808
        %v2644 = vunpack.c.0.s8 %v2643
        %v2645 = vlaneseq
        %v2646 = vshrl.u32 %v2645, 7
        %v2647 = vsub.s32 %v2644, %v2646
        %v2648 = vrot.slane %v2619, %v2647
        %v2650 = vunpack.c.l.s4 1983009808
        %v2651 = vunpack.c.0.s8 %v2650
        %v2652 = vlaneseq
        %v2653 = vshrl.u32 %v2652, 7
        %v2654 = vsub.s32 %v2651, %v2653
        %v2655 = vrot.slane %v2641, %v2654
        %v2656 = vcombine.low %v2633, %v2648
        %v2657 = vcombine.high %v2633, %v2648
        %v2659 = vunpack.c.l.s4 1934713408
        %v2660 = vunpack.c.0.s8 %v2659
        %v2661 = vlaneseq
        %v2662 = vshrl.u32 %v2661, 7
        %v2663 = vsub.s32 %v2660, %v2662
        %v2664 = vrot.slane %v2656, %v2663
        %v2666 = vunpack.c.l.s4 1934713408
        %v2667 = vunpack.c.0.s8 %v2666
        %v2668 = vlaneseq
        %v2669 = vshrl.u32 %v2668, 7
        %v2670 = vsub.s32 %v2667, %v2669
        %v2671 = vrot.slane %v2657, %v2670
        %v2672 = vcombine.low %v2640, %v2655
        %v2673 = vcombine.high %v2640, %v2655
        %v2675 = vunpack.c.l.s4 1934713408
        %v2676 = vunpack.c.0.s8 %v2675
        %v2677 = vlaneseq
        %v2678 = vshrl.u32 %v2677, 7
        %v2679 = vsub.s32 %v2676, %v2678
        %v2680 = vrot.slane %v2672, %v2679
        %v2682 = vunpack.c.l.s4 1934713408
        %v2683 = vunpack.c.0.s8 %v2682
        %v2684 = vlaneseq
        %v2685 = vshrl.u32 %v2684, 7
        %v2686 = vsub.s32 %v2683, %v2685
        %v2687 = vrot.slane %v2673, %v2686
        %v2688 = vcombine.high %v2664, 0.0
        %v2689 = vcombine.high %v2671, 0.0
        %v2690 = vcombine.high %v2680, 0.0
        %v2691 = vcombine.high %v2687, 0.0
        %v2692 = vcombine.high %v2351, 0.0
        %v2694 = vunpack.c.l.s4 1983009808
        %v2695 = vunpack.c.0.s8 %v2694
        %v2696 = vlaneseq
        %v2697 = vshrl.u32 %v2696, 7
        %v2698 = vsub.s32 %v2695, %v2697
        %v2699 = vrot.slane %v2351, %v2698
        %v2701 = vunpack.c.l.s4 1983009808
        %v2702 = vunpack.c.0.s8 %v2701
        %v2703 = vlaneseq
        %v2704 = vshrl.u32 %v2703, 7
        %v2705 = vsub.s32 %v2702, %v2704
        %v2706 = vrot.slane %v2692, %v2705
        %v2707 = vcombine.high %v2621, 0.0
        %v2709 = vunpack.c.l.s4 1983009808
        %v2710 = vunpack.c.0.s8 %v2709
        %v2711 = vlaneseq
        %v2712 = vshrl.u32 %v2711, 7
        %v2713 = vsub.s32 %v2710, %v2712
        %v2714 = vrot.slane %v2621, %v2713
        %v2716 = vunpack.c.l.s4 1983009808
        %v2717 = vunpack.c.0.s8 %v2716
        %v2718 = vlaneseq
        %v2719 = vshrl.u32 %v2718, 7
        %v2720 = vsub.s32 %v2717, %v2719
        %v2721 = vrot.slane %v2707, %v2720
        %v2722 = vcombine.low %v2699, %v2714
        %v2723 = vcombine.high %v2699, %v2714
        %v2725 = vunpack.c.l.s4 1934713408
        %v2726 = vunpack.c.0.s8 %v2725
        %v2727 = vlaneseq
        %v2728 = vshrl.u32 %v2727, 7
        %v2729 = vsub.s32 %v2726, %v2728
        %v2730 = vrot.slane %v2722, %v2729
        %v2732 = vunpack.c.l.s4 1934713408
        %v2733 = vunpack.c.0.s8 %v2732
        %v2734 = vlaneseq
        %v2735 = vshrl.u32 %v2734, 7
        %v2736 = vsub.s32 %v2733, %v2735
        %v2737 = vrot.slane %v2723, %v2736
        %v2738 = vcombine.low %v2706, %v2721
        %v2739 = vcombine.high %v2706, %v2721
        %v2741 = vunpack.c.l.s4 1934713408
        %v2742 = vunpack.c.0.s8 %v2741
        %v2743 = vlaneseq
        %v2744 = vshrl.u32 %v2743, 7
        %v2745 = vsub.s32 %v2742, %v2744
        %v2746 = vrot.slane %v2738, %v2745
        %v2748 = vunpack.c.l.s4 1934713408
        %v2749 = vunpack.c.0.s8 %v2748
        %v2750 = vlaneseq
        %v2751 = vshrl.u32 %v2750, 7
        %v2752 = vsub.s32 %v2749, %v2751
        %v2753 = vrot.slane %v2739, %v2752
        %v2754 = vcombine.high %v2737, 0.0
        %v2755 = vcombine.high %v2746, 0.0
        %v2756 = vcombine.high %v2753, 0.0
        %v2758 = vunpack.c.l.s4 1983009808
        %v2759 = vunpack.c.0.s8 %v2758
        %v2760 = vlaneseq
        %v2761 = vshrl.u32 %v2760, 7
        %v2762 = vsub.s32 %v2759, %v2761
        %v2763 = vrot.slane %v2356, %v2762
        %v2766 = vunpack.c.l.s4 1983009808
        %v2767 = vunpack.c.0.s8 %v2766
        %v2768 = vlaneseq
        %v2769 = vshrl.u32 %v2768, 7
        %v2770 = vsub.s32 %v2767, %v2769
        %v2771 = vrot.slane %v2623, %v2770
        %v2772 = vcombine.low %v2763, %v2771
        %v2773 = vcombine.high %v2763, %v2771
        %v2775 = vunpack.c.l.s4 1934713408
        %v2776 = vunpack.c.0.s8 %v2775
        %v2777 = vlaneseq
        %v2778 = vshrl.u32 %v2777, 7
        %v2779 = vsub.s32 %v2776, %v2778
        %v2780 = vrot.slane %v2772, %v2779
        %v2782 = vunpack.c.l.s4 1934713408
        %v2783 = vunpack.c.0.s8 %v2782
        %v2784 = vlaneseq
        %v2785 = vshrl.u32 %v2784, 7
        %v2786 = vsub.s32 %v2783, %v2785
        %v2787 = vrot.slane %v2773, %v2786
        %v2788 = vcombine.high %v2780, 0.0
        %v2789 = vcombine.low %v2664, %v2671
        %v2791 = vunpack.c.l.s4 1983009808
        %v2792 = vunpack.c.0.s8 %v2791
        %v2793 = vlaneseq
        %v2794 = vshrl.u32 %v2793, 7
        %v2795 = vsub.s32 %v2792, %v2794
        %v2796 = vrot.slane %v2789, %v2795
        %v2797 = vcombine.low %v2688, %v2689
        %v2799 = vunpack.c.l.s4 1983009808
        %v2800 = vunpack.c.0.s8 %v2799
        %v2801 = vlaneseq
        %v2802 = vshrl.u32 %v2801, 7
        %v2803 = vsub.s32 %v2800, %v2802
        %v2804 = vrot.slane %v2797, %v2803
        %v2805 = vcombine.low %v2680, %v2687
        %v2807 = vunpack.c.l.s4 1983009808
        %v2808 = vunpack.c.0.s8 %v2807
        %v2809 = vlaneseq
        %v2810 = vshrl.u32 %v2809, 7
        %v2811 = vsub.s32 %v2808, %v2810
        %v2812 = vrot.slane %v2805, %v2811
        %v2813 = vcombine.low %v2690, %v2691
        %v2815 = vunpack.c.l.s4 1983009808
        %v2816 = vunpack.c.0.s8 %v2815
        %v2817 = vlaneseq
        %v2818 = vshrl.u32 %v2817, 7
        %v2819 = vsub.s32 %v2816, %v2818
        %v2820 = vrot.slane %v2813, %v2819
        %v2821 = vcombine.low %v2796, %v2804
        %v2823 = vunpack.c.l.s4 1934713408
        %v2824 = vunpack.c.0.s8 %v2823
        %v2825 = vlaneseq
        %v2826 = vshrl.u32 %v2825, 7
        %v2827 = vsub.s32 %v2824, %v2826
        %v2828 = vrot.slane %v2821, %v2827
        %v2829 = vcombine.low %v2812, %v2820
        %v2831 = vunpack.c.l.s4 1934713408
        %v2832 = vunpack.c.0.s8 %v2831
        %v2833 = vlaneseq
        %v2834 = vshrl.u32 %v2833, 7
        %v2835 = vsub.s32 %v2832, %v2834
        %v2836 = vrot.slane %v2829, %v2835
        %v2837 = vcombine.low %v2828, %v2836
        %v2838 = vcombine.high %v2828, %v2836
        %v2839 = vcombine.high %v2730, 0.0
        %v2840 = vcombine.low %v2730, %v2839
        %v2842 = vunpack.c.l.s4 1934713408
        %v2843 = vunpack.c.0.s8 %v2842
        %v2844 = vlaneseq
        %v2845 = vshrl.u32 %v2844, 7
        %v2846 = vsub.s32 %v2843, %v2845
        %v2847 = vrot.slane %v2840, %v2846
        %v2848 = vcombine.high %v2847, 0.0
        %v2849 = vcombine.low %v2737, %v2746
        %v2851 = vunpack.c.l.s4 1983009808
        %v2852 = vunpack.c.0.s8 %v2851
        %v2853 = vlaneseq
        %v2854 = vshrl.u32 %v2853, 7
        %v2855 = vsub.s32 %v2852, %v2854
        %v2856 = vrot.slane %v2849, %v2855
        %v2857 = vcombine.low %v2754, %v2755
        %v2859 = vunpack.c.l.s4 1983009808
        %v2860 = vunpack.c.0.s8 %v2859
        %v2861 = vlaneseq
        %v2862 = vshrl.u32 %v2861, 7
        %v2863 = vsub.s32 %v2860, %v2862
        %v2864 = vrot.slane %v2857, %v2863
        %v2865 = vcombine.low %v2753, %v2780
        %v2867 = vunpack.c.l.s4 1983009808
        %v2868 = vunpack.c.0.s8 %v2867
        %v2869 = vlaneseq
        %v2870 = vshrl.u32 %v2869, 7
        %v2871 = vsub.s32 %v2868, %v2870
        %v2872 = vrot.slane %v2865, %v2871
        %v2873 = vcombine.low %v2756, %v2788
        %v2875 = vunpack.c.l.s4 1983009808
        %v2876 = vunpack.c.0.s8 %v2875
        %v2877 = vlaneseq
        %v2878 = vshrl.u32 %v2877, 7
        %v2879 = vsub.s32 %v2876, %v2878
        %v2880 = vrot.slane %v2873, %v2879
        %v2881 = vcombine.low %v2856, %v2864
        %v2883 = vunpack.c.l.s4 1934713408
        %v2884 = vunpack.c.0.s8 %v2883
        %v2885 = vlaneseq
        %v2886 = vshrl.u32 %v2885, 7
        %v2887 = vsub.s32 %v2884, %v2886
        %v2888 = vrot.slane %v2881, %v2887
        %v2889 = vcombine.low %v2872, %v2880
        %v2891 = vunpack.c.l.s4 1934713408
        %v2892 = vunpack.c.0.s8 %v2891
        %v2893 = vlaneseq
        %v2894 = vshrl.u32 %v2893, 7
        %v2895 = vsub.s32 %v2892, %v2894
        %v2896 = vrot.slane %v2889, %v2895
        %v2897 = vcombine.low %v2888, %v2896
        %v2898 = vcombine.high %v2888, %v2896
        %v2899 = vcombine.high %v2787, 0.0
        %v2900 = vcombine.low %v2787, %v2899
        %v2902 = vunpack.c.l.s4 1934713408
        %v2903 = vunpack.c.0.s8 %v2902
        %v2904 = vlaneseq
        %v2905 = vshrl.u32 %v2904, 7
        %v2906 = vsub.s32 %v2903, %v2905
        %v2907 = vrot.slane %v2900, %v2906
        %v2908 = vcombine.high %v2907, 0.0
        %v2909 = vpack.c.bf16 %v2847, %v2837
        %v2910 = vpack.c.bf16 %v2848, %v2838
        %v2911 = vpack.c.bf16 %v2907, %v2897
        %v2912 = vpack.c.bf16 %v2908, %v2898
        %2913 = vrot.lane.b32.xlu0 %v2348, 96
        %v2914 = vpop.permute.xlu0 %2913
        %2915 = vrot.lane.b32.xlu0 %v2351, 96
        %v2916 = vpop.permute.xlu0 %2915
        %2917 = vrot.lane.b32.xlu0 %v2356, 96
        %v2918 = vpop.permute.xlu0 %2917
        %2919 = vrot.lane.b32.xlu0 %v2619, 96
        %v2920 = vpop.permute.xlu0 %2919
        %2921 = vrot.lane.b32.xlu0 %v2621, 96
        %v2922 = vpop.permute.xlu0 %2921
        %2923 = vrot.lane.b32.xlu0 %v2623, 96
        %v2924 = vpop.permute.xlu0 %2923
        %v2929 = vcombine.high %v2914, 0.0
        %v2931 = vunpack.c.l.s4 1983009808
        %v2932 = vunpack.c.0.s8 %v2931
        %v2933 = vlaneseq
        %v2934 = vshrl.u32 %v2933, 7
        %v2935 = vsub.s32 %v2932, %v2934
        %v2936 = vrot.slane %v2914, %v2935
        %v2938 = vunpack.c.l.s4 1983009808
        %v2939 = vunpack.c.0.s8 %v2938
        %v2940 = vlaneseq
        %v2941 = vshrl.u32 %v2940, 7
        %v2942 = vsub.s32 %v2939, %v2941
        %v2943 = vrot.slane %v2929, %v2942
        %v2944 = vcombine.high %v2920, 0.0
        %v2946 = vunpack.c.l.s4 1983009808
        %v2947 = vunpack.c.0.s8 %v2946
        %v2948 = vlaneseq
        %v2949 = vshrl.u32 %v2948, 7
        %v2950 = vsub.s32 %v2947, %v2949
        %v2951 = vrot.slane %v2920, %v2950
        %v2953 = vunpack.c.l.s4 1983009808
        %v2954 = vunpack.c.0.s8 %v2953
        %v2955 = vlaneseq
        %v2956 = vshrl.u32 %v2955, 7
        %v2957 = vsub.s32 %v2954, %v2956
        %v2958 = vrot.slane %v2944, %v2957
        %v2959 = vcombine.low %v2936, %v2951
        %v2960 = vcombine.high %v2936, %v2951
        %v2962 = vunpack.c.l.s4 1934713408
        %v2963 = vunpack.c.0.s8 %v2962
        %v2964 = vlaneseq
        %v2965 = vshrl.u32 %v2964, 7
        %v2966 = vsub.s32 %v2963, %v2965
        %v2967 = vrot.slane %v2959, %v2966
        %v2969 = vunpack.c.l.s4 1934713408
        %v2970 = vunpack.c.0.s8 %v2969
        %v2971 = vlaneseq
        %v2972 = vshrl.u32 %v2971, 7
        %v2973 = vsub.s32 %v2970, %v2972
        %v2974 = vrot.slane %v2960, %v2973
        %v2975 = vcombine.low %v2943, %v2958
        %v2976 = vcombine.high %v2943, %v2958
        %v2978 = vunpack.c.l.s4 1934713408
        %v2979 = vunpack.c.0.s8 %v2978
        %v2980 = vlaneseq
        %v2981 = vshrl.u32 %v2980, 7
        %v2982 = vsub.s32 %v2979, %v2981
        %v2983 = vrot.slane %v2975, %v2982
        %v2985 = vunpack.c.l.s4 1934713408
        %v2986 = vunpack.c.0.s8 %v2985
        %v2987 = vlaneseq
        %v2988 = vshrl.u32 %v2987, 7
        %v2989 = vsub.s32 %v2986, %v2988
        %v2990 = vrot.slane %v2976, %v2989
        %v2991 = vcombine.high %v2967, 0.0
        %v2992 = vcombine.high %v2974, 0.0
        %v2993 = vcombine.high %v2983, 0.0
        %v2994 = vcombine.high %v2990, 0.0
        %v2995 = vcombine.high %v2916, 0.0
        %v2997 = vunpack.c.l.s4 1983009808
        %v2998 = vunpack.c.0.s8 %v2997
        %v2999 = vlaneseq
        %v3000 = vshrl.u32 %v2999, 7
        %v3001 = vsub.s32 %v2998, %v3000
        %v3002 = vrot.slane %v2916, %v3001
        %v3004 = vunpack.c.l.s4 1983009808
        %v3005 = vunpack.c.0.s8 %v3004
        %v3006 = vlaneseq
        %v3007 = vshrl.u32 %v3006, 7
        %v3008 = vsub.s32 %v3005, %v3007
        %v3009 = vrot.slane %v2995, %v3008
        %v3010 = vcombine.high %v2922, 0.0
        %v3012 = vunpack.c.l.s4 1983009808
        %v3013 = vunpack.c.0.s8 %v3012
        %v3014 = vlaneseq
        %v3015 = vshrl.u32 %v3014, 7
        %v3016 = vsub.s32 %v3013, %v3015
        %v3017 = vrot.slane %v2922, %v3016
        %v3019 = vunpack.c.l.s4 1983009808
        %v3020 = vunpack.c.0.s8 %v3019
        %v3021 = vlaneseq
        %v3022 = vshrl.u32 %v3021, 7
        %v3023 = vsub.s32 %v3020, %v3022
        %v3024 = vrot.slane %v3010, %v3023
        %v3025 = vcombine.low %v3002, %v3017
        %v3026 = vcombine.high %v3002, %v3017
        %v3028 = vunpack.c.l.s4 1934713408
        %v3029 = vunpack.c.0.s8 %v3028
        %v3030 = vlaneseq
        %v3031 = vshrl.u32 %v3030, 7
        %v3032 = vsub.s32 %v3029, %v3031
        %v3033 = vrot.slane %v3025, %v3032
        %v3035 = vunpack.c.l.s4 1934713408
        %v3036 = vunpack.c.0.s8 %v3035
        %v3037 = vlaneseq
        %v3038 = vshrl.u32 %v3037, 7
        %v3039 = vsub.s32 %v3036, %v3038
        %v3040 = vrot.slane %v3026, %v3039
        %v3041 = vcombine.low %v3009, %v3024
        %v3042 = vcombine.high %v3009, %v3024
        %v3044 = vunpack.c.l.s4 1934713408
        %v3045 = vunpack.c.0.s8 %v3044
        %v3046 = vlaneseq
        %v3047 = vshrl.u32 %v3046, 7
        %v3048 = vsub.s32 %v3045, %v3047
        %v3049 = vrot.slane %v3041, %v3048
        %v3051 = vunpack.c.l.s4 1934713408
        %v3052 = vunpack.c.0.s8 %v3051
        %v3053 = vlaneseq
        %v3054 = vshrl.u32 %v3053, 7
        %v3055 = vsub.s32 %v3052, %v3054
        %v3056 = vrot.slane %v3042, %v3055
        %v3057 = vcombine.high %v3040, 0.0
        %v3058 = vcombine.high %v3049, 0.0
        %v3059 = vcombine.high %v3056, 0.0
        %v3062 = vunpack.c.l.s4 1983009808
        %v3063 = vunpack.c.0.s8 %v3062
        %v3064 = vlaneseq
        %v3065 = vshrl.u32 %v3064, 7
        %v3066 = vsub.s32 %v3063, %v3065
        %v3067 = vrot.slane %v2918, %v3066
        %v3070 = vunpack.c.l.s4 1983009808
        %v3071 = vunpack.c.0.s8 %v3070
        %v3072 = vlaneseq
        %v3073 = vshrl.u32 %v3072, 7
        %v3074 = vsub.s32 %v3071, %v3073
        %v3075 = vrot.slane %v2924, %v3074
        %v3076 = vcombine.low %v3067, %v3075
        %v3077 = vcombine.high %v3067, %v3075
        %v3079 = vunpack.c.l.s4 1934713408
        %v3080 = vunpack.c.0.s8 %v3079
        %v3081 = vlaneseq
        %v3082 = vshrl.u32 %v3081, 7
        %v3083 = vsub.s32 %v3080, %v3082
        %v3084 = vrot.slane %v3076, %v3083
        %v3086 = vunpack.c.l.s4 1934713408
        %v3087 = vunpack.c.0.s8 %v3086
        %v3088 = vlaneseq
        %v3089 = vshrl.u32 %v3088, 7
        %v3090 = vsub.s32 %v3087, %v3089
        %v3091 = vrot.slane %v3077, %v3090
        %v3092 = vcombine.high %v3084, 0.0
        %v3093 = vcombine.low %v2967, %v2974
        %v3095 = vunpack.c.l.s4 1983009808
        %v3096 = vunpack.c.0.s8 %v3095
        %v3097 = vlaneseq
        %v3098 = vshrl.u32 %v3097, 7
        %v3099 = vsub.s32 %v3096, %v3098
        %v3100 = vrot.slane %v3093, %v3099
        %v3101 = vcombine.low %v2991, %v2992
        %v3103 = vunpack.c.l.s4 1983009808
        %v3104 = vunpack.c.0.s8 %v3103
        %v3105 = vlaneseq
        %v3106 = vshrl.u32 %v3105, 7
        %v3107 = vsub.s32 %v3104, %v3106
        %v3108 = vrot.slane %v3101, %v3107
        %v3109 = vcombine.low %v2983, %v2990
        %v3111 = vunpack.c.l.s4 1983009808
        %v3112 = vunpack.c.0.s8 %v3111
        %v3113 = vlaneseq
        %v3114 = vshrl.u32 %v3113, 7
        %v3115 = vsub.s32 %v3112, %v3114
        %v3116 = vrot.slane %v3109, %v3115
        %v3117 = vcombine.low %v2993, %v2994
        %v3119 = vunpack.c.l.s4 1983009808
        %v3120 = vunpack.c.0.s8 %v3119
        %v3121 = vlaneseq
        %v3122 = vshrl.u32 %v3121, 7
        %v3123 = vsub.s32 %v3120, %v3122
        %v3124 = vrot.slane %v3117, %v3123
        %v3125 = vcombine.low %v3100, %v3108
        %v3127 = vunpack.c.l.s4 1934713408
        %v3128 = vunpack.c.0.s8 %v3127
        %v3129 = vlaneseq
        %v3130 = vshrl.u32 %v3129, 7
        %v3131 = vsub.s32 %v3128, %v3130
        %v3132 = vrot.slane %v3125, %v3131
        %v3133 = vcombine.low %v3116, %v3124
        %v3135 = vunpack.c.l.s4 1934713408
        %v3136 = vunpack.c.0.s8 %v3135
        %v3137 = vlaneseq
        %v3138 = vshrl.u32 %v3137, 7
        %v3139 = vsub.s32 %v3136, %v3138
        %v3140 = vrot.slane %v3133, %v3139
        %v3141 = vcombine.low %v3132, %v3140
        %v3142 = vcombine.high %v3132, %v3140
        %v3143 = vcombine.high %v3033, 0.0
        %v3144 = vcombine.low %v3033, %v3143
        %v3146 = vunpack.c.l.s4 1934713408
        %v3147 = vunpack.c.0.s8 %v3146
        %v3148 = vlaneseq
        %v3149 = vshrl.u32 %v3148, 7
        %v3150 = vsub.s32 %v3147, %v3149
        %v3151 = vrot.slane %v3144, %v3150
        %v3152 = vcombine.high %v3151, 0.0
        %v3153 = vcombine.low %v3040, %v3049
        %v3155 = vunpack.c.l.s4 1983009808
        %v3156 = vunpack.c.0.s8 %v3155
        %v3157 = vlaneseq
        %v3158 = vshrl.u32 %v3157, 7
        %v3159 = vsub.s32 %v3156, %v3158
        %v3160 = vrot.slane %v3153, %v3159
        %v3161 = vcombine.low %v3057, %v3058
        %v3163 = vunpack.c.l.s4 1983009808
        %v3164 = vunpack.c.0.s8 %v3163
        %v3165 = vlaneseq
        %v3166 = vshrl.u32 %v3165, 7
        %v3167 = vsub.s32 %v3164, %v3166
        %v3168 = vrot.slane %v3161, %v3167
        %v3169 = vcombine.low %v3056, %v3084
        %v3171 = vunpack.c.l.s4 1983009808
        %v3172 = vunpack.c.0.s8 %v3171
        %v3173 = vlaneseq
        %v3174 = vshrl.u32 %v3173, 7
        %v3175 = vsub.s32 %v3172, %v3174
        %v3176 = vrot.slane %v3169, %v3175
        %v3177 = vcombine.low %v3059, %v3092
        %v3179 = vunpack.c.l.s4 1983009808
        %v3180 = vunpack.c.0.s8 %v3179
        %v3181 = vlaneseq
        %v3182 = vshrl.u32 %v3181, 7
        %v3183 = vsub.s32 %v3180, %v3182
        %v3184 = vrot.slane %v3177, %v3183
        %v3185 = vcombine.low %v3160, %v3168
        %v3187 = vunpack.c.l.s4 1934713408
        %v3188 = vunpack.c.0.s8 %v3187
        %v3189 = vlaneseq
        %v3190 = vshrl.u32 %v3189, 7
        %v3191 = vsub.s32 %v3188, %v3190
        %v3192 = vrot.slane %v3185, %v3191
        %v3193 = vcombine.low %v3176, %v3184
        %v3195 = vunpack.c.l.s4 1934713408
        %v3196 = vunpack.c.0.s8 %v3195
        %v3197 = vlaneseq
        %v3198 = vshrl.u32 %v3197, 7
        %v3199 = vsub.s32 %v3196, %v3198
        %v3200 = vrot.slane %v3193, %v3199
        %v3201 = vcombine.low %v3192, %v3200
        %v3202 = vcombine.high %v3192, %v3200
        %v3203 = vcombine.high %v3091, 0.0
        %v3204 = vcombine.low %v3091, %v3203
        %v3206 = vunpack.c.l.s4 1934713408
        %v3207 = vunpack.c.0.s8 %v3206
        %v3208 = vlaneseq
        %v3209 = vshrl.u32 %v3208, 7
        %v3210 = vsub.s32 %v3207, %v3209
        %v3211 = vrot.slane %v3204, %v3210
        %v3212 = vcombine.high %v3211, 0.0
        %v3213 = vpack.c.bf16 %v3151, %v3141
        %v3214 = vpack.c.bf16 %v3152, %v3142
        %v3215 = vpack.c.bf16 %v3211, %v3201
        %v3216 = vpack.c.bf16 %v3212, %v3202
        %v3218 = vsel %vm1402, %v2611, 0
        %v3221 = vsel %vm1402, %v2909, 0
        %3223 = vmatprep.subr.bf16.mxu0 0
        %3224 = vmatpush1.bf16.xpose.msra.mxu0 0
        %3225 = vmatprep.subr.bf16.mxu0 0
        %3226 = vmatpush1.bf16.xpose.msra.mxu0 0
        %3227 = vmatprep.subr.bf16.mxu0 0
        %3228 = vmatpush1.bf16.xpose.msra.mxu0 0
        %3229 = vmatprep.subr.bf16.mxu0 0
        %3230 = vmatpush1.bf16.xpose.msra.mxu0 0
        %3231 = vmatprep.subr.bf16.mxu0 0
        %3232 = vmatpush1.bf16.xpose.msra.mxu0 0
        %3233 = vmatprep.subr.bf16.mxu0 0
        %3234 = vmatpush1.bf16.xpose.msra.mxu0 0
        %3235 = vmatprep.subr.bf16.mxu0 0
        %3236 = vmatpush1.bf16.xpose.msra.mxu0 0
        %3237 = vmatprep.subr.bf16.mxu0 0
        %3238 = vmatpush1.bf16.xpose.msra.mxu0 %v3221
        %3239 = vmatprep.subr.bf16.mxu0 0
        %3240 = vmatpush2.bf16.xpose.msra.mxu0 0
        %3241 = vmatprep.subr.bf16.mxu0 0
        %3242 = vmatpush2.bf16.xpose.msra.mxu0 0
        %3243 = vmatprep.subr.bf16.mxu0 0
        %3244 = vmatpush2.bf16.xpose.msra.mxu0 0
        %3245 = vmatprep.subr.bf16.mxu0 0
        %3246 = vmatpush2.bf16.xpose.msra.mxu0 0
        %3247 = vmatprep.subr.bf16.mxu0 0
        %3248 = vmatpush2.bf16.xpose.msra.mxu0 0
        %3249 = vmatprep.subr.bf16.mxu0 0
        %3250 = vmatpush2.bf16.xpose.msra.mxu0 0
        %3251 = vmatprep.subr.bf16.mxu0 0
        %3252 = vmatpush2.bf16.xpose.msra.mxu0 0
        %3253 = vmatprep.subr.bf16.mxu0 0
        %3254 = vmatpush2.bf16.xpose.msra.mxu0 0
        %3255 = vmatprep.mubr.bf16.mxu0 0
        %3256 = vmatmul.mubr.bf16.gmra.mxu0 %v3218
        %v3257 = vpop.f32.mrf.mxu0
        %v3258 = vadd.f32 0.0, %v3257
        %v3259 = vpop.f32.mrf.mxu0
        %v3260 = vpop.f32.mrf.mxu0
        %v3261 = vpop.f32.mrf.mxu0
        %3262 = vdwg.mxu0
        %v3264 = vsel %vm1402, %v2612, 0
        %v3267 = vsel %vm1402, %v2910, 0
        %3269 = vmatprep.subr.bf16.mxu0 0
        %3270 = vmatpush1.bf16.xpose.msra.mxu0 0
        %3271 = vmatprep.subr.bf16.mxu0 0
        %3272 = vmatpush1.bf16.xpose.msra.mxu0 0
        %3273 = vmatprep.subr.bf16.mxu0 0
        %3274 = vmatpush1.bf16.xpose.msra.mxu0 0
        %3275 = vmatprep.subr.bf16.mxu0 0
        %3276 = vmatpush1.bf16.xpose.msra.mxu0 0
        %3277 = vmatprep.subr.bf16.mxu0 0
        %3278 = vmatpush1.bf16.xpose.msra.mxu0 0
        %3279 = vmatprep.subr.bf16.mxu0 0
        %3280 = vmatpush1.bf16.xpose.msra.mxu0 0
        %3281 = vmatprep.subr.bf16.mxu0 0
        %3282 = vmatpush1.bf16.xpose.msra.mxu0 0
        %3283 = vmatprep.subr.bf16.mxu0 0
        %3284 = vmatpush1.bf16.xpose.msra.mxu0 %v3267
        %3285 = vmatprep.subr.bf16.mxu0 0
        %3286 = vmatpush2.bf16.xpose.msra.mxu0 0
        %3287 = vmatprep.subr.bf16.mxu0 0
        %3288 = vmatpush2.bf16.xpose.msra.mxu0 0
        %3289 = vmatprep.subr.bf16.mxu0 0
        %3290 = vmatpush2.bf16.xpose.msra.mxu0 0
        %3291 = vmatprep.subr.bf16.mxu0 0
        %3292 = vmatpush2.bf16.xpose.msra.mxu0 0
        %3293 = vmatprep.subr.bf16.mxu0 0
        %3294 = vmatpush2.bf16.xpose.msra.mxu0 0
        %3295 = vmatprep.subr.bf16.mxu0 0
        %3296 = vmatpush2.bf16.xpose.msra.mxu0 0
        %3297 = vmatprep.subr.bf16.mxu0 0
        %3298 = vmatpush2.bf16.xpose.msra.mxu0 0
        %3299 = vmatprep.subr.bf16.mxu0 0
        %3300 = vmatpush2.bf16.xpose.msra.mxu0 0
        %3301 = vmatprep.mubr.bf16.mxu0 0
        %3302 = vmatmul.mubr.bf16.gmra.mxu0 %v3264
        %v3303 = vpop.f32.mrf.mxu0
        %v3304 = vadd.f32 0.0, %v3303
        %v3305 = vpop.f32.mrf.mxu0
        %v3306 = vpop.f32.mrf.mxu0
        %v3307 = vpop.f32.mrf.mxu0
        %3308 = vdwg.mxu0
        %v3310 = vsel %vm1402, %v2613, 0
        %v3313 = vsel %vm1402, %v2911, 0
        %3315 = vmatprep.subr.bf16.mxu0 0
        %3316 = vmatpush1.bf16.xpose.msra.mxu0 0
        %3317 = vmatprep.subr.bf16.mxu0 0
        %3318 = vmatpush1.bf16.xpose.msra.mxu0 0
        %3319 = vmatprep.subr.bf16.mxu0 0
        %3320 = vmatpush1.bf16.xpose.msra.mxu0 0
        %3321 = vmatprep.subr.bf16.mxu0 0
        %3322 = vmatpush1.bf16.xpose.msra.mxu0 0
        %3323 = vmatprep.subr.bf16.mxu0 0
        %3324 = vmatpush1.bf16.xpose.msra.mxu0 0
        %3325 = vmatprep.subr.bf16.mxu0 0
        %3326 = vmatpush1.bf16.xpose.msra.mxu0 0
        %3327 = vmatprep.subr.bf16.mxu0 0
        %3328 = vmatpush1.bf16.xpose.msra.mxu0 0
        %3329 = vmatprep.subr.bf16.mxu0 0
        %3330 = vmatpush1.bf16.xpose.msra.mxu0 %v3313
        %3331 = vmatprep.subr.bf16.mxu0 0
        %3332 = vmatpush2.bf16.xpose.msra.mxu0 0
        %3333 = vmatprep.subr.bf16.mxu0 0
        %3334 = vmatpush2.bf16.xpose.msra.mxu0 0
        %3335 = vmatprep.subr.bf16.mxu0 0
        %3336 = vmatpush2.bf16.xpose.msra.mxu0 0
        %3337 = vmatprep.subr.bf16.mxu0 0
        %3338 = vmatpush2.bf16.xpose.msra.mxu0 0
        %3339 = vmatprep.subr.bf16.mxu0 0
        %3340 = vmatpush2.bf16.xpose.msra.mxu0 0
        %3341 = vmatprep.subr.bf16.mxu0 0
        %3342 = vmatpush2.bf16.xpose.msra.mxu0 0
        %3343 = vmatprep.subr.bf16.mxu0 0
        %3344 = vmatpush2.bf16.xpose.msra.mxu0 0
        %3345 = vmatprep.subr.bf16.mxu0 0
        %3346 = vmatpush2.bf16.xpose.msra.mxu0 0
        %3347 = vmatprep.mubr.bf16.mxu0 0
        %3348 = vmatmul.mubr.bf16.gmra.mxu0 %v3310
        %v3349 = vpop.f32.mrf.mxu0
        %v3350 = vadd.f32 0.0, %v3349
        %v3351 = vpop.f32.mrf.mxu0
        %v3352 = vpop.f32.mrf.mxu0
        %v3353 = vpop.f32.mrf.mxu0
        %3354 = vdwg.mxu0
        %v3356 = vsel %vm1402, %v2614, 0
        %v3359 = vsel %vm1402, %v2912, 0
        %3361 = vmatprep.subr.bf16.mxu0 0
        %3362 = vmatpush1.bf16.xpose.msra.mxu0 0
        %3363 = vmatprep.subr.bf16.mxu0 0
        %3364 = vmatpush1.bf16.xpose.msra.mxu0 0
        %3365 = vmatprep.subr.bf16.mxu0 0
        %3366 = vmatpush1.bf16.xpose.msra.mxu0 0
        %3367 = vmatprep.subr.bf16.mxu0 0
        %3368 = vmatpush1.bf16.xpose.msra.mxu0 0
        %3369 = vmatprep.subr.bf16.mxu0 0
        %3370 = vmatpush1.bf16.xpose.msra.mxu0 0
        %3371 = vmatprep.subr.bf16.mxu0 0
        %3372 = vmatpush1.bf16.xpose.msra.mxu0 0
        %3373 = vmatprep.subr.bf16.mxu0 0
        %3374 = vmatpush1.bf16.xpose.msra.mxu0 0
        %3375 = vmatprep.subr.bf16.mxu0 0
        %3376 = vmatpush1.bf16.xpose.msra.mxu0 %v3359
        %3377 = vmatprep.subr.bf16.mxu0 0
        %3378 = vmatpush2.bf16.xpose.msra.mxu0 0
        %3379 = vmatprep.subr.bf16.mxu0 0
        %3380 = vmatpush2.bf16.xpose.msra.mxu0 0
        %3381 = vmatprep.subr.bf16.mxu0 0
        %3382 = vmatpush2.bf16.xpose.msra.mxu0 0
        %3383 = vmatprep.subr.bf16.mxu0 0
        %3384 = vmatpush2.bf16.xpose.msra.mxu0 0
        %3385 = vmatprep.subr.bf16.mxu0 0
        %3386 = vmatpush2.bf16.xpose.msra.mxu0 0
        %3387 = vmatprep.subr.bf16.mxu0 0
        %3388 = vmatpush2.bf16.xpose.msra.mxu0 0
        %3389 = vmatprep.subr.bf16.mxu0 0
        %3390 = vmatpush2.bf16.xpose.msra.mxu0 0
        %3391 = vmatprep.subr.bf16.mxu0 0
        %3392 = vmatpush2.bf16.xpose.msra.mxu0 0
        %3393 = vmatprep.mubr.bf16.mxu0 0
        %3394 = vmatmul.mubr.bf16.gmra.mxu0 %v3356
        %v3395 = vpop.f32.mrf.mxu0
        %v3396 = vadd.f32 0.0, %v3395
        %v3397 = vpop.f32.mrf.mxu0
        %v3398 = vpop.f32.mrf.mxu0
        %v3399 = vpop.f32.mrf.mxu0
        %3400 = vdwg.mxu0
        %v3401 = vsel %vm2367, 1, 0
        %v3402 = vsel %vm2368, 1, 0
        %v3403 = vlaneseq
        %v3404 = vshrl.u32 %v3403, 7
        %v3405 = vsub.s32 0, %v3404
        %v3406 = vrot.slane %v3401, %v3405
        %v3407 = vlaneseq
        %v3408 = vshrl.u32 %v3407, 7
        %v3409 = vsub.s32 0, %v3408
        %v3410 = vrot.slane %v3402, %v3409
        %vm3411 = vcmp.eq.s32.totalorder %v3406, 1
        %vm3412 = vcmp.eq.s32.totalorder %v3410, 1
        %v3413 = vsel %vm3411, %v3258, -1e+30
        %v3414 = vsel %vm3411, %v3304, -1e+30
        %v3415 = vsel %vm3412, %v3350, -1e+30
        %v3416 = vsel %vm3412, %v3396, -1e+30
        %vm3417 = vcmask 80896
        %v3418 = vsel %vm3417, %v3413, -inf
        %3419 = vmax.xlane.f32.xlu0 %v3418
        %v3420 = vpop.xlane.xlu0 %3419
        %v3421 = vsel %vm3417, %v3414, -inf
        %3422 = vmax.xlane.f32.xlu0 %v3421
        %v3423 = vpop.xlane.xlu0 %3422
        %v3424 = vsel %vm3417, %v3415, -inf
        %3425 = vmax.xlane.f32.xlu0 %v3424
        %v3426 = vpop.xlane.xlu0 %3425
        %v3427 = vsel %vm3417, %v3416, -inf
        %3428 = vmax.xlane.f32.xlu0 %v3427
        %v3429 = vpop.xlane.xlu0 %3428
        %v3430 = vsub.f32 %v3413, %v3420
        %v3431 = vsub.f32 %v3414, %v3423
        %v3432 = vsub.f32 %v3415, %v3426
        %v3433 = vsub.f32 %v3416, %v3429
        %v3434 = vmul.f32 %v3430, 1.442695
        %v3435 = vpow.pop %v3434
        %v3436 = vmul.f32 %v3431, 1.442695
        %v3437 = vpow.pop %v3436
        %v3438 = vmul.f32 %v3432, 1.442695
        %v3439 = vpow.pop %v3438
        %v3440 = vmul.f32 %v3433, 1.442695
        %v3441 = vpow.pop %v3440
        %v3442 = vsel %vm3417, %v3435, 0.0
        %3443 = vadd.xlane.f32.xlu0 %v3442
        %v3444 = vpop.xlane.xlu0 %3443
        %v3445 = vsel %vm3417, %v3437, 0.0
        %3446 = vadd.xlane.f32.xlu0 %v3445
        %v3447 = vpop.xlane.xlu0 %3446
        %v3448 = vsel %vm3417, %v3439, 0.0
        %3449 = vadd.xlane.f32.xlu0 %v3448
        %v3450 = vpop.xlane.xlu0 %3449
        %v3451 = vsel %vm3417, %v3441, 0.0
        %3452 = vadd.xlane.f32.xlu0 %v3451
        %v3453 = vpop.xlane.xlu0 %3452
        %v3454 = vrcp.pop %v3444
        %v3455 = vrcp.pop %v3447
        %v3456 = vrcp.pop %v3450
        %v3457 = vrcp.pop %v3453
        %v3458 = vmul.f32 %v3435, %v3454
        %v3459 = vmul.f32 %v3437, %v3455
        %v3460 = vmul.f32 %v3439, %v3456
        %v3461 = vmul.f32 %v3441, %v3457
        %v3462 = vpack.c.bf16 %v3458, %v3458
        %v3463 = vpack.c.bf16 %v3459, %v3459
        %v3464 = vpack.c.bf16 %v3460, %v3460
        %v3465 = vpack.c.bf16 %v3461, %v3461
        %v3467 = vsel %vm3417, %v3462, 0
        %vm3469 = vcmask 1044480
        %v3471 = vsel %vm3469, %v3213, 0
        %3473 = vmatprep.subr.bf16.mxu0 0
        %3474 = vmatpush1.bf16.msra.mxu0 0
        %3475 = vmatprep.subr.bf16.mxu0 0
        %3476 = vmatpush1.bf16.msra.mxu0 0
        %3477 = vmatprep.subr.bf16.mxu0 0
        %3478 = vmatpush1.bf16.msra.mxu0 0
        %3479 = vmatprep.subr.bf16.mxu0 0
        %3480 = vmatpush1.bf16.msra.mxu0 0
        %3481 = vmatprep.subr.bf16.mxu0 0
        %3482 = vmatpush1.bf16.msra.mxu0 0
        %3483 = vmatprep.subr.bf16.mxu0 0
        %3484 = vmatpush1.bf16.msra.mxu0 0
        %3485 = vmatprep.subr.bf16.mxu0 0
        %3486 = vmatpush1.bf16.msra.mxu0 0
        %3487 = vmatprep.subr.bf16.mxu0 0
        %3488 = vmatpush1.bf16.msra.mxu0 %v3471
        %3489 = vmatprep.subr.bf16.mxu0 0
        %3490 = vmatpush2.bf16.msra.mxu0 0
        %3491 = vmatprep.subr.bf16.mxu0 0
        %3492 = vmatpush2.bf16.msra.mxu0 0
        %3493 = vmatprep.subr.bf16.mxu0 0
        %3494 = vmatpush2.bf16.msra.mxu0 0
        %3495 = vmatprep.subr.bf16.mxu0 0
        %3496 = vmatpush2.bf16.msra.mxu0 0
        %3497 = vmatprep.subr.bf16.mxu0 0
        %3498 = vmatpush2.bf16.msra.mxu0 0
        %3499 = vmatprep.subr.bf16.mxu0 0
        %3500 = vmatpush2.bf16.msra.mxu0 0
        %3501 = vmatprep.subr.bf16.mxu0 0
        %3502 = vmatpush2.bf16.msra.mxu0 0
        %3503 = vmatprep.subr.bf16.mxu0 0
        %3504 = vmatpush2.bf16.msra.mxu0 0
        %3505 = vmatprep.mubr.bf16.mxu0 0
        %3506 = vmatmul.mubr.bf16.gmra.mxu0 %v3467
        %v3507 = vpop.f32.mrf.mxu0
        %v3508 = vadd.f32 0.0, %v3507
        %v3509 = vpop.f32.mrf.mxu0
        %v3510 = vpop.f32.mrf.mxu0
        %v3511 = vpop.f32.mrf.mxu0
        %3512 = vdwg.mxu0
        %v3514 = vsel %vm3417, %v3463, 0
        %v3517 = vsel %vm3469, %v3214, 0
        %3519 = vmatprep.subr.bf16.mxu0 0
        %3520 = vmatpush1.bf16.msra.mxu0 0
        %3521 = vmatprep.subr.bf16.mxu0 0
        %3522 = vmatpush1.bf16.msra.mxu0 0
        %3523 = vmatprep.subr.bf16.mxu0 0
        %3524 = vmatpush1.bf16.msra.mxu0 0
        %3525 = vmatprep.subr.bf16.mxu0 0
        %3526 = vmatpush1.bf16.msra.mxu0 0
        %3527 = vmatprep.subr.bf16.mxu0 0
        %3528 = vmatpush1.bf16.msra.mxu0 0
        %3529 = vmatprep.subr.bf16.mxu0 0
        %3530 = vmatpush1.bf16.msra.mxu0 0
        %3531 = vmatprep.subr.bf16.mxu0 0
        %3532 = vmatpush1.bf16.msra.mxu0 0
        %3533 = vmatprep.subr.bf16.mxu0 0
        %3534 = vmatpush1.bf16.msra.mxu0 %v3517
        %3535 = vmatprep.subr.bf16.mxu0 0
        %3536 = vmatpush2.bf16.msra.mxu0 0
        %3537 = vmatprep.subr.bf16.mxu0 0
        %3538 = vmatpush2.bf16.msra.mxu0 0
        %3539 = vmatprep.subr.bf16.mxu0 0
        %3540 = vmatpush2.bf16.msra.mxu0 0
        %3541 = vmatprep.subr.bf16.mxu0 0
        %3542 = vmatpush2.bf16.msra.mxu0 0
        %3543 = vmatprep.subr.bf16.mxu0 0
        %3544 = vmatpush2.bf16.msra.mxu0 0
        %3545 = vmatprep.subr.bf16.mxu0 0
        %3546 = vmatpush2.bf16.msra.mxu0 0
        %3547 = vmatprep.subr.bf16.mxu0 0
        %3548 = vmatpush2.bf16.msra.mxu0 0
        %3549 = vmatprep.subr.bf16.mxu0 0
        %3550 = vmatpush2.bf16.msra.mxu0 0
        %3551 = vmatprep.mubr.bf16.mxu0 0
        %3552 = vmatmul.mubr.bf16.gmra.mxu0 %v3514
        %v3553 = vpop.f32.mrf.mxu0
        %v3554 = vadd.f32 0.0, %v3553
        %v3555 = vpop.f32.mrf.mxu0
        %v3556 = vpop.f32.mrf.mxu0
        %v3557 = vpop.f32.mrf.mxu0
        %3558 = vdwg.mxu0
        %v3560 = vsel %vm3417, %v3464, 0
        %v3563 = vsel %vm3469, %v3215, 0
        %3565 = vmatprep.subr.bf16.mxu0 0
        %3566 = vmatpush1.bf16.msra.mxu0 0
        %3567 = vmatprep.subr.bf16.mxu0 0
        %3568 = vmatpush1.bf16.msra.mxu0 0
        %3569 = vmatprep.subr.bf16.mxu0 0
        %3570 = vmatpush1.bf16.msra.mxu0 0
        %3571 = vmatprep.subr.bf16.mxu0 0
        %3572 = vmatpush1.bf16.msra.mxu0 0
        %3573 = vmatprep.subr.bf16.mxu0 0
        %3574 = vmatpush1.bf16.msra.mxu0 0
        %3575 = vmatprep.subr.bf16.mxu0 0
        %3576 = vmatpush1.bf16.msra.mxu0 0
        %3577 = vmatprep.subr.bf16.mxu0 0
        %3578 = vmatpush1.bf16.msra.mxu0 0
        %3579 = vmatprep.subr.bf16.mxu0 0
        %3580 = vmatpush1.bf16.msra.mxu0 %v3563
        %3581 = vmatprep.subr.bf16.mxu0 0
        %3582 = vmatpush2.bf16.msra.mxu0 0
        %3583 = vmatprep.subr.bf16.mxu0 0
        %3584 = vmatpush2.bf16.msra.mxu0 0
        %3585 = vmatprep.subr.bf16.mxu0 0
        %3586 = vmatpush2.bf16.msra.mxu0 0
        %3587 = vmatprep.subr.bf16.mxu0 0
        %3588 = vmatpush2.bf16.msra.mxu0 0
        %3589 = vmatprep.subr.bf16.mxu0 0
        %3590 = vmatpush2.bf16.msra.mxu0 0
        %3591 = vmatprep.subr.bf16.mxu0 0
        %3592 = vmatpush2.bf16.msra.mxu0 0
        %3593 = vmatprep.subr.bf16.mxu0 0
        %3594 = vmatpush2.bf16.msra.mxu0 0
        %3595 = vmatprep.subr.bf16.mxu0 0
        %3596 = vmatpush2.bf16.msra.mxu0 0
        %3597 = vmatprep.mubr.bf16.mxu0 0
        %3598 = vmatmul.mubr.bf16.gmra.mxu0 %v3560
        %v3599 = vpop.f32.mrf.mxu0
        %v3600 = vadd.f32 0.0, %v3599
        %v3601 = vpop.f32.mrf.mxu0
        %v3602 = vpop.f32.mrf.mxu0
        %v3603 = vpop.f32.mrf.mxu0
        %3604 = vdwg.mxu0
        %v3606 = vsel %vm3417, %v3465, 0
        %v3609 = vsel %vm3469, %v3216, 0
        %3611 = vmatprep.subr.bf16.mxu0 0
        %3612 = vmatpush1.bf16.msra.mxu0 0
        %3613 = vmatprep.subr.bf16.mxu0 0
        %3614 = vmatpush1.bf16.msra.mxu0 0
        %3615 = vmatprep.subr.bf16.mxu0 0
        %3616 = vmatpush1.bf16.msra.mxu0 0
        %3617 = vmatprep.subr.bf16.mxu0 0
        %3618 = vmatpush1.bf16.msra.mxu0 0
        %3619 = vmatprep.subr.bf16.mxu0 0
        %3620 = vmatpush1.bf16.msra.mxu0 0
        %3621 = vmatprep.subr.bf16.mxu0 0
        %3622 = vmatpush1.bf16.msra.mxu0 0
        %3623 = vmatprep.subr.bf16.mxu0 0
        %3624 = vmatpush1.bf16.msra.mxu0 0
        %3625 = vmatprep.subr.bf16.mxu0 0
        %3626 = vmatpush1.bf16.msra.mxu0 %v3609
        %3627 = vmatprep.subr.bf16.mxu0 0
        %3628 = vmatpush2.bf16.msra.mxu0 0
        %3629 = vmatprep.subr.bf16.mxu0 0
        %3630 = vmatpush2.bf16.msra.mxu0 0
        %3631 = vmatprep.subr.bf16.mxu0 0
        %3632 = vmatpush2.bf16.msra.mxu0 0
        %3633 = vmatprep.subr.bf16.mxu0 0
        %3634 = vmatpush2.bf16.msra.mxu0 0
        %3635 = vmatprep.subr.bf16.mxu0 0
        %3636 = vmatpush2.bf16.msra.mxu0 0
        %3637 = vmatprep.subr.bf16.mxu0 0
        %3638 = vmatpush2.bf16.msra.mxu0 0
        %3639 = vmatprep.subr.bf16.mxu0 0
        %3640 = vmatpush2.bf16.msra.mxu0 0
        %3641 = vmatprep.subr.bf16.mxu0 0
        %3642 = vmatpush2.bf16.msra.mxu0 0
        %3643 = vmatprep.mubr.bf16.mxu0 0
        %3644 = vmatmul.mubr.bf16.gmra.mxu0 %v3606
        %v3645 = vpop.f32.mrf.mxu0
        %v3646 = vadd.f32 0.0, %v3645
        %v3647 = vpop.f32.mrf.mxu0
        %v3648 = vpop.f32.mrf.mxu0
        %v3649 = vpop.f32.mrf.mxu0
        %3650 = vdwg.mxu0
        %v3651 = vcombine.high %v3508, 0.0
        %v3653 = vunpack.c.l.s4 1983009808
        %v3654 = vunpack.c.0.s8 %v3653
        %v3655 = vlaneseq
        %v3656 = vshrl.u32 %v3655, 7
        %v3657 = vsub.s32 %v3654, %v3656
        %v3658 = vrot.slane %v3508, %v3657
        %v3660 = vunpack.c.l.s4 1983009808
        %v3661 = vunpack.c.0.s8 %v3660
        %v3662 = vlaneseq
        %v3663 = vshrl.u32 %v3662, 7
        %v3664 = vsub.s32 %v3661, %v3663
        %v3665 = vrot.slane %v3651, %v3664
        %v3666 = vcombine.high %v3554, 0.0
        %v3668 = vunpack.c.l.s4 1983009808
        %v3669 = vunpack.c.0.s8 %v3668
        %v3670 = vlaneseq
        %v3671 = vshrl.u32 %v3670, 7
        %v3672 = vsub.s32 %v3669, %v3671
        %v3673 = vrot.slane %v3554, %v3672
        %v3675 = vunpack.c.l.s4 1983009808
        %v3676 = vunpack.c.0.s8 %v3675
        %v3677 = vlaneseq
        %v3678 = vshrl.u32 %v3677, 7
        %v3679 = vsub.s32 %v3676, %v3678
        %v3680 = vrot.slane %v3666, %v3679
        %v3681 = vcombine.low %v3658, %v3673
        %v3682 = vcombine.high %v3658, %v3673
        %v3684 = vunpack.c.l.s4 1934713408
        %v3685 = vunpack.c.0.s8 %v3684
        %v3686 = vlaneseq
        %v3687 = vshrl.u32 %v3686, 7
        %v3688 = vsub.s32 %v3685, %v3687
        %v3689 = vrot.slane %v3681, %v3688
        %v3691 = vunpack.c.l.s4 1934713408
        %v3692 = vunpack.c.0.s8 %v3691
        %v3693 = vlaneseq
        %v3694 = vshrl.u32 %v3693, 7
        %v3695 = vsub.s32 %v3692, %v3694
        %v3696 = vrot.slane %v3682, %v3695
        %v3697 = vcombine.low %v3665, %v3680
        %v3698 = vcombine.high %v3665, %v3680
        %v3700 = vunpack.c.l.s4 1934713408
        %v3701 = vunpack.c.0.s8 %v3700
        %v3702 = vlaneseq
        %v3703 = vshrl.u32 %v3702, 7
        %v3704 = vsub.s32 %v3701, %v3703
        %v3705 = vrot.slane %v3697, %v3704
        %v3707 = vunpack.c.l.s4 1934713408
        %v3708 = vunpack.c.0.s8 %v3707
        %v3709 = vlaneseq
        %v3710 = vshrl.u32 %v3709, 7
        %v3711 = vsub.s32 %v3708, %v3710
        %v3712 = vrot.slane %v3698, %v3711
        %v3713 = vcombine.high %v3689, 0.0
        %v3714 = vcombine.high %v3696, 0.0
        %v3715 = vcombine.high %v3705, 0.0
        %v3716 = vcombine.high %v3712, 0.0
        %v3717 = vcombine.high %v3600, 0.0
        %v3719 = vunpack.c.l.s4 1983009808
        %v3720 = vunpack.c.0.s8 %v3719
        %v3721 = vlaneseq
        %v3722 = vshrl.u32 %v3721, 7
        %v3723 = vsub.s32 %v3720, %v3722
        %v3724 = vrot.slane %v3600, %v3723
        %v3726 = vunpack.c.l.s4 1983009808
        %v3727 = vunpack.c.0.s8 %v3726
        %v3728 = vlaneseq
        %v3729 = vshrl.u32 %v3728, 7
        %v3730 = vsub.s32 %v3727, %v3729
        %v3731 = vrot.slane %v3717, %v3730
        %v3732 = vcombine.high %v3646, 0.0
        %v3734 = vunpack.c.l.s4 1983009808
        %v3735 = vunpack.c.0.s8 %v3734
        %v3736 = vlaneseq
        %v3737 = vshrl.u32 %v3736, 7
        %v3738 = vsub.s32 %v3735, %v3737
        %v3739 = vrot.slane %v3646, %v3738
        %v3741 = vunpack.c.l.s4 1983009808
        %v3742 = vunpack.c.0.s8 %v3741
        %v3743 = vlaneseq
        %v3744 = vshrl.u32 %v3743, 7
        %v3745 = vsub.s32 %v3742, %v3744
        %v3746 = vrot.slane %v3732, %v3745
        %v3747 = vcombine.low %v3724, %v3739
        %v3748 = vcombine.high %v3724, %v3739
        %v3750 = vunpack.c.l.s4 1934713408
        %v3751 = vunpack.c.0.s8 %v3750
        %v3752 = vlaneseq
        %v3753 = vshrl.u32 %v3752, 7
        %v3754 = vsub.s32 %v3751, %v3753
        %v3755 = vrot.slane %v3747, %v3754
        %v3757 = vunpack.c.l.s4 1934713408
        %v3758 = vunpack.c.0.s8 %v3757
        %v3759 = vlaneseq
        %v3760 = vshrl.u32 %v3759, 7
        %v3761 = vsub.s32 %v3758, %v3760
        %v3762 = vrot.slane %v3748, %v3761
        %v3763 = vcombine.low %v3731, %v3746
        %v3764 = vcombine.high %v3731, %v3746
        %v3766 = vunpack.c.l.s4 1934713408
        %v3767 = vunpack.c.0.s8 %v3766
        %v3768 = vlaneseq
        %v3769 = vshrl.u32 %v3768, 7
        %v3770 = vsub.s32 %v3767, %v3769
        %v3771 = vrot.slane %v3763, %v3770
        %v3773 = vunpack.c.l.s4 1934713408
        %v3774 = vunpack.c.0.s8 %v3773
        %v3775 = vlaneseq
        %v3776 = vshrl.u32 %v3775, 7
        %v3777 = vsub.s32 %v3774, %v3776
        %v3778 = vrot.slane %v3764, %v3777
        %v3779 = vcombine.high %v3755, 0.0
        %v3780 = vcombine.high %v3762, 0.0
        %v3781 = vcombine.high %v3771, 0.0
        %v3782 = vcombine.high %v3778, 0.0
        %v3783 = vcombine.low %v3689, %v3696
        %v3785 = vunpack.c.l.s4 1983009808
        %v3786 = vunpack.c.0.s8 %v3785
        %v3787 = vlaneseq
        %v3788 = vshrl.u32 %v3787, 7
        %v3789 = vsub.s32 %v3786, %v3788
        %v3790 = vrot.slane %v3783, %v3789
        %v3791 = vcombine.low %v3713, %v3714
        %v3793 = vunpack.c.l.s4 1983009808
        %v3794 = vunpack.c.0.s8 %v3793
        %v3795 = vlaneseq
        %v3796 = vshrl.u32 %v3795, 7
        %v3797 = vsub.s32 %v3794, %v3796
        %v3798 = vrot.slane %v3791, %v3797
        %v3799 = vcombine.low %v3705, %v3712
        %v3801 = vunpack.c.l.s4 1983009808
        %v3802 = vunpack.c.0.s8 %v3801
        %v3803 = vlaneseq
        %v3804 = vshrl.u32 %v3803, 7
        %v3805 = vsub.s32 %v3802, %v3804
        %v3806 = vrot.slane %v3799, %v3805
        %v3807 = vcombine.low %v3715, %v3716
        %v3809 = vunpack.c.l.s4 1983009808
        %v3810 = vunpack.c.0.s8 %v3809
        %v3811 = vlaneseq
        %v3812 = vshrl.u32 %v3811, 7
        %v3813 = vsub.s32 %v3810, %v3812
        %v3814 = vrot.slane %v3807, %v3813
        %v3815 = vcombine.low %v3790, %v3798
        %v3817 = vunpack.c.l.s4 1934713408
        %v3818 = vunpack.c.0.s8 %v3817
        %v3819 = vlaneseq
        %v3820 = vshrl.u32 %v3819, 7
        %v3821 = vsub.s32 %v3818, %v3820
        %v3822 = vrot.slane %v3815, %v3821
        %v3823 = vcombine.low %v3806, %v3814
        %v3825 = vunpack.c.l.s4 1934713408
        %v3826 = vunpack.c.0.s8 %v3825
        %v3827 = vlaneseq
        %v3828 = vshrl.u32 %v3827, 7
        %v3829 = vsub.s32 %v3826, %v3828
        %v3830 = vrot.slane %v3823, %v3829
        %v3831 = vcombine.low %v3822, %v3830
        %v3832 = vcombine.high %v3822, %v3830
        %v3833 = vcombine.low %v3755, %v3762
        %v3835 = vunpack.c.l.s4 1983009808
        %v3836 = vunpack.c.0.s8 %v3835
        %v3837 = vlaneseq
        %v3838 = vshrl.u32 %v3837, 7
        %v3839 = vsub.s32 %v3836, %v3838
        %v3840 = vrot.slane %v3833, %v3839
        %v3841 = vcombine.low %v3779, %v3780
        %v3843 = vunpack.c.l.s4 1983009808
        %v3844 = vunpack.c.0.s8 %v3843
        %v3845 = vlaneseq
        %v3846 = vshrl.u32 %v3845, 7
        %v3847 = vsub.s32 %v3844, %v3846
        %v3848 = vrot.slane %v3841, %v3847
        %v3849 = vcombine.low %v3771, %v3778
        %v3851 = vunpack.c.l.s4 1983009808
        %v3852 = vunpack.c.0.s8 %v3851
        %v3853 = vlaneseq
        %v3854 = vshrl.u32 %v3853, 7
        %v3855 = vsub.s32 %v3852, %v3854
        %v3856 = vrot.slane %v3849, %v3855
        %v3857 = vcombine.low %v3781, %v3782
        %v3859 = vunpack.c.l.s4 1983009808
        %v3860 = vunpack.c.0.s8 %v3859
        %v3861 = vlaneseq
        %v3862 = vshrl.u32 %v3861, 7
        %v3863 = vsub.s32 %v3860, %v3862
        %v3864 = vrot.slane %v3857, %v3863
        %v3865 = vcombine.low %v3840, %v3848
        %v3867 = vunpack.c.l.s4 1934713408
        %v3868 = vunpack.c.0.s8 %v3867
        %v3869 = vlaneseq
        %v3870 = vshrl.u32 %v3869, 7
        %v3871 = vsub.s32 %v3868, %v3870
        %v3872 = vrot.slane %v3865, %v3871
        %v3873 = vcombine.low %v3856, %v3864
        %v3875 = vunpack.c.l.s4 1934713408
        %v3876 = vunpack.c.0.s8 %v3875
        %v3877 = vlaneseq
        %v3878 = vshrl.u32 %v3877, 7
        %v3879 = vsub.s32 %v3876, %v3878
        %v3880 = vrot.slane %v3873, %v3879
        %v3881 = vcombine.low %v3872, %v3880
        %v3882 = vcombine.high %v3872, %v3880
        %3885 = vrot.lane.b32.xlu0 %v3832, 16
        %v3886 = vpop.permute.xlu0 %3885
        %3887 = vrot.lane.b32.xlu0 %v3882, 16
        %v3888 = vpop.permute.xlu0 %3887
        %v3891 = vsel %vm1402, %v3831, %v3886
        %v3892 = vsel %vm1402, %v3881, %v3888
        %v3893 = vld [vmem:[%s497] sm:$0xf]
        %v3894 = vld [vmem:[%s497 + $0x4] sm:$0xf]
        %v3895 = vld [vmem:[%s497 + $0x8] sm:$0xf]
        %v3896 = vld [vmem:[%s497 + $0xc] sm:$0xf]
        %v3897 = vpack.c.bf16 %v3892, %v3891
        %v3898 = vlaneseq
        %v3899 = vshrl.u32 %v3898, 7
        %v3900 = vsub.s32 4, %v3899
        %v3901 = vrot.slane %v581, %v3900
        %v3906 = vunpack.c.l.b16 %v3893
        %v3907 = vunpack.c.l.b16 %v3894
        %v3908 = vunpack.c.l.b16 %v3895
        %v3909 = vunpack.c.l.b16 %v3896
        %v3910 = vpack.c.b16 %v3907, %v3906
        %v3911 = vpack.c.b16 %v3909, %v3908
        %v3915 = vsel %vm604, %v3897, 0
        %3917 = vmatprep.subr.bf16.mxu0 0
        %3918 = vmatpush1.bf16.msra.mxu0 0
        %3919 = vmatprep.subr.bf16.mxu0 0
        %3920 = vmatpush1.bf16.msra.mxu0 0
        %3921 = vmatprep.subr.bf16.mxu0 0
        %3922 = vmatpush1.bf16.msra.mxu0 0
        %3923 = vmatprep.subr.bf16.mxu0 0
        %3924 = vmatpush1.bf16.msra.mxu0 0
        %3925 = vmatprep.subr.bf16.mxu0 0
        %3926 = vmatpush1.bf16.msra.mxu0 0
        %3927 = vmatprep.subr.bf16.mxu0 0
        %3928 = vmatpush1.bf16.msra.mxu0 0
        %3929 = vmatprep.subr.bf16.mxu0 0
        %3930 = vmatpush1.bf16.msra.mxu0 %v3911
        %3931 = vmatprep.subr.bf16.mxu0 0
        %3932 = vmatpush1.bf16.msra.mxu0 %v3910
        %3933 = vmatprep.subr.bf16.mxu0 0
        %3934 = vmatpush2.bf16.msra.mxu0 0
        %3935 = vmatprep.subr.bf16.mxu0 0
        %3936 = vmatpush2.bf16.msra.mxu0 0
        %3937 = vmatprep.subr.bf16.mxu0 0
        %3938 = vmatpush2.bf16.msra.mxu0 0
        %3939 = vmatprep.subr.bf16.mxu0 0
        %3940 = vmatpush2.bf16.msra.mxu0 0
        %3941 = vmatprep.subr.bf16.mxu0 0
        %3942 = vmatpush2.bf16.msra.mxu0 0
        %3943 = vmatprep.subr.bf16.mxu0 0
        %3944 = vmatpush2.bf16.msra.mxu0 0
        %3945 = vmatprep.subr.bf16.mxu0 0
        %3946 = vmatpush2.bf16.msra.mxu0 0
        %3947 = vmatprep.subr.bf16.mxu0 0
        %3948 = vmatpush2.bf16.msra.mxu0 0
        %3949 = vmatprep.mubr.bf16.mxu0 0
        %3950 = vmatmul.mubr.bf16.gmra.mxu0 %v3915
        %v3951 = vpop.f32.mrf.mxu0
        %v3952 = vadd.f32 %v3901, %v3951
        %v3953 = vpop.f32.mrf.mxu0
        %v3954 = vpop.f32.mrf.mxu0
        %v3955 = vadd.f32 %v3901, %v3954
        %v3956 = vpop.f32.mrf.mxu0
        %3957 = vdwg.mxu0
        %v3958 = vadd.f32 %v2173, %v3952
        %v3959 = vadd.f32 %v2174, %v3955
        %v3960 = vsel %vm604, %v3958, 0.0
        %3961 = vadd.xlane.f32.xlu0 %v3960
        %v3962 = vpop.xlane.xlu0 %3961
        %v3963 = vsel %vm604, %v3959, 0.0
        %3964 = vadd.xlane.f32.xlu0 %v3963
        %v3965 = vpop.xlane.xlu0 %3964
        %v3966 = vmul.f32 %v3962, %v2142
        %v3967 = vmul.f32 %v3965, %v2142
        %v3968 = vsub.f32 %v3958, %v3966
        %v3969 = vsub.f32 %v3959, %v3967
        %v3970 = vmul.f32 %v3968, %v3968
        %v3971 = vmul.f32 %v3969, %v3969
        %v3972 = vsel %vm604, %v3970, 0.0
        %3973 = vadd.xlane.f32.xlu0 %v3972
        %v3974 = vpop.xlane.xlu0 %3973
        %v3975 = vsel %vm604, %v3971, 0.0
        %3976 = vadd.xlane.f32.xlu0 %v3975
        %v3977 = vpop.xlane.xlu0 %3976
        %v3978 = vmul.f32 %v3974, %v2142
        %v3979 = vmul.f32 %v3977, %v2142
        %v3980 = vadd.f32 %v3978, 1e-05
        %v3981 = vadd.f32 %v3979, 1e-05
        %v3982 = vrsqrt.pop %v3980
        %v3983 = vrsqrt.pop %v3981
        %v3984 = vmul.f32 %v3968, %v3982
        %v3985 = vmul.f32 %v3969, %v3983
        %v3986 = vlaneseq
        %v3987 = vshrl.u32 %v3986, 7
        %v3988 = vsub.s32 1, %v3987
        %v3989 = vrot.slane %v582, %v3988
        %v3990 = vmul.f32 %v3984, %v3989
        %v3991 = vmul.f32 %v3985, %v3989
        %v3992 = vlaneseq
        %v3993 = vshrl.u32 %v3992, 7
        %v3994 = vsub.s32 4, %v3993
        %v3995 = vrot.slane %v582, %v3994
        %v3996 = vadd.f32 %v3990, %v3995
        %v3997 = vadd.f32 %v3991, %v3995
        %v3998 = vld [vmem:[%s502] sm:$0xf]
        %v3999 = vld [vmem:[%s502 + $0x4] sm:$0xf]
        %v4000 = vld [vmem:[%s502 + $0x8] sm:$0xf]
        %v4001 = vld [vmem:[%s502 + $0xc] sm:$0xf]
        %v4002 = vpack.c.bf16 %v3997, %v3996
        %v4003 = vlaneseq
        %v4004 = vshrl.u32 %v4003, 7
        %v4005 = vsub.s32 5, %v4004
        %v4006 = vrot.slane %v581, %v4005
        %v4011 = vunpack.c.l.b16 %v3998
        %v4012 = vunpack.c.l.b16 %v3999
        %v4013 = vunpack.c.l.b16 %v4000
        %v4014 = vunpack.c.l.b16 %v4001
        %v4015 = vpack.c.b16 %v4012, %v4011
        %v4016 = vpack.c.b16 %v4014, %v4013
        %v4020 = vsel %vm604, %v4002, 0
        %4022 = vmatprep.subr.bf16.mxu0 0
        %4023 = vmatpush1.bf16.msra.mxu0 0
        %4024 = vmatprep.subr.bf16.mxu0 0
        %4025 = vmatpush1.bf16.msra.mxu0 0
        %4026 = vmatprep.subr.bf16.mxu0 0
        %4027 = vmatpush1.bf16.msra.mxu0 0
        %4028 = vmatprep.subr.bf16.mxu0 0
        %4029 = vmatpush1.bf16.msra.mxu0 0
        %4030 = vmatprep.subr.bf16.mxu0 0
        %4031 = vmatpush1.bf16.msra.mxu0 0
        %4032 = vmatprep.subr.bf16.mxu0 0
        %4033 = vmatpush1.bf16.msra.mxu0 0
        %4034 = vmatprep.subr.bf16.mxu0 0
        %4035 = vmatpush1.bf16.msra.mxu0 %v4016
        %4036 = vmatprep.subr.bf16.mxu0 0
        %4037 = vmatpush1.bf16.msra.mxu0 %v4015
        %4038 = vmatprep.subr.bf16.mxu0 0
        %4039 = vmatpush2.bf16.msra.mxu0 0
        %4040 = vmatprep.subr.bf16.mxu0 0
        %4041 = vmatpush2.bf16.msra.mxu0 0
        %4042 = vmatprep.subr.bf16.mxu0 0
        %4043 = vmatpush2.bf16.msra.mxu0 0
        %4044 = vmatprep.subr.bf16.mxu0 0
        %4045 = vmatpush2.bf16.msra.mxu0 0
        %4046 = vmatprep.subr.bf16.mxu0 0
        %4047 = vmatpush2.bf16.msra.mxu0 0
        %4048 = vmatprep.subr.bf16.mxu0 0
        %4049 = vmatpush2.bf16.msra.mxu0 0
        %4050 = vmatprep.subr.bf16.mxu0 0
        %4051 = vmatpush2.bf16.msra.mxu0 0
        %4052 = vmatprep.subr.bf16.mxu0 0
        %4053 = vmatpush2.bf16.msra.mxu0 0
        %4054 = vmatprep.mubr.bf16.mxu0 0
        %4055 = vmatmul.mubr.bf16.gmra.mxu0 %v4020
        %v4056 = vpop.f32.mrf.mxu0
        %v4057 = vadd.f32 %v4006, %v4056
        %v4058 = vpop.f32.mrf.mxu0
        %v4059 = vpop.f32.mrf.mxu0
        %v4060 = vadd.f32 %v4006, %v4059
        %v4061 = vpop.f32.mrf.mxu0
        %4062 = vdwg.mxu0
        %v4063 = vmax.f32 %v4057, 0.0
        %v4064 = vmax.f32 %v4060, 0.0
        %v4065 = vld [vmem:[%s507] sm:$0xf]
        %v4066 = vld [vmem:[%s507 + $0x4] sm:$0xf]
        %v4067 = vld [vmem:[%s507 + $0x8] sm:$0xf]
        %v4068 = vld [vmem:[%s507 + $0xc] sm:$0xf]
        %v4069 = vld [vmem:[%s507 + $0x10] sm:$0xf]
        %v4070 = vld [vmem:[%s507 + $0x14] sm:$0xf]
        %v4071 = vld [vmem:[%s507 + $0x18] sm:$0xf]
        %v4072 = vld [vmem:[%s507 + $0x1c] sm:$0xf]
        %v4073 = vpack.c.bf16 %v4064, %v4063
        %v4074 = vlaneseq
        %v4075 = vshrl.u32 %v4074, 7
        %v4076 = vsub.s32 6, %v4075
        %v4077 = vrot.slane %v581, %v4076
        %v4086 = vunpack.c.l.b16 %v4065
        %v4087 = vunpack.c.l.b16 %v4066
        %v4088 = vunpack.c.l.b16 %v4067
        %v4089 = vunpack.c.l.b16 %v4068
        %v4090 = vunpack.c.l.b16 %v4069
        %v4091 = vunpack.c.l.b16 %v4070
        %v4092 = vunpack.c.l.b16 %v4071
        %v4093 = vunpack.c.l.b16 %v4072
        %v4094 = vpack.c.b16 %v4087, %v4086
        %v4095 = vpack.c.b16 %v4089, %v4088
        %v4096 = vpack.c.b16 %v4091, %v4090
        %v4097 = vpack.c.b16 %v4093, %v4092
        %vm4102 = vcmask 523264
        %v4104 = vsel %vm4102, %v4073, 0
        %4106 = vmatprep.subr.bf16.mxu0 0
        %4107 = vmatpush1.bf16.msra.mxu0 0
        %4108 = vmatprep.subr.bf16.mxu0 0
        %4109 = vmatpush1.bf16.msra.mxu0 0
        %4110 = vmatprep.subr.bf16.mxu0 0
        %4111 = vmatpush1.bf16.msra.mxu0 0
        %4112 = vmatprep.subr.bf16.mxu0 0
        %4113 = vmatpush1.bf16.msra.mxu0 0
        %4114 = vmatprep.subr.bf16.mxu0 0
        %4115 = vmatpush1.bf16.msra.mxu0 %v4097
        %4116 = vmatprep.subr.bf16.mxu0 0
        %4117 = vmatpush1.bf16.msra.mxu0 %v4096
        %4118 = vmatprep.subr.bf16.mxu0 0
        %4119 = vmatpush1.bf16.msra.mxu0 %v4095
        %4120 = vmatprep.subr.bf16.mxu0 0
        %4121 = vmatpush1.bf16.msra.mxu0 %v4094
        %4122 = vmatprep.subr.bf16.mxu0 0
        %4123 = vmatpush2.bf16.msra.mxu0 0
        %4124 = vmatprep.subr.bf16.mxu0 0
        %4125 = vmatpush2.bf16.msra.mxu0 0
        %4126 = vmatprep.subr.bf16.mxu0 0
        %4127 = vmatpush2.bf16.msra.mxu0 0
        %4128 = vmatprep.subr.bf16.mxu0 0
        %4129 = vmatpush2.bf16.msra.mxu0 0
        %4130 = vmatprep.subr.bf16.mxu0 0
        %4131 = vmatpush2.bf16.msra.mxu0 0
        %4132 = vmatprep.subr.bf16.mxu0 0
        %4133 = vmatpush2.bf16.msra.mxu0 0
        %4134 = vmatprep.subr.bf16.mxu0 0
        %4135 = vmatpush2.bf16.msra.mxu0 0
        %4136 = vmatprep.subr.bf16.mxu0 0
        %4137 = vmatpush2.bf16.msra.mxu0 0
        %4138 = vmatprep.mubr.bf16.mxu0 0
        %4139 = vmatmul.mubr.bf16.gmra.mxu0 %v4104
        %v4140 = vpop.f32.mrf.mxu0
        %v4141 = vadd.f32 %v4077, %v4140
        %v4142 = vpop.f32.mrf.mxu0
        %v4143 = vpop.f32.mrf.mxu0
        %v4144 = vadd.f32 %v4077, %v4143
        %v4145 = vpop.f32.mrf.mxu0
        %4146 = vdwg.mxu0
        %v4147 = vadd.f32 %v3996, %v4141
        %v4148 = vadd.f32 %v3997, %v4144
        %v4149 = vsel %vm604, %v4147, 0.0
        %4150 = vadd.xlane.f32.xlu0 %v4149
        %v4151 = vpop.xlane.xlu0 %4150
        %v4152 = vsel %vm604, %v4148, 0.0
        %4153 = vadd.xlane.f32.xlu0 %v4152
        %v4154 = vpop.xlane.xlu0 %4153
        %v4155 = vmul.f32 %v4151, %v2142
        %v4156 = vmul.f32 %v4154, %v2142
        %v4157 = vsub.f32 %v4147, %v4155
        %v4158 = vsub.f32 %v4148, %v4156
        %v4159 = vmul.f32 %v4157, %v4157
        %v4160 = vmul.f32 %v4158, %v4158
        %v4161 = vsel %vm604, %v4159, 0.0
        %4162 = vadd.xlane.f32.xlu0 %v4161
        %v4163 = vpop.xlane.xlu0 %4162
        %v4164 = vsel %vm604, %v4160, 0.0
        %4165 = vadd.xlane.f32.xlu0 %v4164
        %v4166 = vpop.xlane.xlu0 %4165
        %v4167 = vmul.f32 %v4163, %v2142
        %v4168 = vmul.f32 %v4166, %v2142
        %v4169 = vadd.f32 %v4167, 1e-05
        %v4170 = vadd.f32 %v4168, 1e-05
        %v4171 = vrsqrt.pop %v4169
        %v4172 = vrsqrt.pop %v4170
        %v4173 = vmul.f32 %v4157, %v4171
        %v4174 = vmul.f32 %v4158, %v4172
        %v4175 = vlaneseq
        %v4176 = vshrl.u32 %v4175, 7
        %v4177 = vsub.s32 2, %v4176
        %v4178 = vrot.slane %v582, %v4177
        %v4179 = vmul.f32 %v4173, %v4178
        %v4180 = vmul.f32 %v4174, %v4178
        %v4181 = vlaneseq
        %v4182 = vshrl.u32 %v4181, 7
        %v4183 = vsub.s32 5, %v4182
        %v4184 = vrot.slane %v582, %v4183
        %v4185 = vadd.f32 %v4179, %v4184
        %v4186 = vadd.f32 %v4180, %v4184
        %4187 = vst.msk [vmem:[#allocation2] sm:$0xff] %vm604, %v4185
        %4188 = vst.msk [vmem:[#allocation2 + $0x8] sm:$0xff] %vm604, %v4186
        %p4189 = scmp.eq.s32.totalorder %s23, 1
        // Predicated region
        $region69: #{transformer_decoder.1} parent=63 // pred_check
          %p4190 = pneg %p4189
        $region70: #{transformer_decoder.1} parent=63 // pred_check_branch
          %4192 = sbr.rel (%p4190) target = $region72
        $region71: #{transformer_decoder.1} parent=63 // pred_region
          %4193 = vst.msk [vmem:[#allocation3] sm:$0xff] %vm604, %v4185
          %4194 = vst.msk [vmem:[#allocation3 + $0x8] sm:$0xff] %vm604, %v4186
        $region72: #{transformer_decoder.1} parent=63 // pred_fallthru
          _
        // Predicated region
        $region73: #{transformer_decoder.1} parent=63 // pred_check
          %p4195 = pneg %p307
        $region74: #{transformer_decoder.1} parent=63 // pred_check_branch
          %4197 = sbr.rel (%p4195) target = $region76
        $region75: #{transformer_decoder.1} parent=63 // pred_region
          %s4199 = ssub.s32 256, 256
          %4200 = vsyncadd [#allocation4], %s4199
          %s4201 = sshll.u32 [#allocation3], 4
          %s4202 = int_to_ptr.vmem [resolvable:$true] %s4201
          %4207 = dma.vmem_to_hbm [thread:$0]  %s4202, 256, %s11, [#allocation4], 128, 128, 8
        $region76: #{transformer_decoder.1} parent=63 // pred_fallthru
          _
        // Predicated region
        $region77: #{transformer_decoder.1} parent=63 // pred_check
          %p4208 = pneg %p307
        $region78: #{transformer_decoder.1} parent=63 // pred_check_branch
          %4210 = sbr.rel (%p4208) target = $region80
        $region79: #{transformer_decoder.1} parent=63 // pred_region
          %4211 = dma.done [#allocation4], 256
        $region80: #{transformer_decoder.1} parent=63 // pred_fallthru
          _
      $region64: #{transformer_decoder.1} parent=5 // pred_fallthru
        _
      %p4212 = scmp.le.s32.totalorder 2, %s18
      // Predicated region
      $region81: #{transformer_decoder.1} parent=5 // pred_check
        %p4213 = pneg %p4212
      $region82: #{transformer_decoder.1} parent=5 // pred_check_branch
        %4215 = sbr.rel (%p4213) target = $region84
      $region83: #{transformer_decoder.1} parent=5 // pred_region
        %s4216 = ssub.s32 %s18, 2
      $region84: #{transformer_decoder.1} parent=5 // pred_fallthru
        _
    $region6: #{transformer_decoder.1} parent=1 // loop_footer
      %s22 = sadd.s32 1, %s18
    $region7: #{transformer_decoder.1} parent=1 // loop_footer_branch
      %17 = sbr.rel target = $region3
    $region8: #{transformer_decoder.1} parent=1 // loop_exit
      _
    %4217 = vsyncpa [#allocation4], 1
    %s4218 = scalar_lea.sflag [#allocation4], 1
    %4219 = vsyncpa %s4218, 1

</llo_original>
